<compile_context>
chip_gen: v5e
topology: v5e:2x2
jax: 0.10.0
libtpu: 0.0.40
codegen_flags: <defaults>
</compile_context>

<pallas_src>
import functools

import jax
import jax.numpy as jnp
from jax import lax
from jax.experimental import pallas as pl
from jax.experimental.pallas import tpu as pltpu


# ----------------------------- kernel-side math ----------------------------- #

def _mha(q, k, v, num_heads, additive_mask):
    """Multi-head attention on (block_batch, seq, dim) activations.

    Heads are static lane-column blocks. Score / PV matmuls are batched over the
    sequence-block axis (one dot_general per head), and head outputs are joined with a
    single lane-axis concatenate (no VMEM scratch round trip). The 1/sqrt(head_dim)
    softmax scale is already folded into q.
    """
    dim = q.shape[-1]
    hd = dim // num_heads
    outs = []
    for h in range(num_heads):
        sl = slice(h * hd, (h + 1) * hd)
        sim = jnp.einsum("bqd,bkd->bqk", q[..., sl], k[..., sl],
                         preferred_element_type=jnp.float32)
        if additive_mask is not None:
            sim = sim + additive_mask
        m = jnp.max(sim, axis=-1, keepdims=True)
        e = jnp.exp(sim - m)
        p = e / jnp.sum(e, axis=-1, keepdims=True)   # exact divide (tiny tile)
        outs.append(jnp.einsum("bqk,bkd->bqd", p, v[..., sl],
                               preferred_element_type=jnp.float32))
    return jnp.concatenate(outs, axis=-1)            # (bb, seq, dim)


def decoder2_kernel(wemb_ref, pemb_ref, w_mqkv_ref, w_cq_ref, w_ckv_ref,
                    f1w_ref, f2w_ref, b_ref, out_ref, *, num_heads):
    f32 = jnp.float32
    bb, Wseq, E = wemb_ref.shape
    _, Pseq, Pemb = pemb_ref.shape
    H3 = 3 * E
    new_dim = w_cq_ref.shape[1]
    hidden_ff = f1w_ref.shape[1]

    # Flatten (batch, seq) for the shared-weight projections (tile-preserving reshape:
    # Wseq/Pseq are multiples of the 8-row sublane tile).
    wemb2d = wemb_ref[...].reshape(bb * Wseq, E)
    pemb2d = pemb_ref[...].reshape(bb * Pseq, Pemb)

    # Causal mask built once, shared by all heads / sequences in the block.
    rows = lax.broadcasted_iota(jnp.int32, (Wseq, Wseq), 0)
    cols = lax.broadcasted_iota(jnp.int32, (Wseq, Wseq), 1)
    causal_mask = jnp.where(cols > rows, f32(-1e9), f32(0.0))[None]   # (1, Wseq, Wseq)

    # ---- MaskedAttention: one fused QKV projection (scale pre-folded into Q) ----
    qkv = (jnp.dot(wemb2d, w_mqkv_ref[...], preferred_element_type=f32)
           + b_ref[0:1, 0:H3]).reshape(bb, Wseq, H3)
    word_emb = _mha(qkv[:, :, 0:E], qkv[:, :, E:2 * E], qkv[:, :, 2 * E:H3],
                    num_heads, causal_mask)                           # (bb, Wseq, E)

    # ---- CrossAttention: Q from word_emb, fused K/V projection from pemb ----
    cq = (jnp.dot(word_emb.reshape(bb * Wseq, E), w_cq_ref[...],
                  preferred_element_type=f32)
          + b_ref[1:2, 0:new_dim]).reshape(bb, Wseq, new_dim)
    ckv = (jnp.dot(pemb2d, w_ckv_ref[...], preferred_element_type=f32)
           + b_ref[2:3, 0:2 * new_dim]).reshape(bb, Pseq, 2 * new_dim)
    cross_emb = _mha(cq, ckv[:, :, 0:new_dim], ckv[:, :, new_dim:2 * new_dim],
                     num_heads, None)                                 # (bb, Wseq, new)

    # ---- Feed-forward: Linear -> ReLU -> Linear ----
    h = (jnp.dot(cross_emb.reshape(bb * Wseq, new_dim), f1w_ref[...],
                 preferred_element_type=f32) + b_ref[3:4, 0:hidden_ff])
    h = jnp.maximum(h, 0.0)
    out = (jnp.dot(h, f2w_ref[...], preferred_element_type=f32)
           + b_ref[4:5, 0:E])
    out_ref[...] = out.reshape(bb, Wseq, E).astype(out_ref.dtype)


# ------------------------------- host wrapper -------------------------------- #

def pack_params(params, Wemb_dim, new_dim, num_heads):
    """Pack the 16 parameter tensors into 6 lane-0-aligned arrays.

    The 1/sqrt(head_dim) attention scales are folded into the Q weights/biases.
    Biases live one group per sublane row of an (8, >=128) array so every in-kernel
    bias slice starts at lane 0.
    """
    s_m = 1.0 / ((Wemb_dim // num_heads) ** 0.5)   # masked-attention scale
    s_c = 1.0 / ((new_dim // num_heads) ** 0.5)    # cross-attention scale

    w_mqkv = jnp.concatenate([params["mqw"] * s_m, params["mkw"], params["mvw"]],
                             axis=1)                              # (Wemb, 3*Wemb)
    w_cq = params["cqw"] * s_c                                    # (Wemb, new)
    w_ckv = jnp.concatenate([params["ckw"], params["cvw"]], axis=1)  # (Pemb, 2*new)

    groups = [
        jnp.concatenate([params["mqb"] * s_m, params["mkb"], params["mvb"]], axis=1),
        params["cqb"] * s_c,
        jnp.concatenate([params["ckb"], params["cvb"]], axis=1),
        params["f1b"],
        params["f2b"],
    ]
    pw = max(g.shape[1] for g in groups)
    pw = ((pw + 127) // 128) * 128                                # lane-dense rows
    rows = [jnp.pad(g, ((0, 0), (0, pw - g.shape[1]))) for g in groups]
    b_pack = jnp.concatenate(rows, axis=0)                        # (5, pw)
    b_pack = jnp.pad(b_pack, ((0, 8 - b_pack.shape[0]), (0, 0)))  # (8, pw)
    return w_mqkv, w_cq, w_ckv, params["f1w"], params["f2w"], b_pack


def _full_spec(arr):
    n = arr.ndim
    # Constant index map -> block stays resident in VMEM across grid steps.
    return pl.BlockSpec(arr.shape, lambda i, _n=n: (0,) * _n)


def decoder2_forward(wemb, pemb, params, num_heads, *, block_batch=8):
    """wemb: (B, Wseq, Wemb_dim), pemb: (B, Pseq, Pemb_dim) -> (B, Wseq, Wemb_dim)."""
    B, Wseq, Wemb_dim = wemb.shape
    Bp, Pseq, Pemb_dim = pemb.shape
    assert B == Bp and B % block_batch == 0, (B, Bp, block_batch)
    new_dim = params["cqw"].shape[1]

    w_mqkv, w_cq, w_ckv, f1w, f2w, b_pack = pack_params(
        params, Wemb_dim, new_dim, num_heads)

    kernel = functools.partial(decoder2_kernel, num_heads=num_heads)
    grid = (B // block_batch,)

    # Matmuls stay f32: at contraction sizes K=8..64 the MXU is latency-bound, so bf16
    # would only add VPU casts (and hurt on v5e which has no bf16 VPU path).
    # TODO(synk): if Wseq/Pseq ever grow beyond a few hundred, switch to a flash-style
    # grid over query/KV tiles, sizing tiles for v7x's 64 MiB VMEM (vs 128 MiB v5e/v6e).
    return pl.pallas_call(
        kernel,
        out_shape=jax.ShapeDtypeStruct((B, Wseq, Wemb_dim), jnp.float32),
        grid=grid,
        in_specs=[
            pl.BlockSpec((block_batch, Wseq, Wemb_dim), lambda i: (i, 0, 0)),
            pl.BlockSpec((block_batch, Pseq, Pemb_dim), lambda i: (i, 0, 0)),
            _full_spec(w_mqkv), _full_spec(w_cq), _full_spec(w_ckv),
            _full_spec(f1w), _full_spec(f2w), _full_spec(b_pack),
        ],
        out_specs=pl.BlockSpec((block_batch, Wseq, Wemb_dim), lambda i: (i, 0, 0)),
        compiler_params=pltpu.CompilerParams(
            dimension_semantics=("parallel",)),   # v7x: shard batch grid over both TCs
    )(wemb, pemb, w_mqkv, w_cq, w_ckv, f1w, f2w, b_pack)


# ----------------------------- parameter init -------------------------------- #

def _init_linear(key, in_dim, out_dim):
    # torch.nn.Linear default: U(-1/sqrt(in), 1/sqrt(in)) for both weight and bias.
    kw, kb = jax.random.split(key)
    bound = 1.0 / (in_dim ** 0.5)
    w = jax.random.uniform(kw, (in_dim, out_dim), jnp.float32, -bound, bound)
    b = jax.random.uniform(kb, (1, out_dim), jnp.float32, -bound, bound)
    return w, b


def init_params(key, Wemb_dim, Pemb_dim, new_dim, hidden_dim_ff):
    keys = jax.random.split(key, 8)
    p = {}
    # MaskedAttention projections (Wemb_dim -> Wemb_dim)
    p["mqw"], p["mqb"] = _init_linear(keys[0], Wemb_dim, Wemb_dim)
    p["mkw"], p["mkb"] = _init_linear(keys[1], Wemb_dim, Wemb_dim)
    p["mvw"], p["mvb"] = _init_linear(keys[2], Wemb_dim, Wemb_dim)
    # CrossAttention projections
    p["cqw"], p["cqb"] = _init_linear(keys[3], Wemb_dim, new_dim)
    p["ckw"], p["ckb"] = _init_linear(keys[4], Pemb_dim, new_dim)
    p["cvw"], p["cvb"] = _init_linear(keys[5], Pemb_dim, new_dim)
    # Feed-forward
    p["f1w"], p["f1b"] = _init_linear(keys[6], new_dim, hidden_dim_ff)
    p["f2w"], p["f2b"] = _init_linear(keys[7], hidden_dim_ff, Wemb_dim)
    # NOTE: CrossAttention.embeddings (vocab_size x Wemb_dim) is unused in forward.
    return p


# ------------------------------ pure-JAX reference --------------------------- #

def _ref_mha(q, k, v, num_heads, causal):
    seq_q, dim = q.shape
    seq_k = k.shape[0]
    hd = dim // num_heads
    qh = q.reshape(seq_q, num_heads, hd).transpose(1, 0, 2)
    kh = k.reshape(seq_k, num_heads, hd).transpose(1, 0, 2)
    vh = v.reshape(seq_k, num_heads, hd).transpose(1, 0, 2)
    sim = jnp.einsum("hqd,hkd->hqk", qh, kh) / (hd ** 0.5)
    if causal:
        mask = jnp.triu(jnp.ones((seq_q, seq_k), jnp.float32), k=1) * -1e9
        sim = sim + mask[None]
    p = jax.nn.softmax(sim, axis=-1)
    o = jnp.einsum("hqk,hkd->hqd", p, vh)
    return o.transpose(1, 0, 2).reshape(seq_q, dim)


def ref_forward(wemb, pemb, params, num_heads):
    q = wemb @ params["mqw"] + params["mqb"]
    k = wemb @ params["mkw"] + params["mkb"]
    v = wemb @ params["mvw"] + params["mvb"]
    word_emb = _ref_mha(q, k, v, num_heads, causal=True)
    cq = word_emb @ params["cqw"] + params["cqb"]
    ck = pemb @ params["ckw"] + params["ckb"]
    cv = pemb @ params["cvw"] + params["cvb"]
    cross_emb = _ref_mha(cq, ck, cv, num_heads, causal=False)
    h = jnp.maximum(cross_emb @ params["f1w"] + params["f1b"], 0.0)
    return h @ params["f2w"] + params["f2b"]


def ref_forward_batched(wemb, pemb, params, num_heads):
    return jax.vmap(lambda w, p: ref_forward(w, p, params, num_heads))(wemb, pemb)


# ------------------------------------ main ------------------------------------ #

if __name__ == "__main__":
    # Small, self-consistent hyperparameters (embedding table unused in forward).
    vocab_size = 100
    Wemb_dim = 32
    Pemb_dim = 64
    new_dim = 32
    num_heads = 4
    hidden_dim_ff = 64
    Wseq = 8                  # word sequence length
    Pseq = 16                 # image/patch sequence length
    B = 32                    # batch of sequences
    block_batch = 8           # sequences per grid program (64 output rows / program)

    key = jax.random.PRNGKey(0)
    k_in, k_p = jax.random.split(key)
    kw, kp = jax.random.split(k_in)
    wemb = jax.random.normal(kw, (B, Wseq, Wemb_dim), jnp.float32)
    pemb = jax.random.normal(kp, (B, Pseq, Pemb_dim), jnp.float32)

    params = init_params(k_p, Wemb_dim, Pemb_dim, new_dim, hidden_dim_ff)

    out = decoder2_forward(wemb, pemb, params, num_heads, block_batch=block_batch)
    out = jax.block_until_ready(out)

    ref = ref_forward_batched(wemb, pemb, params, num_heads)
    assert out.shape == (B, Wseq, Wemb_dim), out.shape
    assert jnp.allclose(out, ref, atol=1e-4, rtol=1e-4), \
        float(jnp.max(jnp.abs(out - ref)))

    print("KERNEL_OK")
</pallas_src>

<mosaic_0001>
module attributes {stable_mosaic.version = 11 : i64} {
  func.func @decoder2_kernel(%arg0: i32, %arg1: memref<8x8x32xf32, #tpu.memory_space<vmem>>, %arg2: memref<8x16x64xf32, #tpu.memory_space<vmem>>, %arg3: memref<32x96xf32, #tpu.memory_space<vmem>>, %arg4: memref<32x32xf32, #tpu.memory_space<vmem>>, %arg5: memref<64x64xf32, #tpu.memory_space<vmem>>, %arg6: memref<32x64xf32, #tpu.memory_space<vmem>>, %arg7: memref<64x32xf32, #tpu.memory_space<vmem>>, %arg8: memref<8x128xf32, #tpu.memory_space<vmem>>, %arg9: memref<8x8x32xf32, #tpu.memory_space<vmem>>) attributes {dimension_semantics = [#tpu.dimension_semantics<parallel>], iteration_bounds = array<i64: 4>, scalar_prefetch = 0 : i64, scratch_operands = 0 : i64, tpu.core_type = #tpu.core_type<tc>, window_params = [{transform_indices = @transform_0, window_bounds = array<i64: 8, 8, 32>}, {transform_indices = @transform_1, window_bounds = array<i64: 8, 16, 64>}, {pipeline_mode = #tpu.pipeline_mode<synchronous>, transform_indices = @transform_2, window_bounds = array<i64: 32, 96>}, {pipeline_mode = #tpu.pipeline_mode<synchronous>, transform_indices = @transform_3, window_bounds = array<i64: 32, 32>}, {pipeline_mode = #tpu.pipeline_mode<synchronous>, transform_indices = @transform_4, window_bounds = array<i64: 64, 64>}, {pipeline_mode = #tpu.pipeline_mode<synchronous>, transform_indices = @transform_5, window_bounds = array<i64: 32, 64>}, {pipeline_mode = #tpu.pipeline_mode<synchronous>, transform_indices = @transform_6, window_bounds = array<i64: 64, 32>}, {pipeline_mode = #tpu.pipeline_mode<synchronous>, transform_indices = @transform_7, window_bounds = array<i64: 8, 128>}, {transform_indices = @transform_8, window_bounds = array<i64: 8, 8, 32>}]} {
    %c0 = arith.constant 0 : index
    %c0_0 = arith.constant 0 : index
    %c0_1 = arith.constant 0 : index
    %0 = vector.load %arg1[%c0, %c0_0, %c0_1] : memref<8x8x32xf32, #tpu.memory_space<vmem>>, vector<8x8x32xf32>
    %1 = vector.shape_cast %0 : vector<8x8x32xf32> to vector<64x32xf32>
    %c0_2 = arith.constant 0 : index
    %c0_3 = arith.constant 0 : index
    %c0_4 = arith.constant 0 : index
    %2 = vector.load %arg2[%c0_2, %c0_3, %c0_4] : memref<8x16x64xf32, #tpu.memory_space<vmem>>, vector<8x16x64xf32>
    %3 = vector.shape_cast %2 : vector<8x16x64xf32> to vector<128x64xf32>
    %4 = tpu.iota {dimensions = array<i32: 0>} : vector<8x8xi32>
    %5 = tpu.iota {dimensions = array<i32: 1>} : vector<8x8xi32>
    %6 = arith.cmpi sgt, %5, %4 : vector<8x8xi32>
    %cst = arith.constant -1.000000e+09 : f32
    %cst_5 = arith.constant 0.000000e+00 : f32
    %7 = vector.broadcast %cst : f32 to vector<8x8xf32>
    %8 = vector.broadcast %cst_5 : f32 to vector<8x8xf32>
    %9 = arith.select %6, %7, %8 : vector<8x8xi1>, vector<8x8xf32>
    %10 = vector.shape_cast %9 : vector<8x8xf32> to vector<1x8x8xf32>
    %c0_6 = arith.constant 0 : index
    %c0_7 = arith.constant 0 : index
    %11 = vector.load %arg3[%c0_6, %c0_7] : memref<32x96xf32, #tpu.memory_space<vmem>>, vector<32x96xf32>
    %cst_8 = arith.constant dense<0.000000e+00> : vector<64x96xf32>
    %12 = tpu.matmul %1, %11, %cst_8 {dimension_numbers = #tpu.dot_dimension_numbers<[1], [0], [0], [1], [0, 0, 1, 1], [], []>} : vector<64x32xf32>, vector<32x96xf32>, vector<64x96xf32> -> vector<64x96xf32>
    %c0_9 = arith.constant 0 : index
    %c0_10 = arith.constant 0 : index
    %13 = vector.load %arg8[%c0_9, %c0_10] : memref<8x128xf32, #tpu.memory_space<vmem>>, vector<1x96xf32>
    %14 = vector.broadcast %13 : vector<1x96xf32> to vector<64x96xf32>
    %15 = arith.addf %12, %14 : vector<64x96xf32>
    %16 = vector.shape_cast %15 : vector<64x96xf32> to vector<8x8x96xf32>
    %17 = vector.extract_strided_slice %16 {offsets = [0, 0, 0], sizes = [8, 8, 32], strides = [1, 1, 1]} : vector<8x8x96xf32> to vector<8x8x32xf32>
    %18 = vector.extract_strided_slice %16 {offsets = [0, 0, 32], sizes = [8, 8, 32], strides = [1, 1, 1]} : vector<8x8x96xf32> to vector<8x8x32xf32>
    %19 = vector.extract_strided_slice %16 {offsets = [0, 0, 64], sizes = [8, 8, 32], strides = [1, 1, 1]} : vector<8x8x96xf32> to vector<8x8x32xf32>
    %20 = vector.extract_strided_slice %17 {offsets = [0, 0, 0], sizes = [8, 8, 8], strides = [1, 1, 1]} : vector<8x8x32xf32> to vector<8x8x8xf32>
    %21 = vector.extract_strided_slice %18 {offsets = [0, 0, 0], sizes = [8, 8, 8], strides = [1, 1, 1]} : vector<8x8x32xf32> to vector<8x8x8xf32>
    "tpu.trace_start"() <{level = 10 : i32, message = "bqd,bkd->bqk"}> : () -> ()
    %cst_11 = arith.constant dense<0.000000e+00> : vector<8x8x8xf32>
    %22 = tpu.matmul %20, %21, %cst_11 {dimension_numbers = #tpu.dot_dimension_numbers<[2], [2], [1], [1], [0, 0, 0, 1, 1, 1], [0], [0]>} : vector<8x8x8xf32>, vector<8x8x8xf32>, vector<8x8x8xf32> -> vector<8x8x8xf32>
    "tpu.trace_stop"() : () -> ()
    %23 = vector.broadcast %10 : vector<1x8x8xf32> to vector<8x8x8xf32>
    %24 = arith.addf %22, %23 : vector<8x8x8xf32>
    %cst_12 = arith.constant dense<0xFF800000> : vector<8x8xf32>
    %25 = vector.multi_reduction <maximumf>, %24, %cst_12 [2] : vector<8x8x8xf32> to vector<8x8xf32>
    %26 = vector.shape_cast %25 : vector<8x8xf32> to vector<8x8x1xf32>
    %27 = vector.broadcast %26 : vector<8x8x1xf32> to vector<8x8x8xf32>
    %28 = arith.subf %24, %27 : vector<8x8x8xf32>
    %29 = math.exp %28 : vector<8x8x8xf32>
    %cst_13 = arith.constant dense<0.000000e+00> : vector<8x8xf32>
    %30 = vector.multi_reduction <add>, %29, %cst_13 [2] : vector<8x8x8xf32> to vector<8x8xf32>
    %31 = vector.shape_cast %30 : vector<8x8xf32> to vector<8x8x1xf32>
    %32 = vector.broadcast %31 : vector<8x8x1xf32> to vector<8x8x8xf32>
    %33 = arith.divf %29, %32 : vector<8x8x8xf32>
    %34 = vector.extract_strided_slice %19 {offsets = [0, 0, 0], sizes = [8, 8, 8], strides = [1, 1, 1]} : vector<8x8x32xf32> to vector<8x8x8xf32>
    "tpu.trace_start"() <{level = 10 : i32, message = "bqk,bkd->bqd"}> : () -> ()
    %cst_14 = arith.constant dense<0.000000e+00> : vector<8x8x8xf32>
    %35 = tpu.matmul %33, %34, %cst_14 {dimension_numbers = #tpu.dot_dimension_numbers<[2], [1], [1], [2], [0, 0, 0, 1, 1, 2], [0], [0]>} : vector<8x8x8xf32>, vector<8x8x8xf32>, vector<8x8x8xf32> -> vector<8x8x8xf32>
    "tpu.trace_stop"() : () -> ()
    %36 = vector.extract_strided_slice %17 {offsets = [0, 0, 8], sizes = [8, 8, 8], strides = [1, 1, 1]} : vector<8x8x32xf32> to vector<8x8x8xf32>
    %37 = vector.extract_strided_slice %18 {offsets = [0, 0, 8], sizes = [8, 8, 8], strides = [1, 1, 1]} : vector<8x8x32xf32> to vector<8x8x8xf32>
    "tpu.trace_start"() <{level = 10 : i32, message = "bqd,bkd->bqk"}> : () -> ()
    %cst_15 = arith.constant dense<0.000000e+00> : vector<8x8x8xf32>
    %38 = tpu.matmul %36, %37, %cst_15 {dimension_numbers = #tpu.dot_dimension_numbers<[2], [2], [1], [1], [0, 0, 0, 1, 1, 1], [0], [0]>} : vector<8x8x8xf32>, vector<8x8x8xf32>, vector<8x8x8xf32> -> vector<8x8x8xf32>
    "tpu.trace_stop"() : () -> ()
    %39 = vector.broadcast %10 : vector<1x8x8xf32> to vector<8x8x8xf32>
    %40 = arith.addf %38, %39 : vector<8x8x8xf32>
    %cst_16 = arith.constant dense<0xFF800000> : vector<8x8xf32>
    %41 = vector.multi_reduction <maximumf>, %40, %cst_16 [2] : vector<8x8x8xf32> to vector<8x8xf32>
    %42 = vector.shape_cast %41 : vector<8x8xf32> to vector<8x8x1xf32>
    %43 = vector.broadcast %42 : vector<8x8x1xf32> to vector<8x8x8xf32>
    %44 = arith.subf %40, %43 : vector<8x8x8xf32>
    %45 = math.exp %44 : vector<8x8x8xf32>
    %cst_17 = arith.constant dense<0.000000e+00> : vector<8x8xf32>
    %46 = vector.multi_reduction <add>, %45, %cst_17 [2] : vector<8x8x8xf32> to vector<8x8xf32>
    %47 = vector.shape_cast %46 : vector<8x8xf32> to vector<8x8x1xf32>
    %48 = vector.broadcast %47 : vector<8x8x1xf32> to vector<8x8x8xf32>
    %49 = arith.divf %45, %48 : vector<8x8x8xf32>
    %50 = vector.extract_strided_slice %19 {offsets = [0, 0, 8], sizes = [8, 8, 8], strides = [1, 1, 1]} : vector<8x8x32xf32> to vector<8x8x8xf32>
    "tpu.trace_start"() <{level = 10 : i32, message = "bqk,bkd->bqd"}> : () -> ()
    %cst_18 = arith.constant dense<0.000000e+00> : vector<8x8x8xf32>
    %51 = tpu.matmul %49, %50, %cst_18 {dimension_numbers = #tpu.dot_dimension_numbers<[2], [1], [1], [2], [0, 0, 0, 1, 1, 2], [0], [0]>} : vector<8x8x8xf32>, vector<8x8x8xf32>, vector<8x8x8xf32> -> vector<8x8x8xf32>
    "tpu.trace_stop"() : () -> ()
    %52 = vector.extract_strided_slice %17 {offsets = [0, 0, 16], sizes = [8, 8, 8], strides = [1, 1, 1]} : vector<8x8x32xf32> to vector<8x8x8xf32>
    %53 = vector.extract_strided_slice %18 {offsets = [0, 0, 16], sizes = [8, 8, 8], strides = [1, 1, 1]} : vector<8x8x32xf32> to vector<8x8x8xf32>
    "tpu.trace_start"() <{level = 10 : i32, message = "bqd,bkd->bqk"}> : () -> ()
    %cst_19 = arith.constant dense<0.000000e+00> : vector<8x8x8xf32>
    %54 = tpu.matmul %52, %53, %cst_19 {dimension_numbers = #tpu.dot_dimension_numbers<[2], [2], [1], [1], [0, 0, 0, 1, 1, 1], [0], [0]>} : vector<8x8x8xf32>, vector<8x8x8xf32>, vector<8x8x8xf32> -> vector<8x8x8xf32>
    "tpu.trace_stop"() : () -> ()
    %55 = vector.broadcast %10 : vector<1x8x8xf32> to vector<8x8x8xf32>
    %56 = arith.addf %54, %55 : vector<8x8x8xf32>
    %cst_20 = arith.constant dense<0xFF800000> : vector<8x8xf32>
    %57 = vector.multi_reduction <maximumf>, %56, %cst_20 [2] : vector<8x8x8xf32> to vector<8x8xf32>
    %58 = vector.shape_cast %57 : vector<8x8xf32> to vector<8x8x1xf32>
    %59 = vector.broadcast %58 : vector<8x8x1xf32> to vector<8x8x8xf32>
    %60 = arith.subf %56, %59 : vector<8x8x8xf32>
    %61 = math.exp %60 : vector<8x8x8xf32>
    %cst_21 = arith.constant dense<0.000000e+00> : vector<8x8xf32>
    %62 = vector.multi_reduction <add>, %61, %cst_21 [2] : vector<8x8x8xf32> to vector<8x8xf32>
    %63 = vector.shape_cast %62 : vector<8x8xf32> to vector<8x8x1xf32>
    %64 = vector.broadcast %63 : vector<8x8x1xf32> to vector<8x8x8xf32>
    %65 = arith.divf %61, %64 : vector<8x8x8xf32>
    %66 = vector.extract_strided_slice %19 {offsets = [0, 0, 16], sizes = [8, 8, 8], strides = [1, 1, 1]} : vector<8x8x32xf32> to vector<8x8x8xf32>
    "tpu.trace_start"() <{level = 10 : i32, message = "bqk,bkd->bqd"}> : () -> ()
    %cst_22 = arith.constant dense<0.000000e+00> : vector<8x8x8xf32>
    %67 = tpu.matmul %65, %66, %cst_22 {dimension_numbers = #tpu.dot_dimension_numbers<[2], [1], [1], [2], [0, 0, 0, 1, 1, 2], [0], [0]>} : vector<8x8x8xf32>, vector<8x8x8xf32>, vector<8x8x8xf32> -> vector<8x8x8xf32>
    "tpu.trace_stop"() : () -> ()
    %68 = vector.extract_strided_slice %17 {offsets = [0, 0, 24], sizes = [8, 8, 8], strides = [1, 1, 1]} : vector<8x8x32xf32> to vector<8x8x8xf32>
    %69 = vector.extract_strided_slice %18 {offsets = [0, 0, 24], sizes = [8, 8, 8], strides = [1, 1, 1]} : vector<8x8x32xf32> to vector<8x8x8xf32>
    "tpu.trace_start"() <{level = 10 : i32, message = "bqd,bkd->bqk"}> : () -> ()
    %cst_23 = arith.constant dense<0.000000e+00> : vector<8x8x8xf32>
    %70 = tpu.matmul %68, %69, %cst_23 {dimension_numbers = #tpu.dot_dimension_numbers<[2], [2], [1], [1], [0, 0, 0, 1, 1, 1], [0], [0]>} : vector<8x8x8xf32>, vector<8x8x8xf32>, vector<8x8x8xf32> -> vector<8x8x8xf32>
    "tpu.trace_stop"() : () -> ()
    %71 = vector.broadcast %10 : vector<1x8x8xf32> to vector<8x8x8xf32>
    %72 = arith.addf %70, %71 : vector<8x8x8xf32>
    %cst_24 = arith.constant dense<0xFF800000> : vector<8x8xf32>
    %73 = vector.multi_reduction <maximumf>, %72, %cst_24 [2] : vector<8x8x8xf32> to vector<8x8xf32>
    %74 = vector.shape_cast %73 : vector<8x8xf32> to vector<8x8x1xf32>
    %75 = vector.broadcast %74 : vector<8x8x1xf32> to vector<8x8x8xf32>
    %76 = arith.subf %72, %75 : vector<8x8x8xf32>
    %77 = math.exp %76 : vector<8x8x8xf32>
    %cst_25 = arith.constant dense<0.000000e+00> : vector<8x8xf32>
    %78 = vector.multi_reduction <add>, %77, %cst_25 [2] : vector<8x8x8xf32> to vector<8x8xf32>
    %79 = vector.shape_cast %78 : vector<8x8xf32> to vector<8x8x1xf32>
    %80 = vector.broadcast %79 : vector<8x8x1xf32> to vector<8x8x8xf32>
    %81 = arith.divf %77, %80 : vector<8x8x8xf32>
    %82 = vector.extract_strided_slice %19 {offsets = [0, 0, 24], sizes = [8, 8, 8], strides = [1, 1, 1]} : vector<8x8x32xf32> to vector<8x8x8xf32>
    "tpu.trace_start"() <{level = 10 : i32, message = "bqk,bkd->bqd"}> : () -> ()
    %cst_26 = arith.constant dense<0.000000e+00> : vector<8x8x8xf32>
    %83 = tpu.matmul %81, %82, %cst_26 {dimension_numbers = #tpu.dot_dimension_numbers<[2], [1], [1], [2], [0, 0, 0, 1, 1, 2], [0], [0]>} : vector<8x8x8xf32>, vector<8x8x8xf32>, vector<8x8x8xf32> -> vector<8x8x8xf32>
    "tpu.trace_stop"() : () -> ()
    %84 = tpu.concatenate %35, %51, %67, %83 in 2 : vector<8x8x8xf32>, vector<8x8x8xf32>, vector<8x8x8xf32>, vector<8x8x8xf32> -> vector<8x8x32xf32>
    %85 = vector.shape_cast %84 : vector<8x8x32xf32> to vector<64x32xf32>
    %c0_27 = arith.constant 0 : index
    %c0_28 = arith.constant 0 : index
    %86 = vector.load %arg4[%c0_27, %c0_28] : memref<32x32xf32, #tpu.memory_space<vmem>>, vector<32x32xf32>
    %cst_29 = arith.constant dense<0.000000e+00> : vector<64x32xf32>
    %87 = tpu.matmul %85, %86, %cst_29 {dimension_numbers = #tpu.dot_dimension_numbers<[1], [0], [0], [1], [0, 0, 1, 1], [], []>} : vector<64x32xf32>, vector<32x32xf32>, vector<64x32xf32> -> vector<64x32xf32>
    %c1 = arith.constant 1 : index
    %c0_30 = arith.constant 0 : index
    %88 = vector.load %arg8[%c1, %c0_30] : memref<8x128xf32, #tpu.memory_space<vmem>>, vector<1x32xf32>
    %89 = vector.broadcast %88 : vector<1x32xf32> to vector<64x32xf32>
    %90 = arith.addf %87, %89 : vector<64x32xf32>
    %91 = vector.shape_cast %90 : vector<64x32xf32> to vector<8x8x32xf32>
    %c0_31 = arith.constant 0 : index
    %c0_32 = arith.constant 0 : index
    %92 = vector.load %arg5[%c0_31, %c0_32] : memref<64x64xf32, #tpu.memory_space<vmem>>, vector<64x64xf32>
    %cst_33 = arith.constant dense<0.000000e+00> : vector<128x64xf32>
    %93 = tpu.matmul %3, %92, %cst_33 {dimension_numbers = #tpu.dot_dimension_numbers<[1], [0], [0], [1], [0, 0, 1, 1], [], []>} : vector<128x64xf32>, vector<64x64xf32>, vector<128x64xf32> -> vector<128x64xf32>
    %c2 = arith.constant 2 : index
    %c0_34 = arith.constant 0 : index
    %94 = vector.load %arg8[%c2, %c0_34] : memref<8x128xf32, #tpu.memory_space<vmem>>, vector<1x64xf32>
    %95 = vector.broadcast %94 : vector<1x64xf32> to vector<128x64xf32>
    %96 = arith.addf %93, %95 : vector<128x64xf32>
    %97 = vector.shape_cast %96 : vector<128x64xf32> to vector<8x16x64xf32>
    %98 = vector.extract_strided_slice %97 {offsets = [0, 0, 0], sizes = [8, 16, 32], strides = [1, 1, 1]} : vector<8x16x64xf32> to vector<8x16x32xf32>
    %99 = vector.extract_strided_slice %97 {offsets = [0, 0, 32], sizes = [8, 16, 32], strides = [1, 1, 1]} : vector<8x16x64xf32> to vector<8x16x32xf32>
    %100 = vector.extract_strided_slice %91 {offsets = [0, 0, 0], sizes = [8, 8, 8], strides = [1, 1, 1]} : vector<8x8x32xf32> to vector<8x8x8xf32>
    %101 = vector.extract_strided_slice %98 {offsets = [0, 0, 0], sizes = [8, 16, 8], strides = [1, 1, 1]} : vector<8x16x32xf32> to vector<8x16x8xf32>
    "tpu.trace_start"() <{level = 10 : i32, message = "bqd,bkd->bqk"}> : () -> ()
    %cst_35 = arith.constant dense<0.000000e+00> : vector<8x8x16xf32>
    %102 = tpu.matmul %100, %101, %cst_35 {dimension_numbers = #tpu.dot_dimension_numbers<[2], [2], [1], [1], [0, 0, 0, 1, 1, 1], [0], [0]>} : vector<8x8x8xf32>, vector<8x16x8xf32>, vector<8x8x16xf32> -> vector<8x8x16xf32>
    "tpu.trace_stop"() : () -> ()
    %cst_36 = arith.constant dense<0xFF800000> : vector<8x8xf32>
    %103 = vector.multi_reduction <maximumf>, %102, %cst_36 [2] : vector<8x8x16xf32> to vector<8x8xf32>
    %104 = vector.shape_cast %103 : vector<8x8xf32> to vector<8x8x1xf32>
    %105 = vector.broadcast %104 : vector<8x8x1xf32> to vector<8x8x16xf32>
    %106 = arith.subf %102, %105 : vector<8x8x16xf32>
    %107 = math.exp %106 : vector<8x8x16xf32>
    %cst_37 = arith.constant dense<0.000000e+00> : vector<8x8xf32>
    %108 = vector.multi_reduction <add>, %107, %cst_37 [2] : vector<8x8x16xf32> to vector<8x8xf32>
    %109 = vector.shape_cast %108 : vector<8x8xf32> to vector<8x8x1xf32>
    %110 = vector.broadcast %109 : vector<8x8x1xf32> to vector<8x8x16xf32>
    %111 = arith.divf %107, %110 : vector<8x8x16xf32>
    %112 = vector.extract_strided_slice %99 {offsets = [0, 0, 0], sizes = [8, 16, 8], strides = [1, 1, 1]} : vector<8x16x32xf32> to vector<8x16x8xf32>
    "tpu.trace_start"() <{level = 10 : i32, message = "bqk,bkd->bqd"}> : () -> ()
    %cst_38 = arith.constant dense<0.000000e+00> : vector<8x8x8xf32>
    %113 = tpu.matmul %111, %112, %cst_38 {dimension_numbers = #tpu.dot_dimension_numbers<[2], [1], [1], [2], [0, 0, 0, 1, 1, 2], [0], [0]>} : vector<8x8x16xf32>, vector<8x16x8xf32>, vector<8x8x8xf32> -> vector<8x8x8xf32>
    "tpu.trace_stop"() : () -> ()
    %114 = vector.extract_strided_slice %91 {offsets = [0, 0, 8], sizes = [8, 8, 8], strides = [1, 1, 1]} : vector<8x8x32xf32> to vector<8x8x8xf32>
    %115 = vector.extract_strided_slice %98 {offsets = [0, 0, 8], sizes = [8, 16, 8], strides = [1, 1, 1]} : vector<8x16x32xf32> to vector<8x16x8xf32>
    "tpu.trace_start"() <{level = 10 : i32, message = "bqd,bkd->bqk"}> : () -> ()
    %cst_39 = arith.constant dense<0.000000e+00> : vector<8x8x16xf32>
    %116 = tpu.matmul %114, %115, %cst_39 {dimension_numbers = #tpu.dot_dimension_numbers<[2], [2], [1], [1], [0, 0, 0, 1, 1, 1], [0], [0]>} : vector<8x8x8xf32>, vector<8x16x8xf32>, vector<8x8x16xf32> -> vector<8x8x16xf32>
    "tpu.trace_stop"() : () -> ()
    %cst_40 = arith.constant dense<0xFF800000> : vector<8x8xf32>
    %117 = vector.multi_reduction <maximumf>, %116, %cst_40 [2] : vector<8x8x16xf32> to vector<8x8xf32>
    %118 = vector.shape_cast %117 : vector<8x8xf32> to vector<8x8x1xf32>
    %119 = vector.broadcast %118 : vector<8x8x1xf32> to vector<8x8x16xf32>
    %120 = arith.subf %116, %119 : vector<8x8x16xf32>
    %121 = math.exp %120 : vector<8x8x16xf32>
    %cst_41 = arith.constant dense<0.000000e+00> : vector<8x8xf32>
    %122 = vector.multi_reduction <add>, %121, %cst_41 [2] : vector<8x8x16xf32> to vector<8x8xf32>
    %123 = vector.shape_cast %122 : vector<8x8xf32> to vector<8x8x1xf32>
    %124 = vector.broadcast %123 : vector<8x8x1xf32> to vector<8x8x16xf32>
    %125 = arith.divf %121, %124 : vector<8x8x16xf32>
    %126 = vector.extract_strided_slice %99 {offsets = [0, 0, 8], sizes = [8, 16, 8], strides = [1, 1, 1]} : vector<8x16x32xf32> to vector<8x16x8xf32>
    "tpu.trace_start"() <{level = 10 : i32, message = "bqk,bkd->bqd"}> : () -> ()
    %cst_42 = arith.constant dense<0.000000e+00> : vector<8x8x8xf32>
    %127 = tpu.matmul %125, %126, %cst_42 {dimension_numbers = #tpu.dot_dimension_numbers<[2], [1], [1], [2], [0, 0, 0, 1, 1, 2], [0], [0]>} : vector<8x8x16xf32>, vector<8x16x8xf32>, vector<8x8x8xf32> -> vector<8x8x8xf32>
    "tpu.trace_stop"() : () -> ()
    %128 = vector.extract_strided_slice %91 {offsets = [0, 0, 16], sizes = [8, 8, 8], strides = [1, 1, 1]} : vector<8x8x32xf32> to vector<8x8x8xf32>
    %129 = vector.extract_strided_slice %98 {offsets = [0, 0, 16], sizes = [8, 16, 8], strides = [1, 1, 1]} : vector<8x16x32xf32> to vector<8x16x8xf32>
    "tpu.trace_start"() <{level = 10 : i32, message = "bqd,bkd->bqk"}> : () -> ()
    %cst_43 = arith.constant dense<0.000000e+00> : vector<8x8x16xf32>
    %130 = tpu.matmul %128, %129, %cst_43 {dimension_numbers = #tpu.dot_dimension_numbers<[2], [2], [1], [1], [0, 0, 0, 1, 1, 1], [0], [0]>} : vector<8x8x8xf32>, vector<8x16x8xf32>, vector<8x8x16xf32> -> vector<8x8x16xf32>
    "tpu.trace_stop"() : () -> ()
    %cst_44 = arith.constant dense<0xFF800000> : vector<8x8xf32>
    %131 = vector.multi_reduction <maximumf>, %130, %cst_44 [2] : vector<8x8x16xf32> to vector<8x8xf32>
    %132 = vector.shape_cast %131 : vector<8x8xf32> to vector<8x8x1xf32>
    %133 = vector.broadcast %132 : vector<8x8x1xf32> to vector<8x8x16xf32>
    %134 = arith.subf %130, %133 : vector<8x8x16xf32>
    %135 = math.exp %134 : vector<8x8x16xf32>
    %cst_45 = arith.constant dense<0.000000e+00> : vector<8x8xf32>
    %136 = vector.multi_reduction <add>, %135, %cst_45 [2] : vector<8x8x16xf32> to vector<8x8xf32>
    %137 = vector.shape_cast %136 : vector<8x8xf32> to vector<8x8x1xf32>
    %138 = vector.broadcast %137 : vector<8x8x1xf32> to vector<8x8x16xf32>
    %139 = arith.divf %135, %138 : vector<8x8x16xf32>
    %140 = vector.extract_strided_slice %99 {offsets = [0, 0, 16], sizes = [8, 16, 8], strides = [1, 1, 1]} : vector<8x16x32xf32> to vector<8x16x8xf32>
    "tpu.trace_start"() <{level = 10 : i32, message = "bqk,bkd->bqd"}> : () -> ()
    %cst_46 = arith.constant dense<0.000000e+00> : vector<8x8x8xf32>
    %141 = tpu.matmul %139, %140, %cst_46 {dimension_numbers = #tpu.dot_dimension_numbers<[2], [1], [1], [2], [0, 0, 0, 1, 1, 2], [0], [0]>} : vector<8x8x16xf32>, vector<8x16x8xf32>, vector<8x8x8xf32> -> vector<8x8x8xf32>
    "tpu.trace_stop"() : () -> ()
    %142 = vector.extract_strided_slice %91 {offsets = [0, 0, 24], sizes = [8, 8, 8], strides = [1, 1, 1]} : vector<8x8x32xf32> to vector<8x8x8xf32>
    %143 = vector.extract_strided_slice %98 {offsets = [0, 0, 24], sizes = [8, 16, 8], strides = [1, 1, 1]} : vector<8x16x32xf32> to vector<8x16x8xf32>
    "tpu.trace_start"() <{level = 10 : i32, message = "bqd,bkd->bqk"}> : () -> ()
    %cst_47 = arith.constant dense<0.000000e+00> : vector<8x8x16xf32>
    %144 = tpu.matmul %142, %143, %cst_47 {dimension_numbers = #tpu.dot_dimension_numbers<[2], [2], [1], [1], [0, 0, 0, 1, 1, 1], [0], [0]>} : vector<8x8x8xf32>, vector<8x16x8xf32>, vector<8x8x16xf32> -> vector<8x8x16xf32>
    "tpu.trace_stop"() : () -> ()
    %cst_48 = arith.constant dense<0xFF800000> : vector<8x8xf32>
    %145 = vector.multi_reduction <maximumf>, %144, %cst_48 [2] : vector<8x8x16xf32> to vector<8x8xf32>
    %146 = vector.shape_cast %145 : vector<8x8xf32> to vector<8x8x1xf32>
    %147 = vector.broadcast %146 : vector<8x8x1xf32> to vector<8x8x16xf32>
    %148 = arith.subf %144, %147 : vector<8x8x16xf32>
    %149 = math.exp %148 : vector<8x8x16xf32>
    %cst_49 = arith.constant dense<0.000000e+00> : vector<8x8xf32>
    %150 = vector.multi_reduction <add>, %149, %cst_49 [2] : vector<8x8x16xf32> to vector<8x8xf32>
    %151 = vector.shape_cast %150 : vector<8x8xf32> to vector<8x8x1xf32>
    %152 = vector.broadcast %151 : vector<8x8x1xf32> to vector<8x8x16xf32>
    %153 = arith.divf %149, %152 : vector<8x8x16xf32>
    %154 = vector.extract_strided_slice %99 {offsets = [0, 0, 24], sizes = [8, 16, 8], strides = [1, 1, 1]} : vector<8x16x32xf32> to vector<8x16x8xf32>
    "tpu.trace_start"() <{level = 10 : i32, message = "bqk,bkd->bqd"}> : () -> ()
    %cst_50 = arith.constant dense<0.000000e+00> : vector<8x8x8xf32>
    %155 = tpu.matmul %153, %154, %cst_50 {dimension_numbers = #tpu.dot_dimension_numbers<[2], [1], [1], [2], [0, 0, 0, 1, 1, 2], [0], [0]>} : vector<8x8x16xf32>, vector<8x16x8xf32>, vector<8x8x8xf32> -> vector<8x8x8xf32>
    "tpu.trace_stop"() : () -> ()
    %156 = tpu.concatenate %113, %127, %141, %155 in 2 : vector<8x8x8xf32>, vector<8x8x8xf32>, vector<8x8x8xf32>, vector<8x8x8xf32> -> vector<8x8x32xf32>
    %157 = vector.shape_cast %156 : vector<8x8x32xf32> to vector<64x32xf32>
    %c0_51 = arith.constant 0 : index
    %c0_52 = arith.constant 0 : index
    %158 = vector.load %arg6[%c0_51, %c0_52] : memref<32x64xf32, #tpu.memory_space<vmem>>, vector<32x64xf32>
    %cst_53 = arith.constant dense<0.000000e+00> : vector<64x64xf32>
    %159 = tpu.matmul %157, %158, %cst_53 {dimension_numbers = #tpu.dot_dimension_numbers<[1], [0], [0], [1], [0, 0, 1, 1], [], []>} : vector<64x32xf32>, vector<32x64xf32>, vector<64x64xf32> -> vector<64x64xf32>
    %c3 = arith.constant 3 : index
    %c0_54 = arith.constant 0 : index
    %160 = vector.load %arg8[%c3, %c0_54] : memref<8x128xf32, #tpu.memory_space<vmem>>, vector<1x64xf32>
    %161 = vector.broadcast %160 : vector<1x64xf32> to vector<64x64xf32>
    %162 = arith.addf %159, %161 : vector<64x64xf32>
    %cst_55 = arith.constant 0.000000e+00 : f32
    %163 = vector.broadcast %cst_55 : f32 to vector<64x64xf32>
    %164 = arith.maximumf %162, %163 : vector<64x64xf32>
    %c0_56 = arith.constant 0 : index
    %c0_57 = arith.constant 0 : index
    %165 = vector.load %arg7[%c0_56, %c0_57] : memref<64x32xf32, #tpu.memory_space<vmem>>, vector<64x32xf32>
    %cst_58 = arith.constant dense<0.000000e+00> : vector<64x32xf32>
    %166 = tpu.matmul %164, %165, %cst_58 {dimension_numbers = #tpu.dot_dimension_numbers<[1], [0], [0], [1], [0, 0, 1, 1], [], []>} : vector<64x64xf32>, vector<64x32xf32>, vector<64x32xf32> -> vector<64x32xf32>
    %c4 = arith.constant 4 : index
    %c0_59 = arith.constant 0 : index
    %167 = vector.load %arg8[%c4, %c0_59] : memref<8x128xf32, #tpu.memory_space<vmem>>, vector<1x32xf32>
    %168 = vector.broadcast %167 : vector<1x32xf32> to vector<64x32xf32>
    %169 = arith.addf %166, %168 : vector<64x32xf32>
    %170 = vector.shape_cast %169 : vector<64x32xf32> to vector<8x8x32xf32>
    %c0_60 = arith.constant 0 : index
    %c0_61 = arith.constant 0 : index
    %c0_62 = arith.constant 0 : index
    %171 = vector.load %arg9[%c0_60, %c0_61, %c0_62] : memref<8x8x32xf32, #tpu.memory_space<vmem>>, vector<8x8x32xf32>
    tpu.vector_store %arg9[%c0_60, %c0_61, %c0_62], %170 {strides = array<i32>} : memref<8x8x32xf32, #tpu.memory_space<vmem>>, vector<8x8x32xf32>,
    return
  }
  func.func @transform_0(%arg0: i32) -> (i32, i32, i32) {
    %c0_i32 = arith.constant 0 : i32
    %c0_i32_0 = arith.constant 0 : i32
    %c0_i32_1 = arith.constant 0 : i32
    return %arg0, %c0_i32, %c0_i32_0 : i32, i32, i32
  }
  func.func @transform_1(%arg0: i32) -> (i32, i32, i32) {
    %c0_i32 = arith.constant 0 : i32
    %c0_i32_0 = arith.constant 0 : i32
    %c0_i32_1 = arith.constant 0 : i32
    return %arg0, %c0_i32, %c0_i32_0 : i32, i32, i32
  }
  func.func @transform_2(%arg0: i32) -> (i32, i32) {
    %c0_i32 = arith.constant 0 : i32
    %c0_i32_0 = arith.constant 0 : i32
    %c0_i32_1 = arith.constant 0 : i32
    return %c0_i32, %c0_i32_0 : i32, i32
  }
  func.func @transform_3(%arg0: i32) -> (i32, i32) {
    %c0_i32 = arith.constant 0 : i32
    %c0_i32_0 = arith.constant 0 : i32
    %c0_i32_1 = arith.constant 0 : i32
    return %c0_i32, %c0_i32_0 : i32, i32
  }
  func.func @transform_4(%arg0: i32) -> (i32, i32) {
    %c0_i32 = arith.constant 0 : i32
    %c0_i32_0 = arith.constant 0 : i32
    %c0_i32_1 = arith.constant 0 : i32
    return %c0_i32, %c0_i32_0 : i32, i32
  }
  func.func @transform_5(%arg0: i32) -> (i32, i32) {
    %c0_i32 = arith.constant 0 : i32
    %c0_i32_0 = arith.constant 0 : i32
    %c0_i32_1 = arith.constant 0 : i32
    return %c0_i32, %c0_i32_0 : i32, i32
  }
  func.func @transform_6(%arg0: i32) -> (i32, i32) {
    %c0_i32 = arith.constant 0 : i32
    %c0_i32_0 = arith.constant 0 : i32
    %c0_i32_1 = arith.constant 0 : i32
    return %c0_i32, %c0_i32_0 : i32, i32
  }
  func.func @transform_7(%arg0: i32) -> (i32, i32) {
    %c0_i32 = arith.constant 0 : i32
    %c0_i32_0 = arith.constant 0 : i32
    %c0_i32_1 = arith.constant 0 : i32
    return %c0_i32, %c0_i32_0 : i32, i32
  }
  func.func @transform_8(%arg0: i32) -> (i32, i32, i32) {
    %c0_i32 = arith.constant 0 : i32
    %c0_i32_0 = arith.constant 0 : i32
    %c0_i32_1 = arith.constant 0 : i32
    return %arg0, %c0_i32, %c0_i32_0 : i32, i32, i32
  }
}

</mosaic_0001>

<llo_original>
// kernel: tpu_custom_call.1
$region0: #{tpu_custom_call.1}
  #allocation0 [shape = 'u32[]', space=smem, size = 0x4, offset = 0x4, fixed_abs, tag = 'smem constant byte address 0x4 - core index']
  #allocation1 [shape = 'u32[72,128]{1,0:T(1,128)}', space=vmem, size = 0x9000, scoped, tag = 'internal scratch']
  %s0 = inlined_call_operand.hbm [shape: f32[32,8,32], index: 0, kind: input, shape index: {}]
  %s1 = inlined_call_operand.hbm [shape: f32[32,16,64], index: 1, kind: input, shape index: {}]
  %s2 = inlined_call_operand.vmem [shape: f32[32,96], index: 2, kind: input, shape index: {}]
  %s3 = inlined_call_operand.hbm [shape: f32[32,32], index: 3, kind: input, shape index: {}]
  %s4 = inlined_call_operand.vmem [shape: f32[64,64], index: 4, kind: input, shape index: {}]
  %s5 = inlined_call_operand.hbm [shape: f32[32,64], index: 5, kind: input, shape index: {}]
  %s6 = inlined_call_operand.vmem [shape: f32[64,32], index: 6, kind: input, shape index: {}]
  %s7 = inlined_call_operand.hbm [shape: f32[8,128], index: 7, kind: input, shape index: {}]
  %s8 = inlined_call_operand.hbm [shape: f32[32,8,32], index: 8, kind: output, shape index: {}]
  %s9 = sld [smem:[#allocation0]]
  $region85: #{tpu_custom_call.1} parent=0
    _
  %s11 = ssub.s32 1, %s9
  %s12 = scalar_select 0, %s11, %s9
  $region1: #{tpu_custom_call.1} parent=0
    #allocation2 [shape = 'u8[65536]{0}', space=vmem, size = 0x10000, scoped, tag = 'input window, operand 0']
    #allocation3 [shape = 's32[2]{0}', space=sflag, size = 0x8, scoped, tag = 'scoped memory for tpu_custom_call.1']
    #allocation4 [shape = 's32[2]{0}', space=sflag, size = 0x8, scoped, tag = 'scoped memory for tpu_custom_call.1']
    #allocation5 [shape = 'u8[131072]{0}', space=vmem, size = 0x20000, scoped, tag = 'input window, operand 1']
    #allocation6 [shape = 's32[2]{0}', space=sflag, size = 0x8, scoped, tag = 'scoped memory for tpu_custom_call.1']
    #allocation7 [shape = 'u8[16384]{0}', space=vmem, size = 0x4000, scoped, tag = 'input window, operand 3, single buffered']
    #allocation8 [shape = 'u8[16384]{0}', space=vmem, size = 0x4000, scoped, tag = 'input window, operand 5, single buffered']
    #allocation9 [shape = 's32[1]{0}', space=sflag, size = 0x4, scoped, tag = 'scoped memory for tpu_custom_call.1']
    #allocation10 [shape = 'u8[4096]{0}', space=vmem, size = 0x1000, scoped, tag = 'input window, operand 7, single buffered']
    #allocation11 [shape = 'u8[65536]{0}', space=vmem, size = 0x10000, scoped, tag = 'output window, operand 0']
    %13 = vsyncpa [#allocation3], 0
    %s14 = scalar_lea.sflag [#allocation3], 1
    %15 = vsyncpa %s14, 0
    %16 = vsyncpa [#allocation6], 0
    %s17 = scalar_lea.sflag [#allocation6], 1
    %18 = vsyncpa %s17, 0
    %19 = vsyncpa [#allocation9], 0
    %20 = vsyncpa [#allocation4], 0
    %s21 = scalar_lea.sflag [#allocation4], 1
    %22 = vsyncpa %s21, 0
    loop: start=0, step=1, limit=6
    $region2: #{tpu_custom_call.1} parent=1 // loop_pre_header
      _
    $region3: #{tpu_custom_call.1} parent=1 // loop_header
      %s24 = sphi 0, %s28
      %p25 = scmp.ge.s32.totalorder %s24, 6
      %s34 = sphi 0, %s36
      %s37 = sphi 0, %s34
      %s38 = sphi 0, %s37
      %s54 = sphi 0, %s38
      %s60 = sphi 0, %s62
      %s63 = sphi 0, %s60
      %s64 = sphi 0, %s63
      %s80 = sphi 0, %s64
      %s84 = sphi 0, %s84
      %s86 = sphi 0, %s84
      %s87 = sphi 0, %s86
      %s101 = sphi 0, %s87
      %s105 = sphi 0, %s105
      %s107 = sphi 0, %s105
      %s108 = sphi 0, %s107
      %s122 = sphi 0, %s108
      %s126 = sphi 0, %s126
      %s128 = sphi 0, %s126
      %s129 = sphi 0, %s128
      %s143 = sphi 0, %s129
      %s147 = sphi 0, %s147
      %s149 = sphi 0, %s147
      %s150 = sphi 0, %s149
      %s164 = sphi 0, %s150
      %s168 = sphi 0, %s168
      %s170 = sphi 0, %s168
      %s171 = sphi 0, %s170
      %s185 = sphi 0, %s171
      %s189 = sphi 0, %s189
      %s191 = sphi 0, %s189
      %s192 = sphi 0, %s191
      %s206 = sphi 0, %s192
      %s212 = sphi 0, %s214
      %s215 = sphi 0, %s212
      %s216 = sphi 0, %s215
      %s232 = sphi 0, %s216
    $region4: #{tpu_custom_call.1} parent=1 // loop_header_branch
      %27 = sbr.rel (%p25) target = $region8
    $region5: #{tpu_custom_call.1} parent=1 // loop_body
      %s29 = ssub.s32 %s24, 1
      %s30 = ssub.s32 %s24, 2
      %s31 = sadd.s32 %s24, 1
      %s32 = ssub.s32 %s24, %s31
      %p33 = scmp.eq.s32.totalorder %s32, 0
      %s35 = sadd.s32 %s34, 1
      %s36 = scalar_select %p33, %s34, %s35
      %p39 = pneg %p33
      %p40 = scmp.eq.s32.totalorder %s24, 3
      %p41 = por %p39, %p40
      %p42 = scmp.ne.s32.totalorder %s34, %s37
      %p43 = scmp.eq.s32.totalorder %s24, 0
      %p44 = por %p42, %p43
      %p45 = scmp.ne.s32.totalorder %s34, %s37
      %p46 = scmp.eq.s32.totalorder %s29, 3
      %p47 = por %p45, %p46
      %p48 = scmp.ne.s32.totalorder %s37, %s38
      %p49 = scmp.eq.s32.totalorder %s29, 0
      %p50 = por %p48, %p49
      %p51 = scmp.ne.s32.totalorder %s37, %s38
      %p52 = scmp.eq.s32.totalorder %s30, 3
      %p53 = por %p51, %p52
      %p55 = scmp.ne.s32.totalorder %s38, %s54
      %p56 = scmp.eq.s32.totalorder %s30, 0
      %p57 = por %p55, %p56
      %s58 = ssub.s32 %s24, %s31
      %p59 = scmp.eq.s32.totalorder %s58, 0
      %s61 = sadd.s32 %s60, 1
      %s62 = scalar_select %p59, %s60, %s61
      %p65 = pneg %p59
      %p66 = scmp.eq.s32.totalorder %s24, 3
      %p67 = por %p65, %p66
      %p68 = scmp.ne.s32.totalorder %s60, %s63
      %p69 = scmp.eq.s32.totalorder %s24, 0
      %p70 = por %p68, %p69
      %p71 = scmp.ne.s32.totalorder %s60, %s63
      %p72 = scmp.eq.s32.totalorder %s29, 3
      %p73 = por %p71, %p72
      %p74 = scmp.ne.s32.totalorder %s63, %s64
      %p75 = scmp.eq.s32.totalorder %s29, 0
      %p76 = por %p74, %p75
      %p77 = scmp.ne.s32.totalorder %s63, %s64
      %p78 = scmp.eq.s32.totalorder %s30, 3
      %p79 = por %p77, %p78
      %p81 = scmp.ne.s32.totalorder %s64, %s80
      %p82 = scmp.eq.s32.totalorder %s30, 0
      %p83 = por %p81, %p82
      %s85 = sadd.s32 %s84, 1
      %p88 = scmp.eq.s32.totalorder %s24, 3
      %p89 = scmp.ne.s32.totalorder %s84, %s86
      %p90 = scmp.eq.s32.totalorder %s24, 0
      %p91 = por %p89, %p90
      %p92 = scmp.ne.s32.totalorder %s84, %s86
      %p93 = scmp.eq.s32.totalorder %s29, 3
      %p94 = por %p92, %p93
      %p95 = scmp.ne.s32.totalorder %s86, %s87
      %p96 = scmp.eq.s32.totalorder %s29, 0
      %p97 = por %p95, %p96
      %p98 = scmp.ne.s32.totalorder %s86, %s87
      %p99 = scmp.eq.s32.totalorder %s30, 3
      %p100 = por %p98, %p99
      %p102 = scmp.ne.s32.totalorder %s87, %s101
      %p103 = scmp.eq.s32.totalorder %s30, 0
      %p104 = por %p102, %p103
      %s106 = sadd.s32 %s105, 1
      %p109 = scmp.eq.s32.totalorder %s24, 3
      %p110 = scmp.ne.s32.totalorder %s105, %s107
      %p111 = scmp.eq.s32.totalorder %s24, 0
      %p112 = por %p110, %p111
      %p113 = scmp.ne.s32.totalorder %s105, %s107
      %p114 = scmp.eq.s32.totalorder %s29, 3
      %p115 = por %p113, %p114
      %p116 = scmp.ne.s32.totalorder %s107, %s108
      %p117 = scmp.eq.s32.totalorder %s29, 0
      %p118 = por %p116, %p117
      %p119 = scmp.ne.s32.totalorder %s107, %s108
      %p120 = scmp.eq.s32.totalorder %s30, 3
      %p121 = por %p119, %p120
      %p123 = scmp.ne.s32.totalorder %s108, %s122
      %p124 = scmp.eq.s32.totalorder %s30, 0
      %p125 = por %p123, %p124
      %s127 = sadd.s32 %s126, 1
      %p130 = scmp.eq.s32.totalorder %s24, 3
      %p131 = scmp.ne.s32.totalorder %s126, %s128
      %p132 = scmp.eq.s32.totalorder %s24, 0
      %p133 = por %p131, %p132
      %p134 = scmp.ne.s32.totalorder %s126, %s128
      %p135 = scmp.eq.s32.totalorder %s29, 3
      %p136 = por %p134, %p135
      %p137 = scmp.ne.s32.totalorder %s128, %s129
      %p138 = scmp.eq.s32.totalorder %s29, 0
      %p139 = por %p137, %p138
      %p140 = scmp.ne.s32.totalorder %s128, %s129
      %p141 = scmp.eq.s32.totalorder %s30, 3
      %p142 = por %p140, %p141
      %p144 = scmp.ne.s32.totalorder %s129, %s143
      %p145 = scmp.eq.s32.totalorder %s30, 0
      %p146 = por %p144, %p145
      %s148 = sadd.s32 %s147, 1
      %p151 = scmp.eq.s32.totalorder %s24, 3
      %p152 = scmp.ne.s32.totalorder %s147, %s149
      %p153 = scmp.eq.s32.totalorder %s24, 0
      %p154 = por %p152, %p153
      %p155 = scmp.ne.s32.totalorder %s147, %s149
      %p156 = scmp.eq.s32.totalorder %s29, 3
      %p157 = por %p155, %p156
      %p158 = scmp.ne.s32.totalorder %s149, %s150
      %p159 = scmp.eq.s32.totalorder %s29, 0
      %p160 = por %p158, %p159
      %p161 = scmp.ne.s32.totalorder %s149, %s150
      %p162 = scmp.eq.s32.totalorder %s30, 3
      %p163 = por %p161, %p162
      %p165 = scmp.ne.s32.totalorder %s150, %s164
      %p166 = scmp.eq.s32.totalorder %s30, 0
      %p167 = por %p165, %p166
      %s169 = sadd.s32 %s168, 1
      %p172 = scmp.eq.s32.totalorder %s24, 3
      %p173 = scmp.ne.s32.totalorder %s168, %s170
      %p174 = scmp.eq.s32.totalorder %s24, 0
      %p175 = por %p173, %p174
      %p176 = scmp.ne.s32.totalorder %s168, %s170
      %p177 = scmp.eq.s32.totalorder %s29, 3
      %p178 = por %p176, %p177
      %p179 = scmp.ne.s32.totalorder %s170, %s171
      %p180 = scmp.eq.s32.totalorder %s29, 0
      %p181 = por %p179, %p180
      %p182 = scmp.ne.s32.totalorder %s170, %s171
      %p183 = scmp.eq.s32.totalorder %s30, 3
      %p184 = por %p182, %p183
      %p186 = scmp.ne.s32.totalorder %s171, %s185
      %p187 = scmp.eq.s32.totalorder %s30, 0
      %p188 = por %p186, %p187
      %s190 = sadd.s32 %s189, 1
      %p193 = scmp.eq.s32.totalorder %s24, 3
      %p194 = scmp.ne.s32.totalorder %s189, %s191
      %p195 = scmp.eq.s32.totalorder %s24, 0
      %p196 = por %p194, %p195
      %p197 = scmp.ne.s32.totalorder %s189, %s191
      %p198 = scmp.eq.s32.totalorder %s29, 3
      %p199 = por %p197, %p198
      %p200 = scmp.ne.s32.totalorder %s191, %s192
      %p201 = scmp.eq.s32.totalorder %s29, 0
      %p202 = por %p200, %p201
      %p203 = scmp.ne.s32.totalorder %s191, %s192
      %p204 = scmp.eq.s32.totalorder %s30, 3
      %p205 = por %p203, %p204
      %p207 = scmp.ne.s32.totalorder %s192, %s206
      %p208 = scmp.eq.s32.totalorder %s30, 0
      %p209 = por %p207, %p208
      %s210 = ssub.s32 %s24, %s31
      %p211 = scmp.eq.s32.totalorder %s210, 0
      %s213 = sadd.s32 %s212, 1
      %s214 = scalar_select %p211, %s212, %s213
      %p217 = pneg %p211
      %p218 = scmp.eq.s32.totalorder %s24, 3
      %p219 = por %p217, %p218
      %p220 = scmp.ne.s32.totalorder %s212, %s215
      %p221 = scmp.eq.s32.totalorder %s24, 0
      %p222 = por %p220, %p221
      %p223 = scmp.ne.s32.totalorder %s212, %s215
      %p224 = scmp.eq.s32.totalorder %s29, 3
      %p225 = por %p223, %p224
      %p226 = scmp.ne.s32.totalorder %s215, %s216
      %p227 = scmp.eq.s32.totalorder %s29, 0
      %p228 = por %p226, %p227
      %p229 = scmp.ne.s32.totalorder %s215, %s216
      %p230 = scmp.eq.s32.totalorder %s30, 3
      %p231 = por %p229, %p230
      %p233 = scmp.ne.s32.totalorder %s216, %s232
      %p234 = scmp.eq.s32.totalorder %s30, 0
      %p235 = por %p233, %p234
      %p236 = scmp.le.s32.totalorder 1, %s24
      %p237 = scmp.lt.s32.totalorder %s24, 5
      %p238 = pnand %p236, %p237
      %p239 = pneg %p238
      // Predicated region
      $region9: #{tpu_custom_call.1} parent=5 // pred_check
        _
      $region10: #{tpu_custom_call.1} parent=5 // pred_check_branch
        %241 = sbr.rel (%p238) target = $region12
      $region11: #{tpu_custom_call.1} parent=5 // pred_region
        %s242 = ssub.s32 %s24, 1
        // Predicated region
        $region13: #{tpu_custom_call.1} parent=11 // pred_check
          %p243 = pneg %p97
        $region14: #{tpu_custom_call.1} parent=11 // pred_check_branch
          %245 = sbr.rel (%p243) target = $region16
        $region15: #{tpu_custom_call.1} parent=11 // pred_region
          _
        $region16: #{tpu_custom_call.1} parent=11 // pred_fallthru
          _
        // Predicated region
        $region17: #{tpu_custom_call.1} parent=11 // pred_check
          %p246 = pneg %p118
        $region18: #{tpu_custom_call.1} parent=11 // pred_check_branch
          %248 = sbr.rel (%p246) target = $region20
        $region19: #{tpu_custom_call.1} parent=11 // pred_region
          %250 = vsyncadd [#allocation6], 0
          %s251 = sshll.u32 %s3, 4
          %s252 = int_to_ptr.hbm [resolvable:$true] %s251
          %s253 = sshll.u32 [#allocation7], 4
          %s254 = int_to_ptr.vmem [resolvable:$true] %s253
          %259 = dma.hbm_to_vmem [thread:$0]  %s252, 512, %s254, [#allocation6], 128, 128, 8
        $region20: #{tpu_custom_call.1} parent=11 // pred_fallthru
          _
        // Predicated region
        $region21: #{tpu_custom_call.1} parent=11 // pred_check
          %p260 = pneg %p139
        $region22: #{tpu_custom_call.1} parent=11 // pred_check_branch
          %262 = sbr.rel (%p260) target = $region24
        $region23: #{tpu_custom_call.1} parent=11 // pred_region
          _
        $region24: #{tpu_custom_call.1} parent=11 // pred_fallthru
          _
        // Predicated region
        $region25: #{tpu_custom_call.1} parent=11 // pred_check
          %p263 = pneg %p160
        $region26: #{tpu_custom_call.1} parent=11 // pred_check_branch
          %265 = sbr.rel (%p263) target = $region28
        $region27: #{tpu_custom_call.1} parent=11 // pred_region
          %267 = vsyncadd [#allocation9], 0
          %s268 = sshll.u32 %s5, 4
          %s269 = int_to_ptr.hbm [resolvable:$true] %s268
          %s270 = sshll.u32 [#allocation8], 4
          %s271 = int_to_ptr.vmem [resolvable:$true] %s270
          %276 = dma.hbm_to_vmem [thread:$0]  %s269, 512, %s271, [#allocation9], 128, 128, 8
        $region28: #{tpu_custom_call.1} parent=11 // pred_fallthru
          _
        // Predicated region
        $region29: #{tpu_custom_call.1} parent=11 // pred_check
          %p277 = pneg %p181
        $region30: #{tpu_custom_call.1} parent=11 // pred_check_branch
          %279 = sbr.rel (%p277) target = $region32
        $region31: #{tpu_custom_call.1} parent=11 // pred_region
          _
        $region32: #{tpu_custom_call.1} parent=11 // pred_fallthru
          _
        // Predicated region
        $region33: #{tpu_custom_call.1} parent=11 // pred_check
          %p280 = pneg %p202
        $region34: #{tpu_custom_call.1} parent=11 // pred_check_branch
          %282 = sbr.rel (%p280) target = $region36
        $region35: #{tpu_custom_call.1} parent=11 // pred_region
          %284 = vsyncadd [#allocation9], 0
          %s286 = sshll.u32 %s7, 4
          %s287 = int_to_ptr.hbm [resolvable:$true] %s286
          %s288 = sshll.u32 [#allocation10], 4
          %s289 = int_to_ptr.vmem [resolvable:$true] %s288
          %291 = dma.hbm_to_vmem [thread:$0]  %s287, 128, %s289, [#allocation9]
        $region36: #{tpu_custom_call.1} parent=11 // pred_fallthru
          _
      $region12: #{tpu_custom_call.1} parent=5 // pred_fallthru
        _
      %p292 = scmp.lt.s32.totalorder %s24, 4
      // Predicated region
      $region37: #{tpu_custom_call.1} parent=5 // pred_check
        %p293 = pneg %p292
      $region38: #{tpu_custom_call.1} parent=5 // pred_check_branch
        %295 = sbr.rel (%p293) target = $region40
      $region39: #{tpu_custom_call.1} parent=5 // pred_region
        // Predicated region
        $region41: #{tpu_custom_call.1} parent=39 // pred_check
          %p296 = pneg %p44
        $region42: #{tpu_custom_call.1} parent=39 // pred_check_branch
          %298 = sbr.rel (%p296) target = $region44
        $region43: #{tpu_custom_call.1} parent=39 // pred_region
          %s299 = sand.u32 %s34, 1
          %s300 = scalar_lea.sflag [#allocation3], %s299
          %s301 = sand.u32 %s34, 1
          %s302 = smul.addr %s301, 64
          %s303 = scalar_lea.vmem [#allocation2], %s302
          %s304 = smul.u32 8, %s24
          %306 = vsyncadd %s300, 0
          %s307 = smul.addr %s304, 8
          %s308 = scalar_lea.hbm %s0, %s307
          %s309 = sshll.u32 %s308, 4
          %s310 = int_to_ptr.hbm [resolvable:$true] %s309
          %s311 = sshll.u32 %s303, 4
          %s312 = int_to_ptr.vmem [resolvable:$true] %s311
          %317 = dma.hbm_to_vmem [thread:$0]  %s310, 1024, %s312, %s300, 128, 128, 8
        $region44: #{tpu_custom_call.1} parent=39 // pred_fallthru
          _
        // Predicated region
        $region45: #{tpu_custom_call.1} parent=39 // pred_check
          %p318 = pneg %p70
        $region46: #{tpu_custom_call.1} parent=39 // pred_check_branch
          %320 = sbr.rel (%p318) target = $region48
        $region47: #{tpu_custom_call.1} parent=39 // pred_region
          %s321 = sand.u32 %s24, 1
          %s322 = scalar_lea.sflag [#allocation6], %s321
          %s323 = sand.u32 %s60, 1
          %s324 = smul.addr %s323, 128
          %s325 = scalar_lea.vmem [#allocation5], %s324
          %s326 = smul.u32 8, %s24
          %328 = vsyncadd %s322, 0
          %s329 = smul.addr %s326, 2
          %s330 = smul.addr %s329, 8
          %s331 = scalar_lea.hbm %s1, %s330
          %s332 = sshll.u32 %s331, 4
          %s333 = int_to_ptr.hbm [resolvable:$true] %s332
          %s334 = sshll.u32 %s325, 4
          %s335 = int_to_ptr.vmem [resolvable:$true] %s334
          %340 = dma.hbm_to_vmem [thread:$0]  %s333, 2048, %s335, %s322, 128, 128, 8
        $region48: #{tpu_custom_call.1} parent=39 // pred_fallthru
          _
      $region40: #{tpu_custom_call.1} parent=5 // pred_fallthru
        _
      %p341 = scmp.le.s32.totalorder 1, %s24
      %p342 = scmp.lt.s32.totalorder %s24, 5
      %p343 = pnand %p341, %p342
      %p344 = pneg %p343
      // Predicated region
      $region49: #{tpu_custom_call.1} parent=5 // pred_check
        _
      $region50: #{tpu_custom_call.1} parent=5 // pred_check_branch
        %346 = sbr.rel (%p343) target = $region52
      $region51: #{tpu_custom_call.1} parent=5 // pred_region
        %s347 = ssub.s32 %s24, 1
        %s348 = sand.u32 %s37, 1
        %s349 = scalar_lea.sflag [#allocation3], %s348
        %s350 = sand.u32 %s37, 1
        %s351 = smul.addr %s350, 64
        %s352 = scalar_lea.vmem [#allocation2], %s351
        // Predicated region
        $region53: #{tpu_custom_call.1} parent=51 // pred_check
          %p353 = pneg %p50
        $region54: #{tpu_custom_call.1} parent=51 // pred_check_branch
          %355 = sbr.rel (%p353) target = $region56
        $region55: #{tpu_custom_call.1} parent=51 // pred_region
          %357 = dma.done %s349, 1024
        $region56: #{tpu_custom_call.1} parent=51 // pred_fallthru
          _
        %s358 = sand.u32 %s29, 1
        %s359 = scalar_lea.sflag [#allocation6], %s358
        %s360 = sand.u32 %s63, 1
        %s361 = smul.addr %s360, 128
        %s362 = scalar_lea.vmem [#allocation5], %s361
        // Predicated region
        $region57: #{tpu_custom_call.1} parent=51 // pred_check
          %p363 = pneg %p76
        $region58: #{tpu_custom_call.1} parent=51 // pred_check_branch
          %365 = sbr.rel (%p363) target = $region60
        $region59: #{tpu_custom_call.1} parent=51 // pred_region
          %367 = dma.done %s359, 2048
        $region60: #{tpu_custom_call.1} parent=51 // pred_fallthru
          _
        // Predicated region
        $region61: #{tpu_custom_call.1} parent=51 // pred_check
          %p368 = pneg %p118
        $region62: #{tpu_custom_call.1} parent=51 // pred_check_branch
          %370 = sbr.rel (%p368) target = $region64
        $region63: #{tpu_custom_call.1} parent=51 // pred_region
          %372 = dma.done [#allocation6], 512
        $region64: #{tpu_custom_call.1} parent=51 // pred_fallthru
          _
        // Predicated region
        $region65: #{tpu_custom_call.1} parent=51 // pred_check
          %p373 = pneg %p160
        $region66: #{tpu_custom_call.1} parent=51 // pred_check_branch
          %375 = sbr.rel (%p373) target = $region68
        $region67: #{tpu_custom_call.1} parent=51 // pred_region
          %377 = dma.done [#allocation9], 512
        $region68: #{tpu_custom_call.1} parent=51 // pred_fallthru
          _
        // Predicated region
        $region69: #{tpu_custom_call.1} parent=51 // pred_check
          %p378 = pneg %p202
        $region70: #{tpu_custom_call.1} parent=51 // pred_check_branch
          %380 = sbr.rel (%p378) target = $region72
        $region71: #{tpu_custom_call.1} parent=51 // pred_region
          %382 = dma.done [#allocation9], 128
        $region72: #{tpu_custom_call.1} parent=51 // pred_fallthru
          _
        %s383 = sand.u32 %s37, 1
        %s384 = scalar_lea.sflag [#allocation3], %s383
        %s385 = sand.u32 %s37, 1
        %s386 = smul.addr %s385, 64
        %s387 = scalar_lea.vmem [#allocation2], %s386
        %p388 = pneg %p50
        %p389 = pneg %p47
        %s390 = sand.u32 %s29, 1
        %s391 = scalar_lea.sflag [#allocation6], %s390
        %s392 = sand.u32 %s63, 1
        %s393 = smul.addr %s392, 128
        %s394 = scalar_lea.vmem [#allocation5], %s393
        %p395 = pneg %p76
        %p396 = pneg %p73
        %p397 = pneg %p97
        %p398 = pneg %p94
        %p399 = pneg %p118
        %p400 = pneg %p115
        %p401 = pneg %p139
        %p402 = pneg %p136
        %p403 = pneg %p160
        %p404 = pneg %p157
        %p405 = pneg %p181
        %p406 = pneg %p178
        %p407 = pneg %p202
        %p408 = pneg %p199
        %p409 = pneg %p228
        %p410 = pneg %p225
        %s411 = sand.u32 %s215, 1
        %s412 = scalar_lea.sflag [#allocation4], %s411
        %s413 = sand.u32 %s215, 1
        %s414 = smul.addr %s413, 64
        %s415 = scalar_lea.vmem [#allocation11], %s414
        %s416 = smul.u32 8, %s29
        %s417 = smul.u32 8, %s29
        %s418 = smul.u32 8, %s29
        %v419 = vld [vmem:[%s352] sm:$0xff]
        %v420 = vld [vmem:[%s352 + $0x8] sm:$0xff]
        %v421 = vld [vmem:[%s352 + $0x10] sm:$0xff]
        %v422 = vld [vmem:[%s352 + $0x18] sm:$0xff]
        %v423 = vld [vmem:[%s352 + $0x20] sm:$0xff]
        %v424 = vld [vmem:[%s352 + $0x28] sm:$0xff]
        %v425 = vld [vmem:[%s352 + $0x30] sm:$0xff]
        %v426 = vld [vmem:[%s352 + $0x38] sm:$0xff]
        %v427 = vld [vmem:[%s362] sm:$0xff]
        %v428 = vld [vmem:[%s362 + $0x8] sm:$0xff]
        %v429 = vld [vmem:[%s362 + $0x10] sm:$0xff]
        %v430 = vld [vmem:[%s362 + $0x18] sm:$0xff]
        %v431 = vld [vmem:[%s362 + $0x20] sm:$0xff]
        %v432 = vld [vmem:[%s362 + $0x28] sm:$0xff]
        %v433 = vld [vmem:[%s362 + $0x30] sm:$0xff]
        %v434 = vld [vmem:[%s362 + $0x38] sm:$0xff]
        %v435 = vld [vmem:[%s362 + $0x40] sm:$0xff]
        %v436 = vld [vmem:[%s362 + $0x48] sm:$0xff]
        %v437 = vld [vmem:[%s362 + $0x50] sm:$0xff]
        %v438 = vld [vmem:[%s362 + $0x58] sm:$0xff]
        %v439 = vld [vmem:[%s362 + $0x60] sm:$0xff]
        %v440 = vld [vmem:[%s362 + $0x68] sm:$0xff]
        %v441 = vld [vmem:[%s362 + $0x70] sm:$0xff]
        %v442 = vld [vmem:[%s362 + $0x78] sm:$0xff]
        %v443 = vlaneseq
        %v444 = vshrl.u32 %v443, 7
        %v445 = vlaneseq
        %v446 = vand.u32 %v445, 127
        %vm447 = vcmp.gt.s32.totalorder %v446, %v444
        %v448 = vsel %vm447, -1e+09, 0.0
        %v449 = vld [vmem:[%s2] sm:$0xff]
        %v450 = vld [vmem:[%s2 + $0x8] sm:$0xff]
        %v451 = vld [vmem:[%s2 + $0x10] sm:$0xff]
        %v452 = vld [vmem:[%s2 + $0x18] sm:$0xff]
        %v453 = vld [vmem:[#allocation10] sm:$0x1]
        %v454 = vperm.slane %v453, 0
        %vm455 = vcmask 261120
        %v457 = vsel %vm455, %v419, 0
        %v460 = vsel %vm455, %v420, 0
        %v463 = vsel %vm455, %v421, 0
        %v466 = vsel %vm455, %v422, 0
        %v469 = vsel %vm455, %v423, 0
        %v472 = vsel %vm455, %v424, 0
        %v475 = vsel %vm455, %v425, 0
        %v478 = vsel %vm455, %v426, 0
        %480 = vmatpush.msra.mxu0 0.0
        %481 = vmatpush.msra.mxu0 0.0
        %482 = vmatpush.msra.mxu0 0.0
        %483 = vmatpush.msra.mxu0 0.0
        %484 = vmatpush.msra.mxu0 0.0
        %485 = vmatpush.msra.mxu0 0.0
        %486 = vmatpush.msra.mxu0 0.0
        %487 = vmatpush.msra.mxu0 0.0
        %488 = vmatpush.msra.mxu0 0.0
        %489 = vmatpush.msra.mxu0 0.0
        %490 = vmatpush.msra.mxu0 0.0
        %491 = vmatpush.msra.mxu0 0.0
        %492 = vmatpush.msra.mxu0 %v452
        %493 = vmatpush.msra.mxu0 %v451
        %494 = vmatpush.msra.mxu0 %v450
        %495 = vmatpush.msra.mxu0 %v449
        %496 = vmatmul.f32.gmra.mxu0 %v457
        %v497 = vpop.f32.mrf.mxu0
        %v498 = vadd.f32 %v454, %v497
        %499 = vmatmul.f32.gmra.mxu0 %v460
        %v500 = vpop.f32.mrf.mxu0
        %v501 = vadd.f32 %v454, %v500
        %502 = vmatmul.f32.gmra.mxu0 %v463
        %v503 = vpop.f32.mrf.mxu0
        %v504 = vadd.f32 %v454, %v503
        %505 = vmatmul.f32.gmra.mxu0 %v466
        %v506 = vpop.f32.mrf.mxu0
        %v507 = vadd.f32 %v454, %v506
        %508 = vmatmul.f32.gmra.mxu0 %v469
        %v509 = vpop.f32.mrf.mxu0
        %v510 = vadd.f32 %v454, %v509
        %511 = vmatmul.f32.gmra.mxu0 %v472
        %v512 = vpop.f32.mrf.mxu0
        %v513 = vadd.f32 %v454, %v512
        %514 = vmatmul.f32.gmra.mxu0 %v475
        %v515 = vpop.f32.mrf.mxu0
        %v516 = vadd.f32 %v454, %v515
        %517 = vmatmul.f32.gmra.mxu0 %v478
        %v518 = vpop.f32.mrf.mxu0
        %v519 = vadd.f32 %v454, %v518
        %520 = vdwg.mxu0
        %522 = vrot.lane.b32.xlu0 %v498, 96
        %v523 = vpop.permute.xlu0 %522
        %vm524 = vcmask 64512
        %v525 = vsel %vm524, %v498, 0
        %v527 = vsel %vm524, %v523, 0
        %529 = vmatpush.xpose.msra.mxu0 0.0
        %530 = vmatpush.xpose.msra.mxu0 0.0
        %531 = vmatpush.xpose.msra.mxu0 0.0
        %532 = vmatpush.xpose.msra.mxu0 0.0
        %533 = vmatpush.xpose.msra.mxu0 0.0
        %534 = vmatpush.xpose.msra.mxu0 0.0
        %535 = vmatpush.xpose.msra.mxu0 0.0
        %536 = vmatpush.xpose.msra.mxu0 0.0
        %537 = vmatpush.xpose.msra.mxu0 0.0
        %538 = vmatpush.xpose.msra.mxu0 0.0
        %539 = vmatpush.xpose.msra.mxu0 0.0
        %540 = vmatpush.xpose.msra.mxu0 0.0
        %541 = vmatpush.xpose.msra.mxu0 0.0
        %542 = vmatpush.xpose.msra.mxu0 0.0
        %543 = vmatpush.xpose.msra.mxu0 0.0
        %544 = vmatpush.xpose.msra.mxu0 %v527
        %545 = vmatmul.f32.gmra.mxu0 %v525
        %v546 = vpop.f32.mrf.mxu0
        %v547 = vadd.f32 %v448, %v546
        %548 = vdwg.mxu0
        %550 = vrot.lane.b32.xlu0 %v501, 96
        %v551 = vpop.permute.xlu0 %550
        %v552 = vsel %vm524, %v501, 0
        %v554 = vsel %vm524, %v551, 0
        %556 = vmatpush.xpose.msra.mxu0 0.0
        %557 = vmatpush.xpose.msra.mxu0 0.0
        %558 = vmatpush.xpose.msra.mxu0 0.0
        %559 = vmatpush.xpose.msra.mxu0 0.0
        %560 = vmatpush.xpose.msra.mxu0 0.0
        %561 = vmatpush.xpose.msra.mxu0 0.0
        %562 = vmatpush.xpose.msra.mxu0 0.0
        %563 = vmatpush.xpose.msra.mxu0 0.0
        %564 = vmatpush.xpose.msra.mxu0 0.0
        %565 = vmatpush.xpose.msra.mxu0 0.0
        %566 = vmatpush.xpose.msra.mxu0 0.0
        %567 = vmatpush.xpose.msra.mxu0 0.0
        %568 = vmatpush.xpose.msra.mxu0 0.0
        %569 = vmatpush.xpose.msra.mxu0 0.0
        %570 = vmatpush.xpose.msra.mxu0 0.0
        %571 = vmatpush.xpose.msra.mxu0 %v554
        %572 = vmatmul.f32.gmra.mxu0 %v552
        %v573 = vpop.f32.mrf.mxu0
        %v574 = vadd.f32 %v448, %v573
        %575 = vdwg.mxu0
        %577 = vrot.lane.b32.xlu0 %v504, 96
        %v578 = vpop.permute.xlu0 %577
        %v579 = vsel %vm524, %v504, 0
        %v581 = vsel %vm524, %v578, 0
        %583 = vmatpush.xpose.msra.mxu0 0.0
        %584 = vmatpush.xpose.msra.mxu0 0.0
        %585 = vmatpush.xpose.msra.mxu0 0.0
        %586 = vmatpush.xpose.msra.mxu0 0.0
        %587 = vmatpush.xpose.msra.mxu0 0.0
        %588 = vmatpush.xpose.msra.mxu0 0.0
        %589 = vmatpush.xpose.msra.mxu0 0.0
        %590 = vmatpush.xpose.msra.mxu0 0.0
        %591 = vmatpush.xpose.msra.mxu0 0.0
        %592 = vmatpush.xpose.msra.mxu0 0.0
        %593 = vmatpush.xpose.msra.mxu0 0.0
        %594 = vmatpush.xpose.msra.mxu0 0.0
        %595 = vmatpush.xpose.msra.mxu0 0.0
        %596 = vmatpush.xpose.msra.mxu0 0.0
        %597 = vmatpush.xpose.msra.mxu0 0.0
        %598 = vmatpush.xpose.msra.mxu0 %v581
        %599 = vmatmul.f32.gmra.mxu0 %v579
        %v600 = vpop.f32.mrf.mxu0
        %v601 = vadd.f32 %v448, %v600
        %602 = vdwg.mxu0
        %604 = vrot.lane.b32.xlu0 %v507, 96
        %v605 = vpop.permute.xlu0 %604
        %v606 = vsel %vm524, %v507, 0
        %v608 = vsel %vm524, %v605, 0
        %610 = vmatpush.xpose.msra.mxu0 0.0
        %611 = vmatpush.xpose.msra.mxu0 0.0
        %612 = vmatpush.xpose.msra.mxu0 0.0
        %613 = vmatpush.xpose.msra.mxu0 0.0
        %614 = vmatpush.xpose.msra.mxu0 0.0
        %615 = vmatpush.xpose.msra.mxu0 0.0
        %616 = vmatpush.xpose.msra.mxu0 0.0
        %617 = vmatpush.xpose.msra.mxu0 0.0
        %618 = vmatpush.xpose.msra.mxu0 0.0
        %619 = vmatpush.xpose.msra.mxu0 0.0
        %620 = vmatpush.xpose.msra.mxu0 0.0
        %621 = vmatpush.xpose.msra.mxu0 0.0
        %622 = vmatpush.xpose.msra.mxu0 0.0
        %623 = vmatpush.xpose.msra.mxu0 0.0
        %624 = vmatpush.xpose.msra.mxu0 0.0
        %625 = vmatpush.xpose.msra.mxu0 %v608
        %626 = vmatmul.f32.gmra.mxu0 %v606
        %v627 = vpop.f32.mrf.mxu0
        %v628 = vadd.f32 %v448, %v627
        %629 = vdwg.mxu0
        %631 = vrot.lane.b32.xlu0 %v510, 96
        %v632 = vpop.permute.xlu0 %631
        %v633 = vsel %vm524, %v510, 0
        %v635 = vsel %vm524, %v632, 0
        %637 = vmatpush.xpose.msra.mxu0 0.0
        %638 = vmatpush.xpose.msra.mxu0 0.0
        %639 = vmatpush.xpose.msra.mxu0 0.0
        %640 = vmatpush.xpose.msra.mxu0 0.0
        %641 = vmatpush.xpose.msra.mxu0 0.0
        %642 = vmatpush.xpose.msra.mxu0 0.0
        %643 = vmatpush.xpose.msra.mxu0 0.0
        %644 = vmatpush.xpose.msra.mxu0 0.0
        %645 = vmatpush.xpose.msra.mxu0 0.0
        %646 = vmatpush.xpose.msra.mxu0 0.0
        %647 = vmatpush.xpose.msra.mxu0 0.0
        %648 = vmatpush.xpose.msra.mxu0 0.0
        %649 = vmatpush.xpose.msra.mxu0 0.0
        %650 = vmatpush.xpose.msra.mxu0 0.0
        %651 = vmatpush.xpose.msra.mxu0 0.0
        %652 = vmatpush.xpose.msra.mxu0 %v635
        %653 = vmatmul.f32.gmra.mxu0 %v633
        %v654 = vpop.f32.mrf.mxu0
        %v655 = vadd.f32 %v448, %v654
        %656 = vdwg.mxu0
        %658 = vrot.lane.b32.xlu0 %v513, 96
        %v659 = vpop.permute.xlu0 %658
        %v660 = vsel %vm524, %v513, 0
        %v662 = vsel %vm524, %v659, 0
        %664 = vmatpush.xpose.msra.mxu0 0.0
        %665 = vmatpush.xpose.msra.mxu0 0.0
        %666 = vmatpush.xpose.msra.mxu0 0.0
        %667 = vmatpush.xpose.msra.mxu0 0.0
        %668 = vmatpush.xpose.msra.mxu0 0.0
        %669 = vmatpush.xpose.msra.mxu0 0.0
        %670 = vmatpush.xpose.msra.mxu0 0.0
        %671 = vmatpush.xpose.msra.mxu0 0.0
        %672 = vmatpush.xpose.msra.mxu0 0.0
        %673 = vmatpush.xpose.msra.mxu0 0.0
        %674 = vmatpush.xpose.msra.mxu0 0.0
        %675 = vmatpush.xpose.msra.mxu0 0.0
        %676 = vmatpush.xpose.msra.mxu0 0.0
        %677 = vmatpush.xpose.msra.mxu0 0.0
        %678 = vmatpush.xpose.msra.mxu0 0.0
        %679 = vmatpush.xpose.msra.mxu0 %v662
        %680 = vmatmul.f32.gmra.mxu0 %v660
        %v681 = vpop.f32.mrf.mxu0
        %v682 = vadd.f32 %v448, %v681
        %683 = vdwg.mxu0
        %685 = vrot.lane.b32.xlu0 %v516, 96
        %v686 = vpop.permute.xlu0 %685
        %v687 = vsel %vm524, %v516, 0
        %v689 = vsel %vm524, %v686, 0
        %691 = vmatpush.xpose.msra.mxu0 0.0
        %692 = vmatpush.xpose.msra.mxu0 0.0
        %693 = vmatpush.xpose.msra.mxu0 0.0
        %694 = vmatpush.xpose.msra.mxu0 0.0
        %695 = vmatpush.xpose.msra.mxu0 0.0
        %696 = vmatpush.xpose.msra.mxu0 0.0
        %697 = vmatpush.xpose.msra.mxu0 0.0
        %698 = vmatpush.xpose.msra.mxu0 0.0
        %699 = vmatpush.xpose.msra.mxu0 0.0
        %700 = vmatpush.xpose.msra.mxu0 0.0
        %701 = vmatpush.xpose.msra.mxu0 0.0
        %702 = vmatpush.xpose.msra.mxu0 0.0
        %703 = vmatpush.xpose.msra.mxu0 0.0
        %704 = vmatpush.xpose.msra.mxu0 0.0
        %705 = vmatpush.xpose.msra.mxu0 0.0
        %706 = vmatpush.xpose.msra.mxu0 %v689
        %707 = vmatmul.f32.gmra.mxu0 %v687
        %v708 = vpop.f32.mrf.mxu0
        %v709 = vadd.f32 %v448, %v708
        %710 = vdwg.mxu0
        %712 = vrot.lane.b32.xlu0 %v519, 96
        %v713 = vpop.permute.xlu0 %712
        %v714 = vsel %vm524, %v519, 0
        %v716 = vsel %vm524, %v713, 0
        %718 = vmatpush.xpose.msra.mxu0 0.0
        %719 = vmatpush.xpose.msra.mxu0 0.0
        %720 = vmatpush.xpose.msra.mxu0 0.0
        %721 = vmatpush.xpose.msra.mxu0 0.0
        %722 = vmatpush.xpose.msra.mxu0 0.0
        %723 = vmatpush.xpose.msra.mxu0 0.0
        %724 = vmatpush.xpose.msra.mxu0 0.0
        %725 = vmatpush.xpose.msra.mxu0 0.0
        %726 = vmatpush.xpose.msra.mxu0 0.0
        %727 = vmatpush.xpose.msra.mxu0 0.0
        %728 = vmatpush.xpose.msra.mxu0 0.0
        %729 = vmatpush.xpose.msra.mxu0 0.0
        %730 = vmatpush.xpose.msra.mxu0 0.0
        %731 = vmatpush.xpose.msra.mxu0 0.0
        %732 = vmatpush.xpose.msra.mxu0 0.0
        %733 = vmatpush.xpose.msra.mxu0 %v716
        %734 = vmatmul.f32.gmra.mxu0 %v714
        %v735 = vpop.f32.mrf.mxu0
        %v736 = vadd.f32 %v448, %v735
        %737 = vdwg.mxu0
        %v738 = vsel %vm524, %v547, -inf
        %739 = vmax.xlane.f32.xlu0 %v738
        %v740 = vpop.xlane.xlu0 %739
        %v741 = vsel %vm524, %v574, -inf
        %742 = vmax.xlane.f32.xlu0 %v741
        %v743 = vpop.xlane.xlu0 %742
        %v744 = vsel %vm524, %v601, -inf
        %745 = vmax.xlane.f32.xlu0 %v744
        %v746 = vpop.xlane.xlu0 %745
        %v747 = vsel %vm524, %v628, -inf
        %748 = vmax.xlane.f32.xlu0 %v747
        %v749 = vpop.xlane.xlu0 %748
        %v750 = vsel %vm524, %v655, -inf
        %751 = vmax.xlane.f32.xlu0 %v750
        %v752 = vpop.xlane.xlu0 %751
        %v753 = vsel %vm524, %v682, -inf
        %754 = vmax.xlane.f32.xlu0 %v753
        %v755 = vpop.xlane.xlu0 %754
        %v756 = vsel %vm524, %v709, -inf
        %757 = vmax.xlane.f32.xlu0 %v756
        %v758 = vpop.xlane.xlu0 %757
        %v759 = vsel %vm524, %v736, -inf
        %760 = vmax.xlane.f32.xlu0 %v759
        %v761 = vpop.xlane.xlu0 %760
        %v762 = vsub.f32 %v547, %v740
        %v763 = vsub.f32 %v574, %v743
        %v764 = vsub.f32 %v601, %v746
        %v765 = vsub.f32 %v628, %v749
        %v766 = vsub.f32 %v655, %v752
        %v767 = vsub.f32 %v682, %v755
        %v768 = vsub.f32 %v709, %v758
        %v769 = vsub.f32 %v736, %v761
        %v770 = vmul.f32 %v762, 1.442695
        %v771 = vpow.pop %v770
        %v772 = vmul.f32 %v763, 1.442695
        %v773 = vpow.pop %v772
        %v774 = vmul.f32 %v764, 1.442695
        %v775 = vpow.pop %v774
        %v776 = vmul.f32 %v765, 1.442695
        %v777 = vpow.pop %v776
        %v778 = vmul.f32 %v766, 1.442695
        %v779 = vpow.pop %v778
        %v780 = vmul.f32 %v767, 1.442695
        %v781 = vpow.pop %v780
        %v782 = vmul.f32 %v768, 1.442695
        %v783 = vpow.pop %v782
        %v784 = vmul.f32 %v769, 1.442695
        %v785 = vpow.pop %v784
        %v786 = vsel %vm524, %v771, 0.0
        %787 = vadd.xlane.f32.xlu0 %v786
        %v788 = vpop.xlane.xlu0 %787
        %v789 = vsel %vm524, %v773, 0.0
        %790 = vadd.xlane.f32.xlu0 %v789
        %v791 = vpop.xlane.xlu0 %790
        %v792 = vsel %vm524, %v775, 0.0
        %793 = vadd.xlane.f32.xlu0 %v792
        %v794 = vpop.xlane.xlu0 %793
        %v795 = vsel %vm524, %v777, 0.0
        %796 = vadd.xlane.f32.xlu0 %v795
        %v797 = vpop.xlane.xlu0 %796
        %v798 = vsel %vm524, %v779, 0.0
        %799 = vadd.xlane.f32.xlu0 %v798
        %v800 = vpop.xlane.xlu0 %799
        %v801 = vsel %vm524, %v781, 0.0
        %802 = vadd.xlane.f32.xlu0 %v801
        %v803 = vpop.xlane.xlu0 %802
        %v804 = vsel %vm524, %v783, 0.0
        %805 = vadd.xlane.f32.xlu0 %v804
        %v806 = vpop.xlane.xlu0 %805
        %v807 = vsel %vm524, %v785, 0.0
        %808 = vadd.xlane.f32.xlu0 %v807
        %v809 = vpop.xlane.xlu0 %808
        %v810 = vrcp.pop %v788
        %v811 = vmul.f32 %v788, %v810
        %v812 = vsub.f32 1.0, %v811
        %v813 = vmul.f32 %v810, %v812
        %v814 = vadd.f32 %v810, %v813
        %vm815 = vweird.f32 %v788
        %vm816 = vweird.f32 %v810
        %vm817 = vmor %vm815, %vm816
        %v818 = vsel %vm817, %v810, %v814
        %v819 = vand.u32 2147483647, %v788
        %vm820 = vcmp.eq.f32.partialorder %v819, 8.507059e+37
        %v821 = vand.u32 %v788, 2147483648
        %v822 = vor.u32 1.1754944e-38, %v821
        %v823 = vsel %vm820, %v822, %v818
        %v824 = vmul.f32 %v771, %v823
        %v825 = vrcp.pop %v791
        %v826 = vmul.f32 %v791, %v825
        %v827 = vsub.f32 1.0, %v826
        %v828 = vmul.f32 %v825, %v827
        %v829 = vadd.f32 %v825, %v828
        %vm830 = vweird.f32 %v791
        %vm831 = vweird.f32 %v825
        %vm832 = vmor %vm830, %vm831
        %v833 = vsel %vm832, %v825, %v829
        %v834 = vand.u32 2147483647, %v791
        %vm835 = vcmp.eq.f32.partialorder %v834, 8.507059e+37
        %v836 = vand.u32 %v791, 2147483648
        %v837 = vor.u32 1.1754944e-38, %v836
        %v838 = vsel %vm835, %v837, %v833
        %v839 = vmul.f32 %v773, %v838
        %v840 = vrcp.pop %v794
        %v841 = vmul.f32 %v794, %v840
        %v842 = vsub.f32 1.0, %v841
        %v843 = vmul.f32 %v840, %v842
        %v844 = vadd.f32 %v840, %v843
        %vm845 = vweird.f32 %v794
        %vm846 = vweird.f32 %v840
        %vm847 = vmor %vm845, %vm846
        %v848 = vsel %vm847, %v840, %v844
        %v849 = vand.u32 2147483647, %v794
        %vm850 = vcmp.eq.f32.partialorder %v849, 8.507059e+37
        %v851 = vand.u32 %v794, 2147483648
        %v852 = vor.u32 1.1754944e-38, %v851
        %v853 = vsel %vm850, %v852, %v848
        %v854 = vmul.f32 %v775, %v853
        %v855 = vrcp.pop %v797
        %v856 = vmul.f32 %v797, %v855
        %v857 = vsub.f32 1.0, %v856
        %v858 = vmul.f32 %v855, %v857
        %v859 = vadd.f32 %v855, %v858
        %vm860 = vweird.f32 %v797
        %vm861 = vweird.f32 %v855
        %vm862 = vmor %vm860, %vm861
        %v863 = vsel %vm862, %v855, %v859
        %v864 = vand.u32 2147483647, %v797
        %vm865 = vcmp.eq.f32.partialorder %v864, 8.507059e+37
        %v866 = vand.u32 %v797, 2147483648
        %v867 = vor.u32 1.1754944e-38, %v866
        %v868 = vsel %vm865, %v867, %v863
        %v869 = vmul.f32 %v777, %v868
        %v870 = vrcp.pop %v800
        %v871 = vmul.f32 %v800, %v870
        %v872 = vsub.f32 1.0, %v871
        %v873 = vmul.f32 %v870, %v872
        %v874 = vadd.f32 %v870, %v873
        %vm875 = vweird.f32 %v800
        %vm876 = vweird.f32 %v870
        %vm877 = vmor %vm875, %vm876
        %v878 = vsel %vm877, %v870, %v874
        %v879 = vand.u32 2147483647, %v800
        %vm880 = vcmp.eq.f32.partialorder %v879, 8.507059e+37
        %v881 = vand.u32 %v800, 2147483648
        %v882 = vor.u32 1.1754944e-38, %v881
        %v883 = vsel %vm880, %v882, %v878
        %v884 = vmul.f32 %v779, %v883
        %v885 = vrcp.pop %v803
        %v886 = vmul.f32 %v803, %v885
        %v887 = vsub.f32 1.0, %v886
        %v888 = vmul.f32 %v885, %v887
        %v889 = vadd.f32 %v885, %v888
        %vm890 = vweird.f32 %v803
        %vm891 = vweird.f32 %v885
        %vm892 = vmor %vm890, %vm891
        %v893 = vsel %vm892, %v885, %v889
        %v894 = vand.u32 2147483647, %v803
        %vm895 = vcmp.eq.f32.partialorder %v894, 8.507059e+37
        %v896 = vand.u32 %v803, 2147483648
        %v897 = vor.u32 1.1754944e-38, %v896
        %v898 = vsel %vm895, %v897, %v893
        %v899 = vmul.f32 %v781, %v898
        %v900 = vrcp.pop %v806
        %v901 = vmul.f32 %v806, %v900
        %v902 = vsub.f32 1.0, %v901
        %v903 = vmul.f32 %v900, %v902
        %v904 = vadd.f32 %v900, %v903
        %vm905 = vweird.f32 %v806
        %vm906 = vweird.f32 %v900
        %vm907 = vmor %vm905, %vm906
        %v908 = vsel %vm907, %v900, %v904
        %v909 = vand.u32 2147483647, %v806
        %vm910 = vcmp.eq.f32.partialorder %v909, 8.507059e+37
        %v911 = vand.u32 %v806, 2147483648
        %v912 = vor.u32 1.1754944e-38, %v911
        %v913 = vsel %vm910, %v912, %v908
        %v914 = vmul.f32 %v783, %v913
        %v915 = vrcp.pop %v809
        %v916 = vmul.f32 %v809, %v915
        %v917 = vsub.f32 1.0, %v916
        %v918 = vmul.f32 %v915, %v917
        %v919 = vadd.f32 %v915, %v918
        %vm920 = vweird.f32 %v809
        %vm921 = vweird.f32 %v915
        %vm922 = vmor %vm920, %vm921
        %v923 = vsel %vm922, %v915, %v919
        %v924 = vand.u32 2147483647, %v809
        %vm925 = vcmp.eq.f32.partialorder %v924, 8.507059e+37
        %v926 = vand.u32 %v809, 2147483648
        %v927 = vor.u32 1.1754944e-38, %v926
        %v928 = vsel %vm925, %v927, %v923
        %v929 = vmul.f32 %v785, %v928
        %930 = vrot.lane.b32.xlu0 %v498, 64
        %v931 = vpop.permute.xlu0 %930
        %v934 = vsel %vm524, %v824, 0
        %936 = vmatpush.msra.mxu0 0.0
        %937 = vmatpush.msra.mxu0 0.0
        %938 = vmatpush.msra.mxu0 0.0
        %939 = vmatpush.msra.mxu0 0.0
        %940 = vmatpush.msra.mxu0 0.0
        %941 = vmatpush.msra.mxu0 0.0
        %942 = vmatpush.msra.mxu0 0.0
        %943 = vmatpush.msra.mxu0 0.0
        %944 = vmatpush.msra.mxu0 0.0
        %945 = vmatpush.msra.mxu0 0.0
        %946 = vmatpush.msra.mxu0 0.0
        %947 = vmatpush.msra.mxu0 0.0
        %948 = vmatpush.msra.mxu0 0.0
        %949 = vmatpush.msra.mxu0 0.0
        %950 = vmatpush.msra.mxu0 0.0
        %951 = vmatpush.msra.mxu0 %v931
        %952 = vmatmul.f32.gmra.mxu0 %v934
        %v953 = vpop.f32.mrf.mxu0
        %v954 = vadd.f32 0.0, %v953
        %955 = vdwg.mxu0
        %956 = vrot.lane.b32.xlu0 %v501, 64
        %v957 = vpop.permute.xlu0 %956
        %v960 = vsel %vm524, %v839, 0
        %962 = vmatpush.msra.mxu0 0.0
        %963 = vmatpush.msra.mxu0 0.0
        %964 = vmatpush.msra.mxu0 0.0
        %965 = vmatpush.msra.mxu0 0.0
        %966 = vmatpush.msra.mxu0 0.0
        %967 = vmatpush.msra.mxu0 0.0
        %968 = vmatpush.msra.mxu0 0.0
        %969 = vmatpush.msra.mxu0 0.0
        %970 = vmatpush.msra.mxu0 0.0
        %971 = vmatpush.msra.mxu0 0.0
        %972 = vmatpush.msra.mxu0 0.0
        %973 = vmatpush.msra.mxu0 0.0
        %974 = vmatpush.msra.mxu0 0.0
        %975 = vmatpush.msra.mxu0 0.0
        %976 = vmatpush.msra.mxu0 0.0
        %977 = vmatpush.msra.mxu0 %v957
        %978 = vmatmul.f32.gmra.mxu0 %v960
        %v979 = vpop.f32.mrf.mxu0
        %v980 = vadd.f32 0.0, %v979
        %981 = vdwg.mxu0
        %982 = vrot.lane.b32.xlu0 %v504, 64
        %v983 = vpop.permute.xlu0 %982
        %v986 = vsel %vm524, %v854, 0
        %988 = vmatpush.msra.mxu0 0.0
        %989 = vmatpush.msra.mxu0 0.0
        %990 = vmatpush.msra.mxu0 0.0
        %991 = vmatpush.msra.mxu0 0.0
        %992 = vmatpush.msra.mxu0 0.0
        %993 = vmatpush.msra.mxu0 0.0
        %994 = vmatpush.msra.mxu0 0.0
        %995 = vmatpush.msra.mxu0 0.0
        %996 = vmatpush.msra.mxu0 0.0
        %997 = vmatpush.msra.mxu0 0.0
        %998 = vmatpush.msra.mxu0 0.0
        %999 = vmatpush.msra.mxu0 0.0
        %1000 = vmatpush.msra.mxu0 0.0
        %1001 = vmatpush.msra.mxu0 0.0
        %1002 = vmatpush.msra.mxu0 0.0
        %1003 = vmatpush.msra.mxu0 %v983
        %1004 = vmatmul.f32.gmra.mxu0 %v986
        %v1005 = vpop.f32.mrf.mxu0
        %v1006 = vadd.f32 0.0, %v1005
        %1007 = vdwg.mxu0
        %1008 = vrot.lane.b32.xlu0 %v507, 64
        %v1009 = vpop.permute.xlu0 %1008
        %v1012 = vsel %vm524, %v869, 0
        %1014 = vmatpush.msra.mxu0 0.0
        %1015 = vmatpush.msra.mxu0 0.0
        %1016 = vmatpush.msra.mxu0 0.0
        %1017 = vmatpush.msra.mxu0 0.0
        %1018 = vmatpush.msra.mxu0 0.0
        %1019 = vmatpush.msra.mxu0 0.0
        %1020 = vmatpush.msra.mxu0 0.0
        %1021 = vmatpush.msra.mxu0 0.0
        %1022 = vmatpush.msra.mxu0 0.0
        %1023 = vmatpush.msra.mxu0 0.0
        %1024 = vmatpush.msra.mxu0 0.0
        %1025 = vmatpush.msra.mxu0 0.0
        %1026 = vmatpush.msra.mxu0 0.0
        %1027 = vmatpush.msra.mxu0 0.0
        %1028 = vmatpush.msra.mxu0 0.0
        %1029 = vmatpush.msra.mxu0 %v1009
        %1030 = vmatmul.f32.gmra.mxu0 %v1012
        %v1031 = vpop.f32.mrf.mxu0
        %v1032 = vadd.f32 0.0, %v1031
        %1033 = vdwg.mxu0
        %1034 = vrot.lane.b32.xlu0 %v510, 64
        %v1035 = vpop.permute.xlu0 %1034
        %v1038 = vsel %vm524, %v884, 0
        %1040 = vmatpush.msra.mxu0 0.0
        %1041 = vmatpush.msra.mxu0 0.0
        %1042 = vmatpush.msra.mxu0 0.0
        %1043 = vmatpush.msra.mxu0 0.0
        %1044 = vmatpush.msra.mxu0 0.0
        %1045 = vmatpush.msra.mxu0 0.0
        %1046 = vmatpush.msra.mxu0 0.0
        %1047 = vmatpush.msra.mxu0 0.0
        %1048 = vmatpush.msra.mxu0 0.0
        %1049 = vmatpush.msra.mxu0 0.0
        %1050 = vmatpush.msra.mxu0 0.0
        %1051 = vmatpush.msra.mxu0 0.0
        %1052 = vmatpush.msra.mxu0 0.0
        %1053 = vmatpush.msra.mxu0 0.0
        %1054 = vmatpush.msra.mxu0 0.0
        %1055 = vmatpush.msra.mxu0 %v1035
        %1056 = vmatmul.f32.gmra.mxu0 %v1038
        %v1057 = vpop.f32.mrf.mxu0
        %v1058 = vadd.f32 0.0, %v1057
        %1059 = vdwg.mxu0
        %1060 = vrot.lane.b32.xlu0 %v513, 64
        %v1061 = vpop.permute.xlu0 %1060
        %v1064 = vsel %vm524, %v899, 0
        %1066 = vmatpush.msra.mxu0 0.0
        %1067 = vmatpush.msra.mxu0 0.0
        %1068 = vmatpush.msra.mxu0 0.0
        %1069 = vmatpush.msra.mxu0 0.0
        %1070 = vmatpush.msra.mxu0 0.0
        %1071 = vmatpush.msra.mxu0 0.0
        %1072 = vmatpush.msra.mxu0 0.0
        %1073 = vmatpush.msra.mxu0 0.0
        %1074 = vmatpush.msra.mxu0 0.0
        %1075 = vmatpush.msra.mxu0 0.0
        %1076 = vmatpush.msra.mxu0 0.0
        %1077 = vmatpush.msra.mxu0 0.0
        %1078 = vmatpush.msra.mxu0 0.0
        %1079 = vmatpush.msra.mxu0 0.0
        %1080 = vmatpush.msra.mxu0 0.0
        %1081 = vmatpush.msra.mxu0 %v1061
        %1082 = vmatmul.f32.gmra.mxu0 %v1064
        %v1083 = vpop.f32.mrf.mxu0
        %v1084 = vadd.f32 0.0, %v1083
        %1085 = vdwg.mxu0
        %1086 = vrot.lane.b32.xlu0 %v516, 64
        %v1087 = vpop.permute.xlu0 %1086
        %v1090 = vsel %vm524, %v914, 0
        %1092 = vmatpush.msra.mxu0 0.0
        %1093 = vmatpush.msra.mxu0 0.0
        %1094 = vmatpush.msra.mxu0 0.0
        %1095 = vmatpush.msra.mxu0 0.0
        %1096 = vmatpush.msra.mxu0 0.0
        %1097 = vmatpush.msra.mxu0 0.0
        %1098 = vmatpush.msra.mxu0 0.0
        %1099 = vmatpush.msra.mxu0 0.0
        %1100 = vmatpush.msra.mxu0 0.0
        %1101 = vmatpush.msra.mxu0 0.0
        %1102 = vmatpush.msra.mxu0 0.0
        %1103 = vmatpush.msra.mxu0 0.0
        %1104 = vmatpush.msra.mxu0 0.0
        %1105 = vmatpush.msra.mxu0 0.0
        %1106 = vmatpush.msra.mxu0 0.0
        %1107 = vmatpush.msra.mxu0 %v1087
        %1108 = vmatmul.f32.gmra.mxu0 %v1090
        %v1109 = vpop.f32.mrf.mxu0
        %v1110 = vadd.f32 0.0, %v1109
        %1111 = vdwg.mxu0
        %1112 = vrot.lane.b32.xlu0 %v519, 64
        %v1113 = vpop.permute.xlu0 %1112
        %v1116 = vsel %vm524, %v929, 0
        %1118 = vmatpush.msra.mxu0 0.0
        %1119 = vmatpush.msra.mxu0 0.0
        %1120 = vmatpush.msra.mxu0 0.0
        %1121 = vmatpush.msra.mxu0 0.0
        %1122 = vmatpush.msra.mxu0 0.0
        %1123 = vmatpush.msra.mxu0 0.0
        %1124 = vmatpush.msra.mxu0 0.0
        %1125 = vmatpush.msra.mxu0 0.0
        %1126 = vmatpush.msra.mxu0 0.0
        %1127 = vmatpush.msra.mxu0 0.0
        %1128 = vmatpush.msra.mxu0 0.0
        %1129 = vmatpush.msra.mxu0 0.0
        %1130 = vmatpush.msra.mxu0 0.0
        %1131 = vmatpush.msra.mxu0 0.0
        %1132 = vmatpush.msra.mxu0 0.0
        %1133 = vmatpush.msra.mxu0 %v1113
        %1134 = vmatmul.f32.gmra.mxu0 %v1116
        %v1135 = vpop.f32.mrf.mxu0
        %v1136 = vadd.f32 0.0, %v1135
        %1137 = vdwg.mxu0
        %1138 = vrot.lane.b32.xlu0 %v498, 120
        %v1139 = vpop.permute.xlu0 %1138
        %1140 = vrot.lane.b32.xlu0 %v498, 88
        %v1141 = vpop.permute.xlu0 %1140
        %v1142 = vsel %vm524, %v1139, 0
        %v1144 = vsel %vm524, %v1141, 0
        %1146 = vmatpush.xpose.msra.mxu0 0.0
        %1147 = vmatpush.xpose.msra.mxu0 0.0
        %1148 = vmatpush.xpose.msra.mxu0 0.0
        %1149 = vmatpush.xpose.msra.mxu0 0.0
        %1150 = vmatpush.xpose.msra.mxu0 0.0
        %1151 = vmatpush.xpose.msra.mxu0 0.0
        %1152 = vmatpush.xpose.msra.mxu0 0.0
        %1153 = vmatpush.xpose.msra.mxu0 0.0
        %1154 = vmatpush.xpose.msra.mxu0 0.0
        %1155 = vmatpush.xpose.msra.mxu0 0.0
        %1156 = vmatpush.xpose.msra.mxu0 0.0
        %1157 = vmatpush.xpose.msra.mxu0 0.0
        %1158 = vmatpush.xpose.msra.mxu0 0.0
        %1159 = vmatpush.xpose.msra.mxu0 0.0
        %1160 = vmatpush.xpose.msra.mxu0 0.0
        %1161 = vmatpush.xpose.msra.mxu0 %v1144
        %1162 = vmatmul.f32.gmra.mxu0 %v1142
        %v1163 = vpop.f32.mrf.mxu0
        %v1164 = vadd.f32 %v448, %v1163
        %1165 = vdwg.mxu0
        %1166 = vrot.lane.b32.xlu0 %v501, 120
        %v1167 = vpop.permute.xlu0 %1166
        %1168 = vrot.lane.b32.xlu0 %v501, 88
        %v1169 = vpop.permute.xlu0 %1168
        %v1170 = vsel %vm524, %v1167, 0
        %v1172 = vsel %vm524, %v1169, 0
        %1174 = vmatpush.xpose.msra.mxu0 0.0
        %1175 = vmatpush.xpose.msra.mxu0 0.0
        %1176 = vmatpush.xpose.msra.mxu0 0.0
        %1177 = vmatpush.xpose.msra.mxu0 0.0
        %1178 = vmatpush.xpose.msra.mxu0 0.0
        %1179 = vmatpush.xpose.msra.mxu0 0.0
        %1180 = vmatpush.xpose.msra.mxu0 0.0
        %1181 = vmatpush.xpose.msra.mxu0 0.0
        %1182 = vmatpush.xpose.msra.mxu0 0.0
        %1183 = vmatpush.xpose.msra.mxu0 0.0
        %1184 = vmatpush.xpose.msra.mxu0 0.0
        %1185 = vmatpush.xpose.msra.mxu0 0.0
        %1186 = vmatpush.xpose.msra.mxu0 0.0
        %1187 = vmatpush.xpose.msra.mxu0 0.0
        %1188 = vmatpush.xpose.msra.mxu0 0.0
        %1189 = vmatpush.xpose.msra.mxu0 %v1172
        %1190 = vmatmul.f32.gmra.mxu0 %v1170
        %v1191 = vpop.f32.mrf.mxu0
        %v1192 = vadd.f32 %v448, %v1191
        %1193 = vdwg.mxu0
        %1194 = vrot.lane.b32.xlu0 %v504, 120
        %v1195 = vpop.permute.xlu0 %1194
        %1196 = vrot.lane.b32.xlu0 %v504, 88
        %v1197 = vpop.permute.xlu0 %1196
        %v1198 = vsel %vm524, %v1195, 0
        %v1200 = vsel %vm524, %v1197, 0
        %1202 = vmatpush.xpose.msra.mxu0 0.0
        %1203 = vmatpush.xpose.msra.mxu0 0.0
        %1204 = vmatpush.xpose.msra.mxu0 0.0
        %1205 = vmatpush.xpose.msra.mxu0 0.0
        %1206 = vmatpush.xpose.msra.mxu0 0.0
        %1207 = vmatpush.xpose.msra.mxu0 0.0
        %1208 = vmatpush.xpose.msra.mxu0 0.0
        %1209 = vmatpush.xpose.msra.mxu0 0.0
        %1210 = vmatpush.xpose.msra.mxu0 0.0
        %1211 = vmatpush.xpose.msra.mxu0 0.0
        %1212 = vmatpush.xpose.msra.mxu0 0.0
        %1213 = vmatpush.xpose.msra.mxu0 0.0
        %1214 = vmatpush.xpose.msra.mxu0 0.0
        %1215 = vmatpush.xpose.msra.mxu0 0.0
        %1216 = vmatpush.xpose.msra.mxu0 0.0
        %1217 = vmatpush.xpose.msra.mxu0 %v1200
        %1218 = vmatmul.f32.gmra.mxu0 %v1198
        %v1219 = vpop.f32.mrf.mxu0
        %v1220 = vadd.f32 %v448, %v1219
        %1221 = vdwg.mxu0
        %1222 = vrot.lane.b32.xlu0 %v507, 120
        %v1223 = vpop.permute.xlu0 %1222
        %1224 = vrot.lane.b32.xlu0 %v507, 88
        %v1225 = vpop.permute.xlu0 %1224
        %v1226 = vsel %vm524, %v1223, 0
        %v1228 = vsel %vm524, %v1225, 0
        %1230 = vmatpush.xpose.msra.mxu0 0.0
        %1231 = vmatpush.xpose.msra.mxu0 0.0
        %1232 = vmatpush.xpose.msra.mxu0 0.0
        %1233 = vmatpush.xpose.msra.mxu0 0.0
        %1234 = vmatpush.xpose.msra.mxu0 0.0
        %1235 = vmatpush.xpose.msra.mxu0 0.0
        %1236 = vmatpush.xpose.msra.mxu0 0.0
        %1237 = vmatpush.xpose.msra.mxu0 0.0
        %1238 = vmatpush.xpose.msra.mxu0 0.0
        %1239 = vmatpush.xpose.msra.mxu0 0.0
        %1240 = vmatpush.xpose.msra.mxu0 0.0
        %1241 = vmatpush.xpose.msra.mxu0 0.0
        %1242 = vmatpush.xpose.msra.mxu0 0.0
        %1243 = vmatpush.xpose.msra.mxu0 0.0
        %1244 = vmatpush.xpose.msra.mxu0 0.0
        %1245 = vmatpush.xpose.msra.mxu0 %v1228
        %1246 = vmatmul.f32.gmra.mxu0 %v1226
        %v1247 = vpop.f32.mrf.mxu0
        %v1248 = vadd.f32 %v448, %v1247
        %1249 = vdwg.mxu0
        %1250 = vrot.lane.b32.xlu0 %v510, 120
        %v1251 = vpop.permute.xlu0 %1250
        %1252 = vrot.lane.b32.xlu0 %v510, 88
        %v1253 = vpop.permute.xlu0 %1252
        %v1254 = vsel %vm524, %v1251, 0
        %v1256 = vsel %vm524, %v1253, 0
        %1258 = vmatpush.xpose.msra.mxu0 0.0
        %1259 = vmatpush.xpose.msra.mxu0 0.0
        %1260 = vmatpush.xpose.msra.mxu0 0.0
        %1261 = vmatpush.xpose.msra.mxu0 0.0
        %1262 = vmatpush.xpose.msra.mxu0 0.0
        %1263 = vmatpush.xpose.msra.mxu0 0.0
        %1264 = vmatpush.xpose.msra.mxu0 0.0
        %1265 = vmatpush.xpose.msra.mxu0 0.0
        %1266 = vmatpush.xpose.msra.mxu0 0.0
        %1267 = vmatpush.xpose.msra.mxu0 0.0
        %1268 = vmatpush.xpose.msra.mxu0 0.0
        %1269 = vmatpush.xpose.msra.mxu0 0.0
        %1270 = vmatpush.xpose.msra.mxu0 0.0
        %1271 = vmatpush.xpose.msra.mxu0 0.0
        %1272 = vmatpush.xpose.msra.mxu0 0.0
        %1273 = vmatpush.xpose.msra.mxu0 %v1256
        %1274 = vmatmul.f32.gmra.mxu0 %v1254
        %v1275 = vpop.f32.mrf.mxu0
        %v1276 = vadd.f32 %v448, %v1275
        %1277 = vdwg.mxu0
        %1278 = vrot.lane.b32.xlu0 %v513, 120
        %v1279 = vpop.permute.xlu0 %1278
        %1280 = vrot.lane.b32.xlu0 %v513, 88
        %v1281 = vpop.permute.xlu0 %1280
        %v1282 = vsel %vm524, %v1279, 0
        %v1284 = vsel %vm524, %v1281, 0
        %1286 = vmatpush.xpose.msra.mxu0 0.0
        %1287 = vmatpush.xpose.msra.mxu0 0.0
        %1288 = vmatpush.xpose.msra.mxu0 0.0
        %1289 = vmatpush.xpose.msra.mxu0 0.0
        %1290 = vmatpush.xpose.msra.mxu0 0.0
        %1291 = vmatpush.xpose.msra.mxu0 0.0
        %1292 = vmatpush.xpose.msra.mxu0 0.0
        %1293 = vmatpush.xpose.msra.mxu0 0.0
        %1294 = vmatpush.xpose.msra.mxu0 0.0
        %1295 = vmatpush.xpose.msra.mxu0 0.0
        %1296 = vmatpush.xpose.msra.mxu0 0.0
        %1297 = vmatpush.xpose.msra.mxu0 0.0
        %1298 = vmatpush.xpose.msra.mxu0 0.0
        %1299 = vmatpush.xpose.msra.mxu0 0.0
        %1300 = vmatpush.xpose.msra.mxu0 0.0
        %1301 = vmatpush.xpose.msra.mxu0 %v1284
        %1302 = vmatmul.f32.gmra.mxu0 %v1282
        %v1303 = vpop.f32.mrf.mxu0
        %v1304 = vadd.f32 %v448, %v1303
        %1305 = vdwg.mxu0
        %1306 = vrot.lane.b32.xlu0 %v516, 120
        %v1307 = vpop.permute.xlu0 %1306
        %1308 = vrot.lane.b32.xlu0 %v516, 88
        %v1309 = vpop.permute.xlu0 %1308
        %v1310 = vsel %vm524, %v1307, 0
        %v1312 = vsel %vm524, %v1309, 0
        %1314 = vmatpush.xpose.msra.mxu0 0.0
        %1315 = vmatpush.xpose.msra.mxu0 0.0
        %1316 = vmatpush.xpose.msra.mxu0 0.0
        %1317 = vmatpush.xpose.msra.mxu0 0.0
        %1318 = vmatpush.xpose.msra.mxu0 0.0
        %1319 = vmatpush.xpose.msra.mxu0 0.0
        %1320 = vmatpush.xpose.msra.mxu0 0.0
        %1321 = vmatpush.xpose.msra.mxu0 0.0
        %1322 = vmatpush.xpose.msra.mxu0 0.0
        %1323 = vmatpush.xpose.msra.mxu0 0.0
        %1324 = vmatpush.xpose.msra.mxu0 0.0
        %1325 = vmatpush.xpose.msra.mxu0 0.0
        %1326 = vmatpush.xpose.msra.mxu0 0.0
        %1327 = vmatpush.xpose.msra.mxu0 0.0
        %1328 = vmatpush.xpose.msra.mxu0 0.0
        %1329 = vmatpush.xpose.msra.mxu0 %v1312
        %1330 = vmatmul.f32.gmra.mxu0 %v1310
        %v1331 = vpop.f32.mrf.mxu0
        %v1332 = vadd.f32 %v448, %v1331
        %1333 = vdwg.mxu0
        %1334 = vrot.lane.b32.xlu0 %v519, 120
        %v1335 = vpop.permute.xlu0 %1334
        %1336 = vrot.lane.b32.xlu0 %v519, 88
        %v1337 = vpop.permute.xlu0 %1336
        %v1338 = vsel %vm524, %v1335, 0
        %v1340 = vsel %vm524, %v1337, 0
        %1342 = vmatpush.xpose.msra.mxu0 0.0
        %1343 = vmatpush.xpose.msra.mxu0 0.0
        %1344 = vmatpush.xpose.msra.mxu0 0.0
        %1345 = vmatpush.xpose.msra.mxu0 0.0
        %1346 = vmatpush.xpose.msra.mxu0 0.0
        %1347 = vmatpush.xpose.msra.mxu0 0.0
        %1348 = vmatpush.xpose.msra.mxu0 0.0
        %1349 = vmatpush.xpose.msra.mxu0 0.0
        %1350 = vmatpush.xpose.msra.mxu0 0.0
        %1351 = vmatpush.xpose.msra.mxu0 0.0
        %1352 = vmatpush.xpose.msra.mxu0 0.0
        %1353 = vmatpush.xpose.msra.mxu0 0.0
        %1354 = vmatpush.xpose.msra.mxu0 0.0
        %1355 = vmatpush.xpose.msra.mxu0 0.0
        %1356 = vmatpush.xpose.msra.mxu0 0.0
        %1357 = vmatpush.xpose.msra.mxu0 %v1340
        %1358 = vmatmul.f32.gmra.mxu0 %v1338
        %v1359 = vpop.f32.mrf.mxu0
        %v1360 = vadd.f32 %v448, %v1359
        %1361 = vdwg.mxu0
        %v1362 = vsel %vm524, %v1164, -inf
        %1363 = vmax.xlane.f32.xlu0 %v1362
        %v1364 = vpop.xlane.xlu0 %1363
        %v1365 = vsel %vm524, %v1192, -inf
        %1366 = vmax.xlane.f32.xlu0 %v1365
        %v1367 = vpop.xlane.xlu0 %1366
        %v1368 = vsel %vm524, %v1220, -inf
        %1369 = vmax.xlane.f32.xlu0 %v1368
        %v1370 = vpop.xlane.xlu0 %1369
        %v1371 = vsel %vm524, %v1248, -inf
        %1372 = vmax.xlane.f32.xlu0 %v1371
        %v1373 = vpop.xlane.xlu0 %1372
        %v1374 = vsel %vm524, %v1276, -inf
        %1375 = vmax.xlane.f32.xlu0 %v1374
        %v1376 = vpop.xlane.xlu0 %1375
        %v1377 = vsel %vm524, %v1304, -inf
        %1378 = vmax.xlane.f32.xlu0 %v1377
        %v1379 = vpop.xlane.xlu0 %1378
        %v1380 = vsel %vm524, %v1332, -inf
        %1381 = vmax.xlane.f32.xlu0 %v1380
        %v1382 = vpop.xlane.xlu0 %1381
        %v1383 = vsel %vm524, %v1360, -inf
        %1384 = vmax.xlane.f32.xlu0 %v1383
        %v1385 = vpop.xlane.xlu0 %1384
        %v1386 = vsub.f32 %v1164, %v1364
        %v1387 = vsub.f32 %v1192, %v1367
        %v1388 = vsub.f32 %v1220, %v1370
        %v1389 = vsub.f32 %v1248, %v1373
        %v1390 = vsub.f32 %v1276, %v1376
        %v1391 = vsub.f32 %v1304, %v1379
        %v1392 = vsub.f32 %v1332, %v1382
        %v1393 = vsub.f32 %v1360, %v1385
        %v1394 = vmul.f32 %v1386, 1.442695
        %v1395 = vpow.pop %v1394
        %v1396 = vmul.f32 %v1387, 1.442695
        %v1397 = vpow.pop %v1396
        %v1398 = vmul.f32 %v1388, 1.442695
        %v1399 = vpow.pop %v1398
        %v1400 = vmul.f32 %v1389, 1.442695
        %v1401 = vpow.pop %v1400
        %v1402 = vmul.f32 %v1390, 1.442695
        %v1403 = vpow.pop %v1402
        %v1404 = vmul.f32 %v1391, 1.442695
        %v1405 = vpow.pop %v1404
        %v1406 = vmul.f32 %v1392, 1.442695
        %v1407 = vpow.pop %v1406
        %v1408 = vmul.f32 %v1393, 1.442695
        %v1409 = vpow.pop %v1408
        %v1410 = vsel %vm524, %v1395, 0.0
        %1411 = vadd.xlane.f32.xlu0 %v1410
        %v1412 = vpop.xlane.xlu0 %1411
        %v1413 = vsel %vm524, %v1397, 0.0
        %1414 = vadd.xlane.f32.xlu0 %v1413
        %v1415 = vpop.xlane.xlu0 %1414
        %v1416 = vsel %vm524, %v1399, 0.0
        %1417 = vadd.xlane.f32.xlu0 %v1416
        %v1418 = vpop.xlane.xlu0 %1417
        %v1419 = vsel %vm524, %v1401, 0.0
        %1420 = vadd.xlane.f32.xlu0 %v1419
        %v1421 = vpop.xlane.xlu0 %1420
        %v1422 = vsel %vm524, %v1403, 0.0
        %1423 = vadd.xlane.f32.xlu0 %v1422
        %v1424 = vpop.xlane.xlu0 %1423
        %v1425 = vsel %vm524, %v1405, 0.0
        %1426 = vadd.xlane.f32.xlu0 %v1425
        %v1427 = vpop.xlane.xlu0 %1426
        %v1428 = vsel %vm524, %v1407, 0.0
        %1429 = vadd.xlane.f32.xlu0 %v1428
        %v1430 = vpop.xlane.xlu0 %1429
        %v1431 = vsel %vm524, %v1409, 0.0
        %1432 = vadd.xlane.f32.xlu0 %v1431
        %v1433 = vpop.xlane.xlu0 %1432
        %v1434 = vrcp.pop %v1412
        %v1435 = vmul.f32 %v1412, %v1434
        %v1436 = vsub.f32 1.0, %v1435
        %v1437 = vmul.f32 %v1434, %v1436
        %v1438 = vadd.f32 %v1434, %v1437
        %vm1439 = vweird.f32 %v1412
        %vm1440 = vweird.f32 %v1434
        %vm1441 = vmor %vm1439, %vm1440
        %v1442 = vsel %vm1441, %v1434, %v1438
        %v1443 = vand.u32 2147483647, %v1412
        %vm1444 = vcmp.eq.f32.partialorder %v1443, 8.507059e+37
        %v1445 = vand.u32 %v1412, 2147483648
        %v1446 = vor.u32 1.1754944e-38, %v1445
        %v1447 = vsel %vm1444, %v1446, %v1442
        %v1448 = vmul.f32 %v1395, %v1447
        %v1449 = vrcp.pop %v1415
        %v1450 = vmul.f32 %v1415, %v1449
        %v1451 = vsub.f32 1.0, %v1450
        %v1452 = vmul.f32 %v1449, %v1451
        %v1453 = vadd.f32 %v1449, %v1452
        %vm1454 = vweird.f32 %v1415
        %vm1455 = vweird.f32 %v1449
        %vm1456 = vmor %vm1454, %vm1455
        %v1457 = vsel %vm1456, %v1449, %v1453
        %v1458 = vand.u32 2147483647, %v1415
        %vm1459 = vcmp.eq.f32.partialorder %v1458, 8.507059e+37
        %v1460 = vand.u32 %v1415, 2147483648
        %v1461 = vor.u32 1.1754944e-38, %v1460
        %v1462 = vsel %vm1459, %v1461, %v1457
        %v1463 = vmul.f32 %v1397, %v1462
        %v1464 = vrcp.pop %v1418
        %v1465 = vmul.f32 %v1418, %v1464
        %v1466 = vsub.f32 1.0, %v1465
        %v1467 = vmul.f32 %v1464, %v1466
        %v1468 = vadd.f32 %v1464, %v1467
        %vm1469 = vweird.f32 %v1418
        %vm1470 = vweird.f32 %v1464
        %vm1471 = vmor %vm1469, %vm1470
        %v1472 = vsel %vm1471, %v1464, %v1468
        %v1473 = vand.u32 2147483647, %v1418
        %vm1474 = vcmp.eq.f32.partialorder %v1473, 8.507059e+37
        %v1475 = vand.u32 %v1418, 2147483648
        %v1476 = vor.u32 1.1754944e-38, %v1475
        %v1477 = vsel %vm1474, %v1476, %v1472
        %v1478 = vmul.f32 %v1399, %v1477
        %v1479 = vrcp.pop %v1421
        %v1480 = vmul.f32 %v1421, %v1479
        %v1481 = vsub.f32 1.0, %v1480
        %v1482 = vmul.f32 %v1479, %v1481
        %v1483 = vadd.f32 %v1479, %v1482
        %vm1484 = vweird.f32 %v1421
        %vm1485 = vweird.f32 %v1479
        %vm1486 = vmor %vm1484, %vm1485
        %v1487 = vsel %vm1486, %v1479, %v1483
        %v1488 = vand.u32 2147483647, %v1421
        %vm1489 = vcmp.eq.f32.partialorder %v1488, 8.507059e+37
        %v1490 = vand.u32 %v1421, 2147483648
        %v1491 = vor.u32 1.1754944e-38, %v1490
        %v1492 = vsel %vm1489, %v1491, %v1487
        %v1493 = vmul.f32 %v1401, %v1492
        %v1494 = vrcp.pop %v1424
        %v1495 = vmul.f32 %v1424, %v1494
        %v1496 = vsub.f32 1.0, %v1495
        %v1497 = vmul.f32 %v1494, %v1496
        %v1498 = vadd.f32 %v1494, %v1497
        %vm1499 = vweird.f32 %v1424
        %vm1500 = vweird.f32 %v1494
        %vm1501 = vmor %vm1499, %vm1500
        %v1502 = vsel %vm1501, %v1494, %v1498
        %v1503 = vand.u32 2147483647, %v1424
        %vm1504 = vcmp.eq.f32.partialorder %v1503, 8.507059e+37
        %v1505 = vand.u32 %v1424, 2147483648
        %v1506 = vor.u32 1.1754944e-38, %v1505
        %v1507 = vsel %vm1504, %v1506, %v1502
        %v1508 = vmul.f32 %v1403, %v1507
        %v1509 = vrcp.pop %v1427
        %v1510 = vmul.f32 %v1427, %v1509
        %v1511 = vsub.f32 1.0, %v1510
        %v1512 = vmul.f32 %v1509, %v1511
        %v1513 = vadd.f32 %v1509, %v1512
        %vm1514 = vweird.f32 %v1427
        %vm1515 = vweird.f32 %v1509
        %vm1516 = vmor %vm1514, %vm1515
        %v1517 = vsel %vm1516, %v1509, %v1513
        %v1518 = vand.u32 2147483647, %v1427
        %vm1519 = vcmp.eq.f32.partialorder %v1518, 8.507059e+37
        %v1520 = vand.u32 %v1427, 2147483648
        %v1521 = vor.u32 1.1754944e-38, %v1520
        %v1522 = vsel %vm1519, %v1521, %v1517
        %v1523 = vmul.f32 %v1405, %v1522
        %v1524 = vrcp.pop %v1430
        %v1525 = vmul.f32 %v1430, %v1524
        %v1526 = vsub.f32 1.0, %v1525
        %v1527 = vmul.f32 %v1524, %v1526
        %v1528 = vadd.f32 %v1524, %v1527
        %vm1529 = vweird.f32 %v1430
        %vm1530 = vweird.f32 %v1524
        %vm1531 = vmor %vm1529, %vm1530
        %v1532 = vsel %vm1531, %v1524, %v1528
        %v1533 = vand.u32 2147483647, %v1430
        %vm1534 = vcmp.eq.f32.partialorder %v1533, 8.507059e+37
        %v1535 = vand.u32 %v1430, 2147483648
        %v1536 = vor.u32 1.1754944e-38, %v1535
        %v1537 = vsel %vm1534, %v1536, %v1532
        %v1538 = vmul.f32 %v1407, %v1537
        %v1539 = vrcp.pop %v1433
        %v1540 = vmul.f32 %v1433, %v1539
        %v1541 = vsub.f32 1.0, %v1540
        %v1542 = vmul.f32 %v1539, %v1541
        %v1543 = vadd.f32 %v1539, %v1542
        %vm1544 = vweird.f32 %v1433
        %vm1545 = vweird.f32 %v1539
        %vm1546 = vmor %vm1544, %vm1545
        %v1547 = vsel %vm1546, %v1539, %v1543
        %v1548 = vand.u32 2147483647, %v1433
        %vm1549 = vcmp.eq.f32.partialorder %v1548, 8.507059e+37
        %v1550 = vand.u32 %v1433, 2147483648
        %v1551 = vor.u32 1.1754944e-38, %v1550
        %v1552 = vsel %vm1549, %v1551, %v1547
        %v1553 = vmul.f32 %v1409, %v1552
        %1554 = vrot.lane.b32.xlu0 %v498, 56
        %v1555 = vpop.permute.xlu0 %1554
        %v1558 = vsel %vm524, %v1448, 0
        %1560 = vmatpush.msra.mxu0 0.0
        %1561 = vmatpush.msra.mxu0 0.0
        %1562 = vmatpush.msra.mxu0 0.0
        %1563 = vmatpush.msra.mxu0 0.0
        %1564 = vmatpush.msra.mxu0 0.0
        %1565 = vmatpush.msra.mxu0 0.0
        %1566 = vmatpush.msra.mxu0 0.0
        %1567 = vmatpush.msra.mxu0 0.0
        %1568 = vmatpush.msra.mxu0 0.0
        %1569 = vmatpush.msra.mxu0 0.0
        %1570 = vmatpush.msra.mxu0 0.0
        %1571 = vmatpush.msra.mxu0 0.0
        %1572 = vmatpush.msra.mxu0 0.0
        %1573 = vmatpush.msra.mxu0 0.0
        %1574 = vmatpush.msra.mxu0 0.0
        %1575 = vmatpush.msra.mxu0 %v1555
        %1576 = vmatmul.f32.gmra.mxu0 %v1558
        %v1577 = vpop.f32.mrf.mxu0
        %v1578 = vadd.f32 0.0, %v1577
        %1579 = vdwg.mxu0
        %1580 = vrot.lane.b32.xlu0 %v501, 56
        %v1581 = vpop.permute.xlu0 %1580
        %v1584 = vsel %vm524, %v1463, 0
        %1586 = vmatpush.msra.mxu0 0.0
        %1587 = vmatpush.msra.mxu0 0.0
        %1588 = vmatpush.msra.mxu0 0.0
        %1589 = vmatpush.msra.mxu0 0.0
        %1590 = vmatpush.msra.mxu0 0.0
        %1591 = vmatpush.msra.mxu0 0.0
        %1592 = vmatpush.msra.mxu0 0.0
        %1593 = vmatpush.msra.mxu0 0.0
        %1594 = vmatpush.msra.mxu0 0.0
        %1595 = vmatpush.msra.mxu0 0.0
        %1596 = vmatpush.msra.mxu0 0.0
        %1597 = vmatpush.msra.mxu0 0.0
        %1598 = vmatpush.msra.mxu0 0.0
        %1599 = vmatpush.msra.mxu0 0.0
        %1600 = vmatpush.msra.mxu0 0.0
        %1601 = vmatpush.msra.mxu0 %v1581
        %1602 = vmatmul.f32.gmra.mxu0 %v1584
        %v1603 = vpop.f32.mrf.mxu0
        %v1604 = vadd.f32 0.0, %v1603
        %1605 = vdwg.mxu0
        %1606 = vrot.lane.b32.xlu0 %v504, 56
        %v1607 = vpop.permute.xlu0 %1606
        %v1610 = vsel %vm524, %v1478, 0
        %1612 = vmatpush.msra.mxu0 0.0
        %1613 = vmatpush.msra.mxu0 0.0
        %1614 = vmatpush.msra.mxu0 0.0
        %1615 = vmatpush.msra.mxu0 0.0
        %1616 = vmatpush.msra.mxu0 0.0
        %1617 = vmatpush.msra.mxu0 0.0
        %1618 = vmatpush.msra.mxu0 0.0
        %1619 = vmatpush.msra.mxu0 0.0
        %1620 = vmatpush.msra.mxu0 0.0
        %1621 = vmatpush.msra.mxu0 0.0
        %1622 = vmatpush.msra.mxu0 0.0
        %1623 = vmatpush.msra.mxu0 0.0
        %1624 = vmatpush.msra.mxu0 0.0
        %1625 = vmatpush.msra.mxu0 0.0
        %1626 = vmatpush.msra.mxu0 0.0
        %1627 = vmatpush.msra.mxu0 %v1607
        %1628 = vmatmul.f32.gmra.mxu0 %v1610
        %v1629 = vpop.f32.mrf.mxu0
        %v1630 = vadd.f32 0.0, %v1629
        %1631 = vdwg.mxu0
        %1632 = vrot.lane.b32.xlu0 %v507, 56
        %v1633 = vpop.permute.xlu0 %1632
        %v1636 = vsel %vm524, %v1493, 0
        %1638 = vmatpush.msra.mxu0 0.0
        %1639 = vmatpush.msra.mxu0 0.0
        %1640 = vmatpush.msra.mxu0 0.0
        %1641 = vmatpush.msra.mxu0 0.0
        %1642 = vmatpush.msra.mxu0 0.0
        %1643 = vmatpush.msra.mxu0 0.0
        %1644 = vmatpush.msra.mxu0 0.0
        %1645 = vmatpush.msra.mxu0 0.0
        %1646 = vmatpush.msra.mxu0 0.0
        %1647 = vmatpush.msra.mxu0 0.0
        %1648 = vmatpush.msra.mxu0 0.0
        %1649 = vmatpush.msra.mxu0 0.0
        %1650 = vmatpush.msra.mxu0 0.0
        %1651 = vmatpush.msra.mxu0 0.0
        %1652 = vmatpush.msra.mxu0 0.0
        %1653 = vmatpush.msra.mxu0 %v1633
        %1654 = vmatmul.f32.gmra.mxu0 %v1636
        %v1655 = vpop.f32.mrf.mxu0
        %v1656 = vadd.f32 0.0, %v1655
        %1657 = vdwg.mxu0
        %1658 = vrot.lane.b32.xlu0 %v510, 56
        %v1659 = vpop.permute.xlu0 %1658
        %v1662 = vsel %vm524, %v1508, 0
        %1664 = vmatpush.msra.mxu0 0.0
        %1665 = vmatpush.msra.mxu0 0.0
        %1666 = vmatpush.msra.mxu0 0.0
        %1667 = vmatpush.msra.mxu0 0.0
        %1668 = vmatpush.msra.mxu0 0.0
        %1669 = vmatpush.msra.mxu0 0.0
        %1670 = vmatpush.msra.mxu0 0.0
        %1671 = vmatpush.msra.mxu0 0.0
        %1672 = vmatpush.msra.mxu0 0.0
        %1673 = vmatpush.msra.mxu0 0.0
        %1674 = vmatpush.msra.mxu0 0.0
        %1675 = vmatpush.msra.mxu0 0.0
        %1676 = vmatpush.msra.mxu0 0.0
        %1677 = vmatpush.msra.mxu0 0.0
        %1678 = vmatpush.msra.mxu0 0.0
        %1679 = vmatpush.msra.mxu0 %v1659
        %1680 = vmatmul.f32.gmra.mxu0 %v1662
        %v1681 = vpop.f32.mrf.mxu0
        %v1682 = vadd.f32 0.0, %v1681
        %1683 = vdwg.mxu0
        %1684 = vrot.lane.b32.xlu0 %v513, 56
        %v1685 = vpop.permute.xlu0 %1684
        %v1688 = vsel %vm524, %v1523, 0
        %1690 = vmatpush.msra.mxu0 0.0
        %1691 = vmatpush.msra.mxu0 0.0
        %1692 = vmatpush.msra.mxu0 0.0
        %1693 = vmatpush.msra.mxu0 0.0
        %1694 = vmatpush.msra.mxu0 0.0
        %1695 = vmatpush.msra.mxu0 0.0
        %1696 = vmatpush.msra.mxu0 0.0
        %1697 = vmatpush.msra.mxu0 0.0
        %1698 = vmatpush.msra.mxu0 0.0
        %1699 = vmatpush.msra.mxu0 0.0
        %1700 = vmatpush.msra.mxu0 0.0
        %1701 = vmatpush.msra.mxu0 0.0
        %1702 = vmatpush.msra.mxu0 0.0
        %1703 = vmatpush.msra.mxu0 0.0
        %1704 = vmatpush.msra.mxu0 0.0
        %1705 = vmatpush.msra.mxu0 %v1685
        %1706 = vmatmul.f32.gmra.mxu0 %v1688
        %v1707 = vpop.f32.mrf.mxu0
        %v1708 = vadd.f32 0.0, %v1707
        %1709 = vdwg.mxu0
        %1710 = vrot.lane.b32.xlu0 %v516, 56
        %v1711 = vpop.permute.xlu0 %1710
        %v1714 = vsel %vm524, %v1538, 0
        %1716 = vmatpush.msra.mxu0 0.0
        %1717 = vmatpush.msra.mxu0 0.0
        %1718 = vmatpush.msra.mxu0 0.0
        %1719 = vmatpush.msra.mxu0 0.0
        %1720 = vmatpush.msra.mxu0 0.0
        %1721 = vmatpush.msra.mxu0 0.0
        %1722 = vmatpush.msra.mxu0 0.0
        %1723 = vmatpush.msra.mxu0 0.0
        %1724 = vmatpush.msra.mxu0 0.0
        %1725 = vmatpush.msra.mxu0 0.0
        %1726 = vmatpush.msra.mxu0 0.0
        %1727 = vmatpush.msra.mxu0 0.0
        %1728 = vmatpush.msra.mxu0 0.0
        %1729 = vmatpush.msra.mxu0 0.0
        %1730 = vmatpush.msra.mxu0 0.0
        %1731 = vmatpush.msra.mxu0 %v1711
        %1732 = vmatmul.f32.gmra.mxu0 %v1714
        %v1733 = vpop.f32.mrf.mxu0
        %v1734 = vadd.f32 0.0, %v1733
        %1735 = vdwg.mxu0
        %1736 = vrot.lane.b32.xlu0 %v519, 56
        %v1737 = vpop.permute.xlu0 %1736
        %v1740 = vsel %vm524, %v1553, 0
        %1742 = vmatpush.msra.mxu0 0.0
        %1743 = vmatpush.msra.mxu0 0.0
        %1744 = vmatpush.msra.mxu0 0.0
        %1745 = vmatpush.msra.mxu0 0.0
        %1746 = vmatpush.msra.mxu0 0.0
        %1747 = vmatpush.msra.mxu0 0.0
        %1748 = vmatpush.msra.mxu0 0.0
        %1749 = vmatpush.msra.mxu0 0.0
        %1750 = vmatpush.msra.mxu0 0.0
        %1751 = vmatpush.msra.mxu0 0.0
        %1752 = vmatpush.msra.mxu0 0.0
        %1753 = vmatpush.msra.mxu0 0.0
        %1754 = vmatpush.msra.mxu0 0.0
        %1755 = vmatpush.msra.mxu0 0.0
        %1756 = vmatpush.msra.mxu0 0.0
        %1757 = vmatpush.msra.mxu0 %v1737
        %1758 = vmatmul.f32.gmra.mxu0 %v1740
        %v1759 = vpop.f32.mrf.mxu0
        %v1760 = vadd.f32 0.0, %v1759
        %1761 = vdwg.mxu0
        %1762 = vrot.lane.b32.xlu0 %v498, 112
        %v1763 = vpop.permute.xlu0 %1762
        %1764 = vrot.lane.b32.xlu0 %v498, 80
        %v1765 = vpop.permute.xlu0 %1764
        %v1766 = vsel %vm524, %v1763, 0
        %v1768 = vsel %vm524, %v1765, 0
        %1770 = vmatpush.xpose.msra.mxu0 0.0
        %1771 = vmatpush.xpose.msra.mxu0 0.0
        %1772 = vmatpush.xpose.msra.mxu0 0.0
        %1773 = vmatpush.xpose.msra.mxu0 0.0
        %1774 = vmatpush.xpose.msra.mxu0 0.0
        %1775 = vmatpush.xpose.msra.mxu0 0.0
        %1776 = vmatpush.xpose.msra.mxu0 0.0
        %1777 = vmatpush.xpose.msra.mxu0 0.0
        %1778 = vmatpush.xpose.msra.mxu0 0.0
        %1779 = vmatpush.xpose.msra.mxu0 0.0
        %1780 = vmatpush.xpose.msra.mxu0 0.0
        %1781 = vmatpush.xpose.msra.mxu0 0.0
        %1782 = vmatpush.xpose.msra.mxu0 0.0
        %1783 = vmatpush.xpose.msra.mxu0 0.0
        %1784 = vmatpush.xpose.msra.mxu0 0.0
        %1785 = vmatpush.xpose.msra.mxu0 %v1768
        %1786 = vmatmul.f32.gmra.mxu0 %v1766
        %v1787 = vpop.f32.mrf.mxu0
        %v1788 = vadd.f32 %v448, %v1787
        %1789 = vdwg.mxu0
        %1790 = vrot.lane.b32.xlu0 %v501, 112
        %v1791 = vpop.permute.xlu0 %1790
        %1792 = vrot.lane.b32.xlu0 %v501, 80
        %v1793 = vpop.permute.xlu0 %1792
        %v1794 = vsel %vm524, %v1791, 0
        %v1796 = vsel %vm524, %v1793, 0
        %1798 = vmatpush.xpose.msra.mxu0 0.0
        %1799 = vmatpush.xpose.msra.mxu0 0.0
        %1800 = vmatpush.xpose.msra.mxu0 0.0
        %1801 = vmatpush.xpose.msra.mxu0 0.0
        %1802 = vmatpush.xpose.msra.mxu0 0.0
        %1803 = vmatpush.xpose.msra.mxu0 0.0
        %1804 = vmatpush.xpose.msra.mxu0 0.0
        %1805 = vmatpush.xpose.msra.mxu0 0.0
        %1806 = vmatpush.xpose.msra.mxu0 0.0
        %1807 = vmatpush.xpose.msra.mxu0 0.0
        %1808 = vmatpush.xpose.msra.mxu0 0.0
        %1809 = vmatpush.xpose.msra.mxu0 0.0
        %1810 = vmatpush.xpose.msra.mxu0 0.0
        %1811 = vmatpush.xpose.msra.mxu0 0.0
        %1812 = vmatpush.xpose.msra.mxu0 0.0
        %1813 = vmatpush.xpose.msra.mxu0 %v1796
        %1814 = vmatmul.f32.gmra.mxu0 %v1794
        %v1815 = vpop.f32.mrf.mxu0
        %v1816 = vadd.f32 %v448, %v1815
        %1817 = vdwg.mxu0
        %1818 = vrot.lane.b32.xlu0 %v504, 112
        %v1819 = vpop.permute.xlu0 %1818
        %1820 = vrot.lane.b32.xlu0 %v504, 80
        %v1821 = vpop.permute.xlu0 %1820
        %v1822 = vsel %vm524, %v1819, 0
        %v1824 = vsel %vm524, %v1821, 0
        %1826 = vmatpush.xpose.msra.mxu0 0.0
        %1827 = vmatpush.xpose.msra.mxu0 0.0
        %1828 = vmatpush.xpose.msra.mxu0 0.0
        %1829 = vmatpush.xpose.msra.mxu0 0.0
        %1830 = vmatpush.xpose.msra.mxu0 0.0
        %1831 = vmatpush.xpose.msra.mxu0 0.0
        %1832 = vmatpush.xpose.msra.mxu0 0.0
        %1833 = vmatpush.xpose.msra.mxu0 0.0
        %1834 = vmatpush.xpose.msra.mxu0 0.0
        %1835 = vmatpush.xpose.msra.mxu0 0.0
        %1836 = vmatpush.xpose.msra.mxu0 0.0
        %1837 = vmatpush.xpose.msra.mxu0 0.0
        %1838 = vmatpush.xpose.msra.mxu0 0.0
        %1839 = vmatpush.xpose.msra.mxu0 0.0
        %1840 = vmatpush.xpose.msra.mxu0 0.0
        %1841 = vmatpush.xpose.msra.mxu0 %v1824
        %1842 = vmatmul.f32.gmra.mxu0 %v1822
        %v1843 = vpop.f32.mrf.mxu0
        %v1844 = vadd.f32 %v448, %v1843
        %1845 = vdwg.mxu0
        %1846 = vrot.lane.b32.xlu0 %v507, 112
        %v1847 = vpop.permute.xlu0 %1846
        %1848 = vrot.lane.b32.xlu0 %v507, 80
        %v1849 = vpop.permute.xlu0 %1848
        %v1850 = vsel %vm524, %v1847, 0
        %v1852 = vsel %vm524, %v1849, 0
        %1854 = vmatpush.xpose.msra.mxu0 0.0
        %1855 = vmatpush.xpose.msra.mxu0 0.0
        %1856 = vmatpush.xpose.msra.mxu0 0.0
        %1857 = vmatpush.xpose.msra.mxu0 0.0
        %1858 = vmatpush.xpose.msra.mxu0 0.0
        %1859 = vmatpush.xpose.msra.mxu0 0.0
        %1860 = vmatpush.xpose.msra.mxu0 0.0
        %1861 = vmatpush.xpose.msra.mxu0 0.0
        %1862 = vmatpush.xpose.msra.mxu0 0.0
        %1863 = vmatpush.xpose.msra.mxu0 0.0
        %1864 = vmatpush.xpose.msra.mxu0 0.0
        %1865 = vmatpush.xpose.msra.mxu0 0.0
        %1866 = vmatpush.xpose.msra.mxu0 0.0
        %1867 = vmatpush.xpose.msra.mxu0 0.0
        %1868 = vmatpush.xpose.msra.mxu0 0.0
        %1869 = vmatpush.xpose.msra.mxu0 %v1852
        %1870 = vmatmul.f32.gmra.mxu0 %v1850
        %v1871 = vpop.f32.mrf.mxu0
        %v1872 = vadd.f32 %v448, %v1871
        %1873 = vdwg.mxu0
        %1874 = vrot.lane.b32.xlu0 %v510, 112
        %v1875 = vpop.permute.xlu0 %1874
        %1876 = vrot.lane.b32.xlu0 %v510, 80
        %v1877 = vpop.permute.xlu0 %1876
        %v1878 = vsel %vm524, %v1875, 0
        %v1880 = vsel %vm524, %v1877, 0
        %1882 = vmatpush.xpose.msra.mxu0 0.0
        %1883 = vmatpush.xpose.msra.mxu0 0.0
        %1884 = vmatpush.xpose.msra.mxu0 0.0
        %1885 = vmatpush.xpose.msra.mxu0 0.0
        %1886 = vmatpush.xpose.msra.mxu0 0.0
        %1887 = vmatpush.xpose.msra.mxu0 0.0
        %1888 = vmatpush.xpose.msra.mxu0 0.0
        %1889 = vmatpush.xpose.msra.mxu0 0.0
        %1890 = vmatpush.xpose.msra.mxu0 0.0
        %1891 = vmatpush.xpose.msra.mxu0 0.0
        %1892 = vmatpush.xpose.msra.mxu0 0.0
        %1893 = vmatpush.xpose.msra.mxu0 0.0
        %1894 = vmatpush.xpose.msra.mxu0 0.0
        %1895 = vmatpush.xpose.msra.mxu0 0.0
        %1896 = vmatpush.xpose.msra.mxu0 0.0
        %1897 = vmatpush.xpose.msra.mxu0 %v1880
        %1898 = vmatmul.f32.gmra.mxu0 %v1878
        %v1899 = vpop.f32.mrf.mxu0
        %v1900 = vadd.f32 %v448, %v1899
        %1901 = vdwg.mxu0
        %1902 = vrot.lane.b32.xlu0 %v513, 112
        %v1903 = vpop.permute.xlu0 %1902
        %1904 = vrot.lane.b32.xlu0 %v513, 80
        %v1905 = vpop.permute.xlu0 %1904
        %v1906 = vsel %vm524, %v1903, 0
        %v1908 = vsel %vm524, %v1905, 0
        %1910 = vmatpush.xpose.msra.mxu0 0.0
        %1911 = vmatpush.xpose.msra.mxu0 0.0
        %1912 = vmatpush.xpose.msra.mxu0 0.0
        %1913 = vmatpush.xpose.msra.mxu0 0.0
        %1914 = vmatpush.xpose.msra.mxu0 0.0
        %1915 = vmatpush.xpose.msra.mxu0 0.0
        %1916 = vmatpush.xpose.msra.mxu0 0.0
        %1917 = vmatpush.xpose.msra.mxu0 0.0
        %1918 = vmatpush.xpose.msra.mxu0 0.0
        %1919 = vmatpush.xpose.msra.mxu0 0.0
        %1920 = vmatpush.xpose.msra.mxu0 0.0
        %1921 = vmatpush.xpose.msra.mxu0 0.0
        %1922 = vmatpush.xpose.msra.mxu0 0.0
        %1923 = vmatpush.xpose.msra.mxu0 0.0
        %1924 = vmatpush.xpose.msra.mxu0 0.0
        %1925 = vmatpush.xpose.msra.mxu0 %v1908
        %1926 = vmatmul.f32.gmra.mxu0 %v1906
        %v1927 = vpop.f32.mrf.mxu0
        %v1928 = vadd.f32 %v448, %v1927
        %1929 = vdwg.mxu0
        %1930 = vrot.lane.b32.xlu0 %v516, 112
        %v1931 = vpop.permute.xlu0 %1930
        %1932 = vrot.lane.b32.xlu0 %v516, 80
        %v1933 = vpop.permute.xlu0 %1932
        %v1934 = vsel %vm524, %v1931, 0
        %v1936 = vsel %vm524, %v1933, 0
        %1938 = vmatpush.xpose.msra.mxu0 0.0
        %1939 = vmatpush.xpose.msra.mxu0 0.0
        %1940 = vmatpush.xpose.msra.mxu0 0.0
        %1941 = vmatpush.xpose.msra.mxu0 0.0
        %1942 = vmatpush.xpose.msra.mxu0 0.0
        %1943 = vmatpush.xpose.msra.mxu0 0.0
        %1944 = vmatpush.xpose.msra.mxu0 0.0
        %1945 = vmatpush.xpose.msra.mxu0 0.0
        %1946 = vmatpush.xpose.msra.mxu0 0.0
        %1947 = vmatpush.xpose.msra.mxu0 0.0
        %1948 = vmatpush.xpose.msra.mxu0 0.0
        %1949 = vmatpush.xpose.msra.mxu0 0.0
        %1950 = vmatpush.xpose.msra.mxu0 0.0
        %1951 = vmatpush.xpose.msra.mxu0 0.0
        %1952 = vmatpush.xpose.msra.mxu0 0.0
        %1953 = vmatpush.xpose.msra.mxu0 %v1936
        %1954 = vmatmul.f32.gmra.mxu0 %v1934
        %v1955 = vpop.f32.mrf.mxu0
        %v1956 = vadd.f32 %v448, %v1955
        %1957 = vdwg.mxu0
        %1958 = vrot.lane.b32.xlu0 %v519, 112
        %v1959 = vpop.permute.xlu0 %1958
        %1960 = vrot.lane.b32.xlu0 %v519, 80
        %v1961 = vpop.permute.xlu0 %1960
        %v1962 = vsel %vm524, %v1959, 0
        %v1964 = vsel %vm524, %v1961, 0
        %1966 = vmatpush.xpose.msra.mxu0 0.0
        %1967 = vmatpush.xpose.msra.mxu0 0.0
        %1968 = vmatpush.xpose.msra.mxu0 0.0
        %1969 = vmatpush.xpose.msra.mxu0 0.0
        %1970 = vmatpush.xpose.msra.mxu0 0.0
        %1971 = vmatpush.xpose.msra.mxu0 0.0
        %1972 = vmatpush.xpose.msra.mxu0 0.0
        %1973 = vmatpush.xpose.msra.mxu0 0.0
        %1974 = vmatpush.xpose.msra.mxu0 0.0
        %1975 = vmatpush.xpose.msra.mxu0 0.0
        %1976 = vmatpush.xpose.msra.mxu0 0.0
        %1977 = vmatpush.xpose.msra.mxu0 0.0
        %1978 = vmatpush.xpose.msra.mxu0 0.0
        %1979 = vmatpush.xpose.msra.mxu0 0.0
        %1980 = vmatpush.xpose.msra.mxu0 0.0
        %1981 = vmatpush.xpose.msra.mxu0 %v1964
        %1982 = vmatmul.f32.gmra.mxu0 %v1962
        %v1983 = vpop.f32.mrf.mxu0
        %v1984 = vadd.f32 %v448, %v1983
        %1985 = vdwg.mxu0
        %v1986 = vsel %vm524, %v1788, -inf
        %1987 = vmax.xlane.f32.xlu0 %v1986
        %v1988 = vpop.xlane.xlu0 %1987
        %v1989 = vsel %vm524, %v1816, -inf
        %1990 = vmax.xlane.f32.xlu0 %v1989
        %v1991 = vpop.xlane.xlu0 %1990
        %v1992 = vsel %vm524, %v1844, -inf
        %1993 = vmax.xlane.f32.xlu0 %v1992
        %v1994 = vpop.xlane.xlu0 %1993
        %v1995 = vsel %vm524, %v1872, -inf
        %1996 = vmax.xlane.f32.xlu0 %v1995
        %v1997 = vpop.xlane.xlu0 %1996
        %v1998 = vsel %vm524, %v1900, -inf
        %1999 = vmax.xlane.f32.xlu0 %v1998
        %v2000 = vpop.xlane.xlu0 %1999
        %v2001 = vsel %vm524, %v1928, -inf
        %2002 = vmax.xlane.f32.xlu0 %v2001
        %v2003 = vpop.xlane.xlu0 %2002
        %v2004 = vsel %vm524, %v1956, -inf
        %2005 = vmax.xlane.f32.xlu0 %v2004
        %v2006 = vpop.xlane.xlu0 %2005
        %v2007 = vsel %vm524, %v1984, -inf
        %2008 = vmax.xlane.f32.xlu0 %v2007
        %v2009 = vpop.xlane.xlu0 %2008
        %v2010 = vsub.f32 %v1788, %v1988
        %v2011 = vsub.f32 %v1816, %v1991
        %v2012 = vsub.f32 %v1844, %v1994
        %v2013 = vsub.f32 %v1872, %v1997
        %v2014 = vsub.f32 %v1900, %v2000
        %v2015 = vsub.f32 %v1928, %v2003
        %v2016 = vsub.f32 %v1956, %v2006
        %v2017 = vsub.f32 %v1984, %v2009
        %v2018 = vmul.f32 %v2010, 1.442695
        %v2019 = vpow.pop %v2018
        %v2020 = vmul.f32 %v2011, 1.442695
        %v2021 = vpow.pop %v2020
        %v2022 = vmul.f32 %v2012, 1.442695
        %v2023 = vpow.pop %v2022
        %v2024 = vmul.f32 %v2013, 1.442695
        %v2025 = vpow.pop %v2024
        %v2026 = vmul.f32 %v2014, 1.442695
        %v2027 = vpow.pop %v2026
        %v2028 = vmul.f32 %v2015, 1.442695
        %v2029 = vpow.pop %v2028
        %v2030 = vmul.f32 %v2016, 1.442695
        %v2031 = vpow.pop %v2030
        %v2032 = vmul.f32 %v2017, 1.442695
        %v2033 = vpow.pop %v2032
        %v2034 = vsel %vm524, %v2019, 0.0
        %2035 = vadd.xlane.f32.xlu0 %v2034
        %v2036 = vpop.xlane.xlu0 %2035
        %v2037 = vsel %vm524, %v2021, 0.0
        %2038 = vadd.xlane.f32.xlu0 %v2037
        %v2039 = vpop.xlane.xlu0 %2038
        %v2040 = vsel %vm524, %v2023, 0.0
        %2041 = vadd.xlane.f32.xlu0 %v2040
        %v2042 = vpop.xlane.xlu0 %2041
        %v2043 = vsel %vm524, %v2025, 0.0
        %2044 = vadd.xlane.f32.xlu0 %v2043
        %v2045 = vpop.xlane.xlu0 %2044
        %v2046 = vsel %vm524, %v2027, 0.0
        %2047 = vadd.xlane.f32.xlu0 %v2046
        %v2048 = vpop.xlane.xlu0 %2047
        %v2049 = vsel %vm524, %v2029, 0.0
        %2050 = vadd.xlane.f32.xlu0 %v2049
        %v2051 = vpop.xlane.xlu0 %2050
        %v2052 = vsel %vm524, %v2031, 0.0
        %2053 = vadd.xlane.f32.xlu0 %v2052
        %v2054 = vpop.xlane.xlu0 %2053
        %v2055 = vsel %vm524, %v2033, 0.0
        %2056 = vadd.xlane.f32.xlu0 %v2055
        %v2057 = vpop.xlane.xlu0 %2056
        %v2058 = vrcp.pop %v2036
        %v2059 = vmul.f32 %v2036, %v2058
        %v2060 = vsub.f32 1.0, %v2059
        %v2061 = vmul.f32 %v2058, %v2060
        %v2062 = vadd.f32 %v2058, %v2061
        %vm2063 = vweird.f32 %v2036
        %vm2064 = vweird.f32 %v2058
        %vm2065 = vmor %vm2063, %vm2064
        %v2066 = vsel %vm2065, %v2058, %v2062
        %v2067 = vand.u32 2147483647, %v2036
        %vm2068 = vcmp.eq.f32.partialorder %v2067, 8.507059e+37
        %v2069 = vand.u32 %v2036, 2147483648
        %v2070 = vor.u32 1.1754944e-38, %v2069
        %v2071 = vsel %vm2068, %v2070, %v2066
        %v2072 = vmul.f32 %v2019, %v2071
        %v2073 = vrcp.pop %v2039
        %v2074 = vmul.f32 %v2039, %v2073
        %v2075 = vsub.f32 1.0, %v2074
        %v2076 = vmul.f32 %v2073, %v2075
        %v2077 = vadd.f32 %v2073, %v2076
        %vm2078 = vweird.f32 %v2039
        %vm2079 = vweird.f32 %v2073
        %vm2080 = vmor %vm2078, %vm2079
        %v2081 = vsel %vm2080, %v2073, %v2077
        %v2082 = vand.u32 2147483647, %v2039
        %vm2083 = vcmp.eq.f32.partialorder %v2082, 8.507059e+37
        %v2084 = vand.u32 %v2039, 2147483648
        %v2085 = vor.u32 1.1754944e-38, %v2084
        %v2086 = vsel %vm2083, %v2085, %v2081
        %v2087 = vmul.f32 %v2021, %v2086
        %v2088 = vrcp.pop %v2042
        %v2089 = vmul.f32 %v2042, %v2088
        %v2090 = vsub.f32 1.0, %v2089
        %v2091 = vmul.f32 %v2088, %v2090
        %v2092 = vadd.f32 %v2088, %v2091
        %vm2093 = vweird.f32 %v2042
        %vm2094 = vweird.f32 %v2088
        %vm2095 = vmor %vm2093, %vm2094
        %v2096 = vsel %vm2095, %v2088, %v2092
        %v2097 = vand.u32 2147483647, %v2042
        %vm2098 = vcmp.eq.f32.partialorder %v2097, 8.507059e+37
        %v2099 = vand.u32 %v2042, 2147483648
        %v2100 = vor.u32 1.1754944e-38, %v2099
        %v2101 = vsel %vm2098, %v2100, %v2096
        %v2102 = vmul.f32 %v2023, %v2101
        %v2103 = vrcp.pop %v2045
        %v2104 = vmul.f32 %v2045, %v2103
        %v2105 = vsub.f32 1.0, %v2104
        %v2106 = vmul.f32 %v2103, %v2105
        %v2107 = vadd.f32 %v2103, %v2106
        %vm2108 = vweird.f32 %v2045
        %vm2109 = vweird.f32 %v2103
        %vm2110 = vmor %vm2108, %vm2109
        %v2111 = vsel %vm2110, %v2103, %v2107
        %v2112 = vand.u32 2147483647, %v2045
        %vm2113 = vcmp.eq.f32.partialorder %v2112, 8.507059e+37
        %v2114 = vand.u32 %v2045, 2147483648
        %v2115 = vor.u32 1.1754944e-38, %v2114
        %v2116 = vsel %vm2113, %v2115, %v2111
        %v2117 = vmul.f32 %v2025, %v2116
        %v2118 = vrcp.pop %v2048
        %v2119 = vmul.f32 %v2048, %v2118
        %v2120 = vsub.f32 1.0, %v2119
        %v2121 = vmul.f32 %v2118, %v2120
        %v2122 = vadd.f32 %v2118, %v2121
        %vm2123 = vweird.f32 %v2048
        %vm2124 = vweird.f32 %v2118
        %vm2125 = vmor %vm2123, %vm2124
        %v2126 = vsel %vm2125, %v2118, %v2122
        %v2127 = vand.u32 2147483647, %v2048
        %vm2128 = vcmp.eq.f32.partialorder %v2127, 8.507059e+37
        %v2129 = vand.u32 %v2048, 2147483648
        %v2130 = vor.u32 1.1754944e-38, %v2129
        %v2131 = vsel %vm2128, %v2130, %v2126
        %v2132 = vmul.f32 %v2027, %v2131
        %v2133 = vrcp.pop %v2051
        %v2134 = vmul.f32 %v2051, %v2133
        %v2135 = vsub.f32 1.0, %v2134
        %v2136 = vmul.f32 %v2133, %v2135
        %v2137 = vadd.f32 %v2133, %v2136
        %vm2138 = vweird.f32 %v2051
        %vm2139 = vweird.f32 %v2133
        %vm2140 = vmor %vm2138, %vm2139
        %v2141 = vsel %vm2140, %v2133, %v2137
        %v2142 = vand.u32 2147483647, %v2051
        %vm2143 = vcmp.eq.f32.partialorder %v2142, 8.507059e+37
        %v2144 = vand.u32 %v2051, 2147483648
        %v2145 = vor.u32 1.1754944e-38, %v2144
        %v2146 = vsel %vm2143, %v2145, %v2141
        %v2147 = vmul.f32 %v2029, %v2146
        %v2148 = vrcp.pop %v2054
        %v2149 = vmul.f32 %v2054, %v2148
        %v2150 = vsub.f32 1.0, %v2149
        %v2151 = vmul.f32 %v2148, %v2150
        %v2152 = vadd.f32 %v2148, %v2151
        %vm2153 = vweird.f32 %v2054
        %vm2154 = vweird.f32 %v2148
        %vm2155 = vmor %vm2153, %vm2154
        %v2156 = vsel %vm2155, %v2148, %v2152
        %v2157 = vand.u32 2147483647, %v2054
        %vm2158 = vcmp.eq.f32.partialorder %v2157, 8.507059e+37
        %v2159 = vand.u32 %v2054, 2147483648
        %v2160 = vor.u32 1.1754944e-38, %v2159
        %v2161 = vsel %vm2158, %v2160, %v2156
        %v2162 = vmul.f32 %v2031, %v2161
        %v2163 = vrcp.pop %v2057
        %v2164 = vmul.f32 %v2057, %v2163
        %v2165 = vsub.f32 1.0, %v2164
        %v2166 = vmul.f32 %v2163, %v2165
        %v2167 = vadd.f32 %v2163, %v2166
        %vm2168 = vweird.f32 %v2057
        %vm2169 = vweird.f32 %v2163
        %vm2170 = vmor %vm2168, %vm2169
        %v2171 = vsel %vm2170, %v2163, %v2167
        %v2172 = vand.u32 2147483647, %v2057
        %vm2173 = vcmp.eq.f32.partialorder %v2172, 8.507059e+37
        %v2174 = vand.u32 %v2057, 2147483648
        %v2175 = vor.u32 1.1754944e-38, %v2174
        %v2176 = vsel %vm2173, %v2175, %v2171
        %v2177 = vmul.f32 %v2033, %v2176
        %2178 = vrot.lane.b32.xlu0 %v498, 48
        %v2179 = vpop.permute.xlu0 %2178
        %v2182 = vsel %vm524, %v2072, 0
        %2184 = vmatpush.msra.mxu0 0.0
        %2185 = vmatpush.msra.mxu0 0.0
        %2186 = vmatpush.msra.mxu0 0.0
        %2187 = vmatpush.msra.mxu0 0.0
        %2188 = vmatpush.msra.mxu0 0.0
        %2189 = vmatpush.msra.mxu0 0.0
        %2190 = vmatpush.msra.mxu0 0.0
        %2191 = vmatpush.msra.mxu0 0.0
        %2192 = vmatpush.msra.mxu0 0.0
        %2193 = vmatpush.msra.mxu0 0.0
        %2194 = vmatpush.msra.mxu0 0.0
        %2195 = vmatpush.msra.mxu0 0.0
        %2196 = vmatpush.msra.mxu0 0.0
        %2197 = vmatpush.msra.mxu0 0.0
        %2198 = vmatpush.msra.mxu0 0.0
        %2199 = vmatpush.msra.mxu0 %v2179
        %2200 = vmatmul.f32.gmra.mxu0 %v2182
        %v2201 = vpop.f32.mrf.mxu0
        %v2202 = vadd.f32 0.0, %v2201
        %2203 = vdwg.mxu0
        %2204 = vrot.lane.b32.xlu0 %v501, 48
        %v2205 = vpop.permute.xlu0 %2204
        %v2208 = vsel %vm524, %v2087, 0
        %2210 = vmatpush.msra.mxu0 0.0
        %2211 = vmatpush.msra.mxu0 0.0
        %2212 = vmatpush.msra.mxu0 0.0
        %2213 = vmatpush.msra.mxu0 0.0
        %2214 = vmatpush.msra.mxu0 0.0
        %2215 = vmatpush.msra.mxu0 0.0
        %2216 = vmatpush.msra.mxu0 0.0
        %2217 = vmatpush.msra.mxu0 0.0
        %2218 = vmatpush.msra.mxu0 0.0
        %2219 = vmatpush.msra.mxu0 0.0
        %2220 = vmatpush.msra.mxu0 0.0
        %2221 = vmatpush.msra.mxu0 0.0
        %2222 = vmatpush.msra.mxu0 0.0
        %2223 = vmatpush.msra.mxu0 0.0
        %2224 = vmatpush.msra.mxu0 0.0
        %2225 = vmatpush.msra.mxu0 %v2205
        %2226 = vmatmul.f32.gmra.mxu0 %v2208
        %v2227 = vpop.f32.mrf.mxu0
        %v2228 = vadd.f32 0.0, %v2227
        %2229 = vdwg.mxu0
        %2230 = vrot.lane.b32.xlu0 %v504, 48
        %v2231 = vpop.permute.xlu0 %2230
        %v2234 = vsel %vm524, %v2102, 0
        %2236 = vmatpush.msra.mxu0 0.0
        %2237 = vmatpush.msra.mxu0 0.0
        %2238 = vmatpush.msra.mxu0 0.0
        %2239 = vmatpush.msra.mxu0 0.0
        %2240 = vmatpush.msra.mxu0 0.0
        %2241 = vmatpush.msra.mxu0 0.0
        %2242 = vmatpush.msra.mxu0 0.0
        %2243 = vmatpush.msra.mxu0 0.0
        %2244 = vmatpush.msra.mxu0 0.0
        %2245 = vmatpush.msra.mxu0 0.0
        %2246 = vmatpush.msra.mxu0 0.0
        %2247 = vmatpush.msra.mxu0 0.0
        %2248 = vmatpush.msra.mxu0 0.0
        %2249 = vmatpush.msra.mxu0 0.0
        %2250 = vmatpush.msra.mxu0 0.0
        %2251 = vmatpush.msra.mxu0 %v2231
        %2252 = vmatmul.f32.gmra.mxu0 %v2234
        %v2253 = vpop.f32.mrf.mxu0
        %v2254 = vadd.f32 0.0, %v2253
        %2255 = vdwg.mxu0
        %2256 = vrot.lane.b32.xlu0 %v507, 48
        %v2257 = vpop.permute.xlu0 %2256
        %v2260 = vsel %vm524, %v2117, 0
        %2262 = vmatpush.msra.mxu0 0.0
        %2263 = vmatpush.msra.mxu0 0.0
        %2264 = vmatpush.msra.mxu0 0.0
        %2265 = vmatpush.msra.mxu0 0.0
        %2266 = vmatpush.msra.mxu0 0.0
        %2267 = vmatpush.msra.mxu0 0.0
        %2268 = vmatpush.msra.mxu0 0.0
        %2269 = vmatpush.msra.mxu0 0.0
        %2270 = vmatpush.msra.mxu0 0.0
        %2271 = vmatpush.msra.mxu0 0.0
        %2272 = vmatpush.msra.mxu0 0.0
        %2273 = vmatpush.msra.mxu0 0.0
        %2274 = vmatpush.msra.mxu0 0.0
        %2275 = vmatpush.msra.mxu0 0.0
        %2276 = vmatpush.msra.mxu0 0.0
        %2277 = vmatpush.msra.mxu0 %v2257
        %2278 = vmatmul.f32.gmra.mxu0 %v2260
        %v2279 = vpop.f32.mrf.mxu0
        %v2280 = vadd.f32 0.0, %v2279
        %2281 = vdwg.mxu0
        %2282 = vrot.lane.b32.xlu0 %v510, 48
        %v2283 = vpop.permute.xlu0 %2282
        %v2286 = vsel %vm524, %v2132, 0
        %2288 = vmatpush.msra.mxu0 0.0
        %2289 = vmatpush.msra.mxu0 0.0
        %2290 = vmatpush.msra.mxu0 0.0
        %2291 = vmatpush.msra.mxu0 0.0
        %2292 = vmatpush.msra.mxu0 0.0
        %2293 = vmatpush.msra.mxu0 0.0
        %2294 = vmatpush.msra.mxu0 0.0
        %2295 = vmatpush.msra.mxu0 0.0
        %2296 = vmatpush.msra.mxu0 0.0
        %2297 = vmatpush.msra.mxu0 0.0
        %2298 = vmatpush.msra.mxu0 0.0
        %2299 = vmatpush.msra.mxu0 0.0
        %2300 = vmatpush.msra.mxu0 0.0
        %2301 = vmatpush.msra.mxu0 0.0
        %2302 = vmatpush.msra.mxu0 0.0
        %2303 = vmatpush.msra.mxu0 %v2283
        %2304 = vmatmul.f32.gmra.mxu0 %v2286
        %v2305 = vpop.f32.mrf.mxu0
        %v2306 = vadd.f32 0.0, %v2305
        %2307 = vdwg.mxu0
        %2308 = vrot.lane.b32.xlu0 %v513, 48
        %v2309 = vpop.permute.xlu0 %2308
        %v2312 = vsel %vm524, %v2147, 0
        %2314 = vmatpush.msra.mxu0 0.0
        %2315 = vmatpush.msra.mxu0 0.0
        %2316 = vmatpush.msra.mxu0 0.0
        %2317 = vmatpush.msra.mxu0 0.0
        %2318 = vmatpush.msra.mxu0 0.0
        %2319 = vmatpush.msra.mxu0 0.0
        %2320 = vmatpush.msra.mxu0 0.0
        %2321 = vmatpush.msra.mxu0 0.0
        %2322 = vmatpush.msra.mxu0 0.0
        %2323 = vmatpush.msra.mxu0 0.0
        %2324 = vmatpush.msra.mxu0 0.0
        %2325 = vmatpush.msra.mxu0 0.0
        %2326 = vmatpush.msra.mxu0 0.0
        %2327 = vmatpush.msra.mxu0 0.0
        %2328 = vmatpush.msra.mxu0 0.0
        %2329 = vmatpush.msra.mxu0 %v2309
        %2330 = vmatmul.f32.gmra.mxu0 %v2312
        %v2331 = vpop.f32.mrf.mxu0
        %v2332 = vadd.f32 0.0, %v2331
        %2333 = vdwg.mxu0
        %2334 = vrot.lane.b32.xlu0 %v516, 48
        %v2335 = vpop.permute.xlu0 %2334
        %v2338 = vsel %vm524, %v2162, 0
        %2340 = vmatpush.msra.mxu0 0.0
        %2341 = vmatpush.msra.mxu0 0.0
        %2342 = vmatpush.msra.mxu0 0.0
        %2343 = vmatpush.msra.mxu0 0.0
        %2344 = vmatpush.msra.mxu0 0.0
        %2345 = vmatpush.msra.mxu0 0.0
        %2346 = vmatpush.msra.mxu0 0.0
        %2347 = vmatpush.msra.mxu0 0.0
        %2348 = vmatpush.msra.mxu0 0.0
        %2349 = vmatpush.msra.mxu0 0.0
        %2350 = vmatpush.msra.mxu0 0.0
        %2351 = vmatpush.msra.mxu0 0.0
        %2352 = vmatpush.msra.mxu0 0.0
        %2353 = vmatpush.msra.mxu0 0.0
        %2354 = vmatpush.msra.mxu0 0.0
        %2355 = vmatpush.msra.mxu0 %v2335
        %2356 = vmatmul.f32.gmra.mxu0 %v2338
        %v2357 = vpop.f32.mrf.mxu0
        %v2358 = vadd.f32 0.0, %v2357
        %2359 = vdwg.mxu0
        %2360 = vrot.lane.b32.xlu0 %v519, 48
        %v2361 = vpop.permute.xlu0 %2360
        %v2364 = vsel %vm524, %v2177, 0
        %2366 = vmatpush.msra.mxu0 0.0
        %2367 = vmatpush.msra.mxu0 0.0
        %2368 = vmatpush.msra.mxu0 0.0
        %2369 = vmatpush.msra.mxu0 0.0
        %2370 = vmatpush.msra.mxu0 0.0
        %2371 = vmatpush.msra.mxu0 0.0
        %2372 = vmatpush.msra.mxu0 0.0
        %2373 = vmatpush.msra.mxu0 0.0
        %2374 = vmatpush.msra.mxu0 0.0
        %2375 = vmatpush.msra.mxu0 0.0
        %2376 = vmatpush.msra.mxu0 0.0
        %2377 = vmatpush.msra.mxu0 0.0
        %2378 = vmatpush.msra.mxu0 0.0
        %2379 = vmatpush.msra.mxu0 0.0
        %2380 = vmatpush.msra.mxu0 0.0
        %2381 = vmatpush.msra.mxu0 %v2361
        %2382 = vmatmul.f32.gmra.mxu0 %v2364
        %v2383 = vpop.f32.mrf.mxu0
        %v2384 = vadd.f32 0.0, %v2383
        %2385 = vdwg.mxu0
        %2386 = vrot.lane.b32.xlu0 %v498, 104
        %v2387 = vpop.permute.xlu0 %2386
        %2388 = vrot.lane.b32.xlu0 %v498, 72
        %v2389 = vpop.permute.xlu0 %2388
        %v2390 = vsel %vm524, %v2387, 0
        %v2392 = vsel %vm524, %v2389, 0
        %2394 = vmatpush.xpose.msra.mxu0 0.0
        %2395 = vmatpush.xpose.msra.mxu0 0.0
        %2396 = vmatpush.xpose.msra.mxu0 0.0
        %2397 = vmatpush.xpose.msra.mxu0 0.0
        %2398 = vmatpush.xpose.msra.mxu0 0.0
        %2399 = vmatpush.xpose.msra.mxu0 0.0
        %2400 = vmatpush.xpose.msra.mxu0 0.0
        %2401 = vmatpush.xpose.msra.mxu0 0.0
        %2402 = vmatpush.xpose.msra.mxu0 0.0
        %2403 = vmatpush.xpose.msra.mxu0 0.0
        %2404 = vmatpush.xpose.msra.mxu0 0.0
        %2405 = vmatpush.xpose.msra.mxu0 0.0
        %2406 = vmatpush.xpose.msra.mxu0 0.0
        %2407 = vmatpush.xpose.msra.mxu0 0.0
        %2408 = vmatpush.xpose.msra.mxu0 0.0
        %2409 = vmatpush.xpose.msra.mxu0 %v2392
        %2410 = vmatmul.f32.gmra.mxu0 %v2390
        %v2411 = vpop.f32.mrf.mxu0
        %v2412 = vadd.f32 %v448, %v2411
        %2413 = vdwg.mxu0
        %2414 = vrot.lane.b32.xlu0 %v501, 104
        %v2415 = vpop.permute.xlu0 %2414
        %2416 = vrot.lane.b32.xlu0 %v501, 72
        %v2417 = vpop.permute.xlu0 %2416
        %v2418 = vsel %vm524, %v2415, 0
        %v2420 = vsel %vm524, %v2417, 0
        %2422 = vmatpush.xpose.msra.mxu0 0.0
        %2423 = vmatpush.xpose.msra.mxu0 0.0
        %2424 = vmatpush.xpose.msra.mxu0 0.0
        %2425 = vmatpush.xpose.msra.mxu0 0.0
        %2426 = vmatpush.xpose.msra.mxu0 0.0
        %2427 = vmatpush.xpose.msra.mxu0 0.0
        %2428 = vmatpush.xpose.msra.mxu0 0.0
        %2429 = vmatpush.xpose.msra.mxu0 0.0
        %2430 = vmatpush.xpose.msra.mxu0 0.0
        %2431 = vmatpush.xpose.msra.mxu0 0.0
        %2432 = vmatpush.xpose.msra.mxu0 0.0
        %2433 = vmatpush.xpose.msra.mxu0 0.0
        %2434 = vmatpush.xpose.msra.mxu0 0.0
        %2435 = vmatpush.xpose.msra.mxu0 0.0
        %2436 = vmatpush.xpose.msra.mxu0 0.0
        %2437 = vmatpush.xpose.msra.mxu0 %v2420
        %2438 = vmatmul.f32.gmra.mxu0 %v2418
        %v2439 = vpop.f32.mrf.mxu0
        %v2440 = vadd.f32 %v448, %v2439
        %2441 = vdwg.mxu0
        %2442 = vrot.lane.b32.xlu0 %v504, 104
        %v2443 = vpop.permute.xlu0 %2442
        %2444 = vrot.lane.b32.xlu0 %v504, 72
        %v2445 = vpop.permute.xlu0 %2444
        %v2446 = vsel %vm524, %v2443, 0
        %v2448 = vsel %vm524, %v2445, 0
        %2450 = vmatpush.xpose.msra.mxu0 0.0
        %2451 = vmatpush.xpose.msra.mxu0 0.0
        %2452 = vmatpush.xpose.msra.mxu0 0.0
        %2453 = vmatpush.xpose.msra.mxu0 0.0
        %2454 = vmatpush.xpose.msra.mxu0 0.0
        %2455 = vmatpush.xpose.msra.mxu0 0.0
        %2456 = vmatpush.xpose.msra.mxu0 0.0
        %2457 = vmatpush.xpose.msra.mxu0 0.0
        %2458 = vmatpush.xpose.msra.mxu0 0.0
        %2459 = vmatpush.xpose.msra.mxu0 0.0
        %2460 = vmatpush.xpose.msra.mxu0 0.0
        %2461 = vmatpush.xpose.msra.mxu0 0.0
        %2462 = vmatpush.xpose.msra.mxu0 0.0
        %2463 = vmatpush.xpose.msra.mxu0 0.0
        %2464 = vmatpush.xpose.msra.mxu0 0.0
        %2465 = vmatpush.xpose.msra.mxu0 %v2448
        %2466 = vmatmul.f32.gmra.mxu0 %v2446
        %v2467 = vpop.f32.mrf.mxu0
        %v2468 = vadd.f32 %v448, %v2467
        %2469 = vdwg.mxu0
        %2470 = vrot.lane.b32.xlu0 %v507, 104
        %v2471 = vpop.permute.xlu0 %2470
        %2472 = vrot.lane.b32.xlu0 %v507, 72
        %v2473 = vpop.permute.xlu0 %2472
        %v2474 = vsel %vm524, %v2471, 0
        %v2476 = vsel %vm524, %v2473, 0
        %2478 = vmatpush.xpose.msra.mxu0 0.0
        %2479 = vmatpush.xpose.msra.mxu0 0.0
        %2480 = vmatpush.xpose.msra.mxu0 0.0
        %2481 = vmatpush.xpose.msra.mxu0 0.0
        %2482 = vmatpush.xpose.msra.mxu0 0.0
        %2483 = vmatpush.xpose.msra.mxu0 0.0
        %2484 = vmatpush.xpose.msra.mxu0 0.0
        %2485 = vmatpush.xpose.msra.mxu0 0.0
        %2486 = vmatpush.xpose.msra.mxu0 0.0
        %2487 = vmatpush.xpose.msra.mxu0 0.0
        %2488 = vmatpush.xpose.msra.mxu0 0.0
        %2489 = vmatpush.xpose.msra.mxu0 0.0
        %2490 = vmatpush.xpose.msra.mxu0 0.0
        %2491 = vmatpush.xpose.msra.mxu0 0.0
        %2492 = vmatpush.xpose.msra.mxu0 0.0
        %2493 = vmatpush.xpose.msra.mxu0 %v2476
        %2494 = vmatmul.f32.gmra.mxu0 %v2474
        %v2495 = vpop.f32.mrf.mxu0
        %v2496 = vadd.f32 %v448, %v2495
        %2497 = vdwg.mxu0
        %2498 = vrot.lane.b32.xlu0 %v510, 104
        %v2499 = vpop.permute.xlu0 %2498
        %2500 = vrot.lane.b32.xlu0 %v510, 72
        %v2501 = vpop.permute.xlu0 %2500
        %v2502 = vsel %vm524, %v2499, 0
        %v2504 = vsel %vm524, %v2501, 0
        %2506 = vmatpush.xpose.msra.mxu0 0.0
        %2507 = vmatpush.xpose.msra.mxu0 0.0
        %2508 = vmatpush.xpose.msra.mxu0 0.0
        %2509 = vmatpush.xpose.msra.mxu0 0.0
        %2510 = vmatpush.xpose.msra.mxu0 0.0
        %2511 = vmatpush.xpose.msra.mxu0 0.0
        %2512 = vmatpush.xpose.msra.mxu0 0.0
        %2513 = vmatpush.xpose.msra.mxu0 0.0
        %2514 = vmatpush.xpose.msra.mxu0 0.0
        %2515 = vmatpush.xpose.msra.mxu0 0.0
        %2516 = vmatpush.xpose.msra.mxu0 0.0
        %2517 = vmatpush.xpose.msra.mxu0 0.0
        %2518 = vmatpush.xpose.msra.mxu0 0.0
        %2519 = vmatpush.xpose.msra.mxu0 0.0
        %2520 = vmatpush.xpose.msra.mxu0 0.0
        %2521 = vmatpush.xpose.msra.mxu0 %v2504
        %2522 = vmatmul.f32.gmra.mxu0 %v2502
        %v2523 = vpop.f32.mrf.mxu0
        %v2524 = vadd.f32 %v448, %v2523
        %2525 = vdwg.mxu0
        %2526 = vrot.lane.b32.xlu0 %v513, 104
        %v2527 = vpop.permute.xlu0 %2526
        %2528 = vrot.lane.b32.xlu0 %v513, 72
        %v2529 = vpop.permute.xlu0 %2528
        %v2530 = vsel %vm524, %v2527, 0
        %v2532 = vsel %vm524, %v2529, 0
        %2534 = vmatpush.xpose.msra.mxu0 0.0
        %2535 = vmatpush.xpose.msra.mxu0 0.0
        %2536 = vmatpush.xpose.msra.mxu0 0.0
        %2537 = vmatpush.xpose.msra.mxu0 0.0
        %2538 = vmatpush.xpose.msra.mxu0 0.0
        %2539 = vmatpush.xpose.msra.mxu0 0.0
        %2540 = vmatpush.xpose.msra.mxu0 0.0
        %2541 = vmatpush.xpose.msra.mxu0 0.0
        %2542 = vmatpush.xpose.msra.mxu0 0.0
        %2543 = vmatpush.xpose.msra.mxu0 0.0
        %2544 = vmatpush.xpose.msra.mxu0 0.0
        %2545 = vmatpush.xpose.msra.mxu0 0.0
        %2546 = vmatpush.xpose.msra.mxu0 0.0
        %2547 = vmatpush.xpose.msra.mxu0 0.0
        %2548 = vmatpush.xpose.msra.mxu0 0.0
        %2549 = vmatpush.xpose.msra.mxu0 %v2532
        %2550 = vmatmul.f32.gmra.mxu0 %v2530
        %v2551 = vpop.f32.mrf.mxu0
        %v2552 = vadd.f32 %v448, %v2551
        %2553 = vdwg.mxu0
        %2554 = vrot.lane.b32.xlu0 %v516, 104
        %v2555 = vpop.permute.xlu0 %2554
        %2556 = vrot.lane.b32.xlu0 %v516, 72
        %v2557 = vpop.permute.xlu0 %2556
        %v2558 = vsel %vm524, %v2555, 0
        %v2560 = vsel %vm524, %v2557, 0
        %2562 = vmatpush.xpose.msra.mxu0 0.0
        %2563 = vmatpush.xpose.msra.mxu0 0.0
        %2564 = vmatpush.xpose.msra.mxu0 0.0
        %2565 = vmatpush.xpose.msra.mxu0 0.0
        %2566 = vmatpush.xpose.msra.mxu0 0.0
        %2567 = vmatpush.xpose.msra.mxu0 0.0
        %2568 = vmatpush.xpose.msra.mxu0 0.0
        %2569 = vmatpush.xpose.msra.mxu0 0.0
        %2570 = vmatpush.xpose.msra.mxu0 0.0
        %2571 = vmatpush.xpose.msra.mxu0 0.0
        %2572 = vmatpush.xpose.msra.mxu0 0.0
        %2573 = vmatpush.xpose.msra.mxu0 0.0
        %2574 = vmatpush.xpose.msra.mxu0 0.0
        %2575 = vmatpush.xpose.msra.mxu0 0.0
        %2576 = vmatpush.xpose.msra.mxu0 0.0
        %2577 = vmatpush.xpose.msra.mxu0 %v2560
        %2578 = vmatmul.f32.gmra.mxu0 %v2558
        %v2579 = vpop.f32.mrf.mxu0
        %v2580 = vadd.f32 %v448, %v2579
        %2581 = vdwg.mxu0
        %2582 = vrot.lane.b32.xlu0 %v519, 104
        %v2583 = vpop.permute.xlu0 %2582
        %2584 = vrot.lane.b32.xlu0 %v519, 72
        %v2585 = vpop.permute.xlu0 %2584
        %v2586 = vsel %vm524, %v2583, 0
        %v2588 = vsel %vm524, %v2585, 0
        %2590 = vmatpush.xpose.msra.mxu0 0.0
        %2591 = vmatpush.xpose.msra.mxu0 0.0
        %2592 = vmatpush.xpose.msra.mxu0 0.0
        %2593 = vmatpush.xpose.msra.mxu0 0.0
        %2594 = vmatpush.xpose.msra.mxu0 0.0
        %2595 = vmatpush.xpose.msra.mxu0 0.0
        %2596 = vmatpush.xpose.msra.mxu0 0.0
        %2597 = vmatpush.xpose.msra.mxu0 0.0
        %2598 = vmatpush.xpose.msra.mxu0 0.0
        %2599 = vmatpush.xpose.msra.mxu0 0.0
        %2600 = vmatpush.xpose.msra.mxu0 0.0
        %2601 = vmatpush.xpose.msra.mxu0 0.0
        %2602 = vmatpush.xpose.msra.mxu0 0.0
        %2603 = vmatpush.xpose.msra.mxu0 0.0
        %2604 = vmatpush.xpose.msra.mxu0 0.0
        %2605 = vmatpush.xpose.msra.mxu0 %v2588
        %2606 = vmatmul.f32.gmra.mxu0 %v2586
        %v2607 = vpop.f32.mrf.mxu0
        %v2608 = vadd.f32 %v448, %v2607
        %2609 = vdwg.mxu0
        %v2610 = vsel %vm524, %v2412, -inf
        %2611 = vmax.xlane.f32.xlu0 %v2610
        %v2612 = vpop.xlane.xlu0 %2611
        %v2613 = vsel %vm524, %v2440, -inf
        %2614 = vmax.xlane.f32.xlu0 %v2613
        %v2615 = vpop.xlane.xlu0 %2614
        %v2616 = vsel %vm524, %v2468, -inf
        %2617 = vmax.xlane.f32.xlu0 %v2616
        %v2618 = vpop.xlane.xlu0 %2617
        %v2619 = vsel %vm524, %v2496, -inf
        %2620 = vmax.xlane.f32.xlu0 %v2619
        %v2621 = vpop.xlane.xlu0 %2620
        %v2622 = vsel %vm524, %v2524, -inf
        %2623 = vmax.xlane.f32.xlu0 %v2622
        %v2624 = vpop.xlane.xlu0 %2623
        %v2625 = vsel %vm524, %v2552, -inf
        %2626 = vmax.xlane.f32.xlu0 %v2625
        %v2627 = vpop.xlane.xlu0 %2626
        %v2628 = vsel %vm524, %v2580, -inf
        %2629 = vmax.xlane.f32.xlu0 %v2628
        %v2630 = vpop.xlane.xlu0 %2629
        %v2631 = vsel %vm524, %v2608, -inf
        %2632 = vmax.xlane.f32.xlu0 %v2631
        %v2633 = vpop.xlane.xlu0 %2632
        %v2634 = vsub.f32 %v2412, %v2612
        %v2635 = vsub.f32 %v2440, %v2615
        %v2636 = vsub.f32 %v2468, %v2618
        %v2637 = vsub.f32 %v2496, %v2621
        %v2638 = vsub.f32 %v2524, %v2624
        %v2639 = vsub.f32 %v2552, %v2627
        %v2640 = vsub.f32 %v2580, %v2630
        %v2641 = vsub.f32 %v2608, %v2633
        %v2642 = vmul.f32 %v2634, 1.442695
        %v2643 = vpow.pop %v2642
        %v2644 = vmul.f32 %v2635, 1.442695
        %v2645 = vpow.pop %v2644
        %v2646 = vmul.f32 %v2636, 1.442695
        %v2647 = vpow.pop %v2646
        %v2648 = vmul.f32 %v2637, 1.442695
        %v2649 = vpow.pop %v2648
        %v2650 = vmul.f32 %v2638, 1.442695
        %v2651 = vpow.pop %v2650
        %v2652 = vmul.f32 %v2639, 1.442695
        %v2653 = vpow.pop %v2652
        %v2654 = vmul.f32 %v2640, 1.442695
        %v2655 = vpow.pop %v2654
        %v2656 = vmul.f32 %v2641, 1.442695
        %v2657 = vpow.pop %v2656
        %v2658 = vsel %vm524, %v2643, 0.0
        %2659 = vadd.xlane.f32.xlu0 %v2658
        %v2660 = vpop.xlane.xlu0 %2659
        %v2661 = vsel %vm524, %v2645, 0.0
        %2662 = vadd.xlane.f32.xlu0 %v2661
        %v2663 = vpop.xlane.xlu0 %2662
        %v2664 = vsel %vm524, %v2647, 0.0
        %2665 = vadd.xlane.f32.xlu0 %v2664
        %v2666 = vpop.xlane.xlu0 %2665
        %v2667 = vsel %vm524, %v2649, 0.0
        %2668 = vadd.xlane.f32.xlu0 %v2667
        %v2669 = vpop.xlane.xlu0 %2668
        %v2670 = vsel %vm524, %v2651, 0.0
        %2671 = vadd.xlane.f32.xlu0 %v2670
        %v2672 = vpop.xlane.xlu0 %2671
        %v2673 = vsel %vm524, %v2653, 0.0
        %2674 = vadd.xlane.f32.xlu0 %v2673
        %v2675 = vpop.xlane.xlu0 %2674
        %v2676 = vsel %vm524, %v2655, 0.0
        %2677 = vadd.xlane.f32.xlu0 %v2676
        %v2678 = vpop.xlane.xlu0 %2677
        %v2679 = vsel %vm524, %v2657, 0.0
        %2680 = vadd.xlane.f32.xlu0 %v2679
        %v2681 = vpop.xlane.xlu0 %2680
        %v2682 = vrcp.pop %v2660
        %v2683 = vmul.f32 %v2660, %v2682
        %v2684 = vsub.f32 1.0, %v2683
        %v2685 = vmul.f32 %v2682, %v2684
        %v2686 = vadd.f32 %v2682, %v2685
        %vm2687 = vweird.f32 %v2660
        %vm2688 = vweird.f32 %v2682
        %vm2689 = vmor %vm2687, %vm2688
        %v2690 = vsel %vm2689, %v2682, %v2686
        %v2691 = vand.u32 2147483647, %v2660
        %vm2692 = vcmp.eq.f32.partialorder %v2691, 8.507059e+37
        %v2693 = vand.u32 %v2660, 2147483648
        %v2694 = vor.u32 1.1754944e-38, %v2693
        %v2695 = vsel %vm2692, %v2694, %v2690
        %v2696 = vmul.f32 %v2643, %v2695
        %v2697 = vrcp.pop %v2663
        %v2698 = vmul.f32 %v2663, %v2697
        %v2699 = vsub.f32 1.0, %v2698
        %v2700 = vmul.f32 %v2697, %v2699
        %v2701 = vadd.f32 %v2697, %v2700
        %vm2702 = vweird.f32 %v2663
        %vm2703 = vweird.f32 %v2697
        %vm2704 = vmor %vm2702, %vm2703
        %v2705 = vsel %vm2704, %v2697, %v2701
        %v2706 = vand.u32 2147483647, %v2663
        %vm2707 = vcmp.eq.f32.partialorder %v2706, 8.507059e+37
        %v2708 = vand.u32 %v2663, 2147483648
        %v2709 = vor.u32 1.1754944e-38, %v2708
        %v2710 = vsel %vm2707, %v2709, %v2705
        %v2711 = vmul.f32 %v2645, %v2710
        %v2712 = vrcp.pop %v2666
        %v2713 = vmul.f32 %v2666, %v2712
        %v2714 = vsub.f32 1.0, %v2713
        %v2715 = vmul.f32 %v2712, %v2714
        %v2716 = vadd.f32 %v2712, %v2715
        %vm2717 = vweird.f32 %v2666
        %vm2718 = vweird.f32 %v2712
        %vm2719 = vmor %vm2717, %vm2718
        %v2720 = vsel %vm2719, %v2712, %v2716
        %v2721 = vand.u32 2147483647, %v2666
        %vm2722 = vcmp.eq.f32.partialorder %v2721, 8.507059e+37
        %v2723 = vand.u32 %v2666, 2147483648
        %v2724 = vor.u32 1.1754944e-38, %v2723
        %v2725 = vsel %vm2722, %v2724, %v2720
        %v2726 = vmul.f32 %v2647, %v2725
        %v2727 = vrcp.pop %v2669
        %v2728 = vmul.f32 %v2669, %v2727
        %v2729 = vsub.f32 1.0, %v2728
        %v2730 = vmul.f32 %v2727, %v2729
        %v2731 = vadd.f32 %v2727, %v2730
        %vm2732 = vweird.f32 %v2669
        %vm2733 = vweird.f32 %v2727
        %vm2734 = vmor %vm2732, %vm2733
        %v2735 = vsel %vm2734, %v2727, %v2731
        %v2736 = vand.u32 2147483647, %v2669
        %vm2737 = vcmp.eq.f32.partialorder %v2736, 8.507059e+37
        %v2738 = vand.u32 %v2669, 2147483648
        %v2739 = vor.u32 1.1754944e-38, %v2738
        %v2740 = vsel %vm2737, %v2739, %v2735
        %v2741 = vmul.f32 %v2649, %v2740
        %v2742 = vrcp.pop %v2672
        %v2743 = vmul.f32 %v2672, %v2742
        %v2744 = vsub.f32 1.0, %v2743
        %v2745 = vmul.f32 %v2742, %v2744
        %v2746 = vadd.f32 %v2742, %v2745
        %vm2747 = vweird.f32 %v2672
        %vm2748 = vweird.f32 %v2742
        %vm2749 = vmor %vm2747, %vm2748
        %v2750 = vsel %vm2749, %v2742, %v2746
        %v2751 = vand.u32 2147483647, %v2672
        %vm2752 = vcmp.eq.f32.partialorder %v2751, 8.507059e+37
        %v2753 = vand.u32 %v2672, 2147483648
        %v2754 = vor.u32 1.1754944e-38, %v2753
        %v2755 = vsel %vm2752, %v2754, %v2750
        %v2756 = vmul.f32 %v2651, %v2755
        %v2757 = vrcp.pop %v2675
        %v2758 = vmul.f32 %v2675, %v2757
        %v2759 = vsub.f32 1.0, %v2758
        %v2760 = vmul.f32 %v2757, %v2759
        %v2761 = vadd.f32 %v2757, %v2760
        %vm2762 = vweird.f32 %v2675
        %vm2763 = vweird.f32 %v2757
        %vm2764 = vmor %vm2762, %vm2763
        %v2765 = vsel %vm2764, %v2757, %v2761
        %v2766 = vand.u32 2147483647, %v2675
        %vm2767 = vcmp.eq.f32.partialorder %v2766, 8.507059e+37
        %v2768 = vand.u32 %v2675, 2147483648
        %v2769 = vor.u32 1.1754944e-38, %v2768
        %v2770 = vsel %vm2767, %v2769, %v2765
        %v2771 = vmul.f32 %v2653, %v2770
        %v2772 = vrcp.pop %v2678
        %v2773 = vmul.f32 %v2678, %v2772
        %v2774 = vsub.f32 1.0, %v2773
        %v2775 = vmul.f32 %v2772, %v2774
        %v2776 = vadd.f32 %v2772, %v2775
        %vm2777 = vweird.f32 %v2678
        %vm2778 = vweird.f32 %v2772
        %vm2779 = vmor %vm2777, %vm2778
        %v2780 = vsel %vm2779, %v2772, %v2776
        %v2781 = vand.u32 2147483647, %v2678
        %vm2782 = vcmp.eq.f32.partialorder %v2781, 8.507059e+37
        %v2783 = vand.u32 %v2678, 2147483648
        %v2784 = vor.u32 1.1754944e-38, %v2783
        %v2785 = vsel %vm2782, %v2784, %v2780
        %v2786 = vmul.f32 %v2655, %v2785
        %v2787 = vrcp.pop %v2681
        %v2788 = vmul.f32 %v2681, %v2787
        %v2789 = vsub.f32 1.0, %v2788
        %v2790 = vmul.f32 %v2787, %v2789
        %v2791 = vadd.f32 %v2787, %v2790
        %vm2792 = vweird.f32 %v2681
        %vm2793 = vweird.f32 %v2787
        %vm2794 = vmor %vm2792, %vm2793
        %v2795 = vsel %vm2794, %v2787, %v2791
        %v2796 = vand.u32 2147483647, %v2681
        %vm2797 = vcmp.eq.f32.partialorder %v2796, 8.507059e+37
        %v2798 = vand.u32 %v2681, 2147483648
        %v2799 = vor.u32 1.1754944e-38, %v2798
        %v2800 = vsel %vm2797, %v2799, %v2795
        %v2801 = vmul.f32 %v2657, %v2800
        %2802 = vrot.lane.b32.xlu0 %v498, 40
        %v2803 = vpop.permute.xlu0 %2802
        %v2806 = vsel %vm524, %v2696, 0
        %2808 = vmatpush.msra.mxu0 0.0
        %2809 = vmatpush.msra.mxu0 0.0
        %2810 = vmatpush.msra.mxu0 0.0
        %2811 = vmatpush.msra.mxu0 0.0
        %2812 = vmatpush.msra.mxu0 0.0
        %2813 = vmatpush.msra.mxu0 0.0
        %2814 = vmatpush.msra.mxu0 0.0
        %2815 = vmatpush.msra.mxu0 0.0
        %2816 = vmatpush.msra.mxu0 0.0
        %2817 = vmatpush.msra.mxu0 0.0
        %2818 = vmatpush.msra.mxu0 0.0
        %2819 = vmatpush.msra.mxu0 0.0
        %2820 = vmatpush.msra.mxu0 0.0
        %2821 = vmatpush.msra.mxu0 0.0
        %2822 = vmatpush.msra.mxu0 0.0
        %2823 = vmatpush.msra.mxu0 %v2803
        %2824 = vmatmul.f32.gmra.mxu0 %v2806
        %v2825 = vpop.f32.mrf.mxu0
        %v2826 = vadd.f32 0.0, %v2825
        %2827 = vdwg.mxu0
        %2828 = vrot.lane.b32.xlu0 %v501, 40
        %v2829 = vpop.permute.xlu0 %2828
        %v2832 = vsel %vm524, %v2711, 0
        %2834 = vmatpush.msra.mxu0 0.0
        %2835 = vmatpush.msra.mxu0 0.0
        %2836 = vmatpush.msra.mxu0 0.0
        %2837 = vmatpush.msra.mxu0 0.0
        %2838 = vmatpush.msra.mxu0 0.0
        %2839 = vmatpush.msra.mxu0 0.0
        %2840 = vmatpush.msra.mxu0 0.0
        %2841 = vmatpush.msra.mxu0 0.0
        %2842 = vmatpush.msra.mxu0 0.0
        %2843 = vmatpush.msra.mxu0 0.0
        %2844 = vmatpush.msra.mxu0 0.0
        %2845 = vmatpush.msra.mxu0 0.0
        %2846 = vmatpush.msra.mxu0 0.0
        %2847 = vmatpush.msra.mxu0 0.0
        %2848 = vmatpush.msra.mxu0 0.0
        %2849 = vmatpush.msra.mxu0 %v2829
        %2850 = vmatmul.f32.gmra.mxu0 %v2832
        %v2851 = vpop.f32.mrf.mxu0
        %v2852 = vadd.f32 0.0, %v2851
        %2853 = vdwg.mxu0
        %2854 = vrot.lane.b32.xlu0 %v504, 40
        %v2855 = vpop.permute.xlu0 %2854
        %v2858 = vsel %vm524, %v2726, 0
        %2860 = vmatpush.msra.mxu0 0.0
        %2861 = vmatpush.msra.mxu0 0.0
        %2862 = vmatpush.msra.mxu0 0.0
        %2863 = vmatpush.msra.mxu0 0.0
        %2864 = vmatpush.msra.mxu0 0.0
        %2865 = vmatpush.msra.mxu0 0.0
        %2866 = vmatpush.msra.mxu0 0.0
        %2867 = vmatpush.msra.mxu0 0.0
        %2868 = vmatpush.msra.mxu0 0.0
        %2869 = vmatpush.msra.mxu0 0.0
        %2870 = vmatpush.msra.mxu0 0.0
        %2871 = vmatpush.msra.mxu0 0.0
        %2872 = vmatpush.msra.mxu0 0.0
        %2873 = vmatpush.msra.mxu0 0.0
        %2874 = vmatpush.msra.mxu0 0.0
        %2875 = vmatpush.msra.mxu0 %v2855
        %2876 = vmatmul.f32.gmra.mxu0 %v2858
        %v2877 = vpop.f32.mrf.mxu0
        %v2878 = vadd.f32 0.0, %v2877
        %2879 = vdwg.mxu0
        %2880 = vrot.lane.b32.xlu0 %v507, 40
        %v2881 = vpop.permute.xlu0 %2880
        %v2884 = vsel %vm524, %v2741, 0
        %2886 = vmatpush.msra.mxu0 0.0
        %2887 = vmatpush.msra.mxu0 0.0
        %2888 = vmatpush.msra.mxu0 0.0
        %2889 = vmatpush.msra.mxu0 0.0
        %2890 = vmatpush.msra.mxu0 0.0
        %2891 = vmatpush.msra.mxu0 0.0
        %2892 = vmatpush.msra.mxu0 0.0
        %2893 = vmatpush.msra.mxu0 0.0
        %2894 = vmatpush.msra.mxu0 0.0
        %2895 = vmatpush.msra.mxu0 0.0
        %2896 = vmatpush.msra.mxu0 0.0
        %2897 = vmatpush.msra.mxu0 0.0
        %2898 = vmatpush.msra.mxu0 0.0
        %2899 = vmatpush.msra.mxu0 0.0
        %2900 = vmatpush.msra.mxu0 0.0
        %2901 = vmatpush.msra.mxu0 %v2881
        %2902 = vmatmul.f32.gmra.mxu0 %v2884
        %v2903 = vpop.f32.mrf.mxu0
        %v2904 = vadd.f32 0.0, %v2903
        %2905 = vdwg.mxu0
        %2906 = vrot.lane.b32.xlu0 %v510, 40
        %v2907 = vpop.permute.xlu0 %2906
        %v2910 = vsel %vm524, %v2756, 0
        %2912 = vmatpush.msra.mxu0 0.0
        %2913 = vmatpush.msra.mxu0 0.0
        %2914 = vmatpush.msra.mxu0 0.0
        %2915 = vmatpush.msra.mxu0 0.0
        %2916 = vmatpush.msra.mxu0 0.0
        %2917 = vmatpush.msra.mxu0 0.0
        %2918 = vmatpush.msra.mxu0 0.0
        %2919 = vmatpush.msra.mxu0 0.0
        %2920 = vmatpush.msra.mxu0 0.0
        %2921 = vmatpush.msra.mxu0 0.0
        %2922 = vmatpush.msra.mxu0 0.0
        %2923 = vmatpush.msra.mxu0 0.0
        %2924 = vmatpush.msra.mxu0 0.0
        %2925 = vmatpush.msra.mxu0 0.0
        %2926 = vmatpush.msra.mxu0 0.0
        %2927 = vmatpush.msra.mxu0 %v2907
        %2928 = vmatmul.f32.gmra.mxu0 %v2910
        %v2929 = vpop.f32.mrf.mxu0
        %v2930 = vadd.f32 0.0, %v2929
        %2931 = vdwg.mxu0
        %2932 = vrot.lane.b32.xlu0 %v513, 40
        %v2933 = vpop.permute.xlu0 %2932
        %v2936 = vsel %vm524, %v2771, 0
        %2938 = vmatpush.msra.mxu0 0.0
        %2939 = vmatpush.msra.mxu0 0.0
        %2940 = vmatpush.msra.mxu0 0.0
        %2941 = vmatpush.msra.mxu0 0.0
        %2942 = vmatpush.msra.mxu0 0.0
        %2943 = vmatpush.msra.mxu0 0.0
        %2944 = vmatpush.msra.mxu0 0.0
        %2945 = vmatpush.msra.mxu0 0.0
        %2946 = vmatpush.msra.mxu0 0.0
        %2947 = vmatpush.msra.mxu0 0.0
        %2948 = vmatpush.msra.mxu0 0.0
        %2949 = vmatpush.msra.mxu0 0.0
        %2950 = vmatpush.msra.mxu0 0.0
        %2951 = vmatpush.msra.mxu0 0.0
        %2952 = vmatpush.msra.mxu0 0.0
        %2953 = vmatpush.msra.mxu0 %v2933
        %2954 = vmatmul.f32.gmra.mxu0 %v2936
        %v2955 = vpop.f32.mrf.mxu0
        %v2956 = vadd.f32 0.0, %v2955
        %2957 = vdwg.mxu0
        %2958 = vrot.lane.b32.xlu0 %v516, 40
        %v2959 = vpop.permute.xlu0 %2958
        %v2962 = vsel %vm524, %v2786, 0
        %2964 = vmatpush.msra.mxu0 0.0
        %2965 = vmatpush.msra.mxu0 0.0
        %2966 = vmatpush.msra.mxu0 0.0
        %2967 = vmatpush.msra.mxu0 0.0
        %2968 = vmatpush.msra.mxu0 0.0
        %2969 = vmatpush.msra.mxu0 0.0
        %2970 = vmatpush.msra.mxu0 0.0
        %2971 = vmatpush.msra.mxu0 0.0
        %2972 = vmatpush.msra.mxu0 0.0
        %2973 = vmatpush.msra.mxu0 0.0
        %2974 = vmatpush.msra.mxu0 0.0
        %2975 = vmatpush.msra.mxu0 0.0
        %2976 = vmatpush.msra.mxu0 0.0
        %2977 = vmatpush.msra.mxu0 0.0
        %2978 = vmatpush.msra.mxu0 0.0
        %2979 = vmatpush.msra.mxu0 %v2959
        %2980 = vmatmul.f32.gmra.mxu0 %v2962
        %v2981 = vpop.f32.mrf.mxu0
        %v2982 = vadd.f32 0.0, %v2981
        %2983 = vdwg.mxu0
        %2984 = vrot.lane.b32.xlu0 %v519, 40
        %v2985 = vpop.permute.xlu0 %2984
        %v2988 = vsel %vm524, %v2801, 0
        %2990 = vmatpush.msra.mxu0 0.0
        %2991 = vmatpush.msra.mxu0 0.0
        %2992 = vmatpush.msra.mxu0 0.0
        %2993 = vmatpush.msra.mxu0 0.0
        %2994 = vmatpush.msra.mxu0 0.0
        %2995 = vmatpush.msra.mxu0 0.0
        %2996 = vmatpush.msra.mxu0 0.0
        %2997 = vmatpush.msra.mxu0 0.0
        %2998 = vmatpush.msra.mxu0 0.0
        %2999 = vmatpush.msra.mxu0 0.0
        %3000 = vmatpush.msra.mxu0 0.0
        %3001 = vmatpush.msra.mxu0 0.0
        %3002 = vmatpush.msra.mxu0 0.0
        %3003 = vmatpush.msra.mxu0 0.0
        %3004 = vmatpush.msra.mxu0 0.0
        %3005 = vmatpush.msra.mxu0 %v2985
        %3006 = vmatmul.f32.gmra.mxu0 %v2988
        %v3007 = vpop.f32.mrf.mxu0
        %v3008 = vadd.f32 0.0, %v3007
        %3009 = vdwg.mxu0
        %3018 = vrot.lane.b32.xlu0 %v1578, 8
        %v3019 = vpop.permute.xlu0 %3018
        %3020 = vrot.lane.b32.xlu0 %v1604, 8
        %v3021 = vpop.permute.xlu0 %3020
        %3022 = vrot.lane.b32.xlu0 %v1630, 8
        %v3023 = vpop.permute.xlu0 %3022
        %3024 = vrot.lane.b32.xlu0 %v1656, 8
        %v3025 = vpop.permute.xlu0 %3024
        %3026 = vrot.lane.b32.xlu0 %v1682, 8
        %v3027 = vpop.permute.xlu0 %3026
        %3028 = vrot.lane.b32.xlu0 %v1708, 8
        %v3029 = vpop.permute.xlu0 %3028
        %3030 = vrot.lane.b32.xlu0 %v1734, 8
        %v3031 = vpop.permute.xlu0 %3030
        %3032 = vrot.lane.b32.xlu0 %v1760, 8
        %v3033 = vpop.permute.xlu0 %3032
        %3050 = vrot.lane.b32.xlu0 %v2202, 16
        %v3051 = vpop.permute.xlu0 %3050
        %3052 = vrot.lane.b32.xlu0 %v2228, 16
        %v3053 = vpop.permute.xlu0 %3052
        %3054 = vrot.lane.b32.xlu0 %v2254, 16
        %v3055 = vpop.permute.xlu0 %3054
        %3056 = vrot.lane.b32.xlu0 %v2280, 16
        %v3057 = vpop.permute.xlu0 %3056
        %3058 = vrot.lane.b32.xlu0 %v2306, 16
        %v3059 = vpop.permute.xlu0 %3058
        %3060 = vrot.lane.b32.xlu0 %v2332, 16
        %v3061 = vpop.permute.xlu0 %3060
        %3062 = vrot.lane.b32.xlu0 %v2358, 16
        %v3063 = vpop.permute.xlu0 %3062
        %3064 = vrot.lane.b32.xlu0 %v2384, 16
        %v3065 = vpop.permute.xlu0 %3064
        %3082 = vrot.lane.b32.xlu0 %v2826, 24
        %v3083 = vpop.permute.xlu0 %3082
        %3084 = vrot.lane.b32.xlu0 %v2852, 24
        %v3085 = vpop.permute.xlu0 %3084
        %3086 = vrot.lane.b32.xlu0 %v2878, 24
        %v3087 = vpop.permute.xlu0 %3086
        %3088 = vrot.lane.b32.xlu0 %v2904, 24
        %v3089 = vpop.permute.xlu0 %3088
        %3090 = vrot.lane.b32.xlu0 %v2930, 24
        %v3091 = vpop.permute.xlu0 %3090
        %3092 = vrot.lane.b32.xlu0 %v2956, 24
        %v3093 = vpop.permute.xlu0 %3092
        %3094 = vrot.lane.b32.xlu0 %v2982, 24
        %v3095 = vpop.permute.xlu0 %3094
        %3096 = vrot.lane.b32.xlu0 %v3008, 24
        %v3097 = vpop.permute.xlu0 %3096
        %v3106 = vsel %vm524, %v954, %v3019
        %v3107 = vsel %vm524, %v980, %v3021
        %v3108 = vsel %vm524, %v1006, %v3023
        %v3109 = vsel %vm524, %v1032, %v3025
        %v3110 = vsel %vm524, %v1058, %v3027
        %v3111 = vsel %vm524, %v1084, %v3029
        %v3112 = vsel %vm524, %v1110, %v3031
        %v3113 = vsel %vm524, %v1136, %v3033
        %vm3114 = vcmask 130048
        %v3115 = vsel %vm3114, %v3106, %v3051
        %v3116 = vsel %vm3114, %v3107, %v3053
        %v3117 = vsel %vm3114, %v3108, %v3055
        %v3118 = vsel %vm3114, %v3109, %v3057
        %v3119 = vsel %vm3114, %v3110, %v3059
        %v3120 = vsel %vm3114, %v3111, %v3061
        %v3121 = vsel %vm3114, %v3112, %v3063
        %v3122 = vsel %vm3114, %v3113, %v3065
        %vm3123 = vcmask 195584
        %v3124 = vsel %vm3123, %v3115, %v3083
        %v3125 = vsel %vm3123, %v3116, %v3085
        %v3126 = vsel %vm3123, %v3117, %v3087
        %v3127 = vsel %vm3123, %v3118, %v3089
        %v3128 = vsel %vm3123, %v3119, %v3091
        %v3129 = vsel %vm3123, %v3120, %v3093
        %v3130 = vsel %vm3123, %v3121, %v3095
        %v3131 = vsel %vm3123, %v3122, %v3097
        %v3132 = vld [vmem:[#allocation7] sm:$0xff]
        %v3133 = vld [vmem:[#allocation7 + $0x8] sm:$0xff]
        %v3134 = vld [vmem:[#allocation7 + $0x10] sm:$0xff]
        %v3135 = vld [vmem:[#allocation7 + $0x18] sm:$0xff]
        %v3136 = vld [vmem:[#allocation10 + $0x1] sm:$0x1]
        %v3137 = vperm.slane %v3136, 0
        %v3139 = vsel %vm455, %v3124, 0
        %v3142 = vsel %vm455, %v3125, 0
        %v3145 = vsel %vm455, %v3126, 0
        %v3148 = vsel %vm455, %v3127, 0
        %v3151 = vsel %vm455, %v3128, 0
        %v3154 = vsel %vm455, %v3129, 0
        %v3157 = vsel %vm455, %v3130, 0
        %v3160 = vsel %vm455, %v3131, 0
        %3162 = vmatpush.msra.mxu0 0.0
        %3163 = vmatpush.msra.mxu0 0.0
        %3164 = vmatpush.msra.mxu0 0.0
        %3165 = vmatpush.msra.mxu0 0.0
        %3166 = vmatpush.msra.mxu0 0.0
        %3167 = vmatpush.msra.mxu0 0.0
        %3168 = vmatpush.msra.mxu0 0.0
        %3169 = vmatpush.msra.mxu0 0.0
        %3170 = vmatpush.msra.mxu0 0.0
        %3171 = vmatpush.msra.mxu0 0.0
        %3172 = vmatpush.msra.mxu0 0.0
        %3173 = vmatpush.msra.mxu0 0.0
        %3174 = vmatpush.msra.mxu0 %v3135
        %3175 = vmatpush.msra.mxu0 %v3134
        %3176 = vmatpush.msra.mxu0 %v3133
        %3177 = vmatpush.msra.mxu0 %v3132
        %3178 = vmatmul.f32.gmra.mxu0 %v3139
        %v3179 = vpop.f32.mrf.mxu0
        %v3180 = vadd.f32 %v3137, %v3179
        %3181 = vmatmul.f32.gmra.mxu0 %v3142
        %v3182 = vpop.f32.mrf.mxu0
        %v3183 = vadd.f32 %v3137, %v3182
        %3184 = vmatmul.f32.gmra.mxu0 %v3145
        %v3185 = vpop.f32.mrf.mxu0
        %v3186 = vadd.f32 %v3137, %v3185
        %3187 = vmatmul.f32.gmra.mxu0 %v3148
        %v3188 = vpop.f32.mrf.mxu0
        %v3189 = vadd.f32 %v3137, %v3188
        %3190 = vmatmul.f32.gmra.mxu0 %v3151
        %v3191 = vpop.f32.mrf.mxu0
        %v3192 = vadd.f32 %v3137, %v3191
        %3193 = vmatmul.f32.gmra.mxu0 %v3154
        %v3194 = vpop.f32.mrf.mxu0
        %v3195 = vadd.f32 %v3137, %v3194
        %3196 = vmatmul.f32.gmra.mxu0 %v3157
        %v3197 = vpop.f32.mrf.mxu0
        %v3198 = vadd.f32 %v3137, %v3197
        %3199 = vmatmul.f32.gmra.mxu0 %v3160
        %v3200 = vpop.f32.mrf.mxu0
        %v3201 = vadd.f32 %v3137, %v3200
        %3202 = vdwg.mxu0
        %v3203 = vld [vmem:[%s4] sm:$0xff]
        %v3204 = vld [vmem:[%s4 + $0x8] sm:$0xff]
        %v3205 = vld [vmem:[%s4 + $0x10] sm:$0xff]
        %v3206 = vld [vmem:[%s4 + $0x18] sm:$0xff]
        %v3207 = vld [vmem:[%s4 + $0x20] sm:$0xff]
        %v3208 = vld [vmem:[%s4 + $0x28] sm:$0xff]
        %v3209 = vld [vmem:[%s4 + $0x30] sm:$0xff]
        %v3210 = vld [vmem:[%s4 + $0x38] sm:$0xff]
        %v3211 = vld [vmem:[#allocation10 + $0x2] sm:$0x1]
        %v3212 = vperm.slane %v3211, 0
        %vm3213 = vcmask 523264
        %v3215 = vsel %vm3213, %v427, 0
        %v3218 = vsel %vm3213, %v428, 0
        %v3221 = vsel %vm3213, %v429, 0
        %v3224 = vsel %vm3213, %v430, 0
        %v3227 = vsel %vm3213, %v431, 0
        %v3230 = vsel %vm3213, %v432, 0
        %v3233 = vsel %vm3213, %v433, 0
        %v3236 = vsel %vm3213, %v434, 0
        %v3239 = vsel %vm3213, %v435, 0
        %v3242 = vsel %vm3213, %v436, 0
        %v3245 = vsel %vm3213, %v437, 0
        %v3248 = vsel %vm3213, %v438, 0
        %v3251 = vsel %vm3213, %v439, 0
        %v3254 = vsel %vm3213, %v440, 0
        %v3257 = vsel %vm3213, %v441, 0
        %v3260 = vsel %vm3213, %v442, 0
        %3262 = vmatpush.msra.mxu0 0.0
        %3263 = vmatpush.msra.mxu0 0.0
        %3264 = vmatpush.msra.mxu0 0.0
        %3265 = vmatpush.msra.mxu0 0.0
        %3266 = vmatpush.msra.mxu0 0.0
        %3267 = vmatpush.msra.mxu0 0.0
        %3268 = vmatpush.msra.mxu0 0.0
        %3269 = vmatpush.msra.mxu0 0.0
        %3270 = vmatpush.msra.mxu0 %v3210
        %3271 = vmatpush.msra.mxu0 %v3209
        %3272 = vmatpush.msra.mxu0 %v3208
        %3273 = vmatpush.msra.mxu0 %v3207
        %3274 = vmatpush.msra.mxu0 %v3206
        %3275 = vmatpush.msra.mxu0 %v3205
        %3276 = vmatpush.msra.mxu0 %v3204
        %3277 = vmatpush.msra.mxu0 %v3203
        %3278 = vmatmul.f32.gmra.mxu0 %v3215
        %v3279 = vpop.f32.mrf.mxu0
        %v3280 = vadd.f32 %v3212, %v3279
        %3281 = vmatmul.f32.gmra.mxu0 %v3218
        %v3282 = vpop.f32.mrf.mxu0
        %v3283 = vadd.f32 %v3212, %v3282
        %3284 = vmatmul.f32.gmra.mxu0 %v3221
        %v3285 = vpop.f32.mrf.mxu0
        %v3286 = vadd.f32 %v3212, %v3285
        %3287 = vmatmul.f32.gmra.mxu0 %v3224
        %v3288 = vpop.f32.mrf.mxu0
        %v3289 = vadd.f32 %v3212, %v3288
        %3290 = vmatmul.f32.gmra.mxu0 %v3227
        %v3291 = vpop.f32.mrf.mxu0
        %v3292 = vadd.f32 %v3212, %v3291
        %3293 = vmatmul.f32.gmra.mxu0 %v3230
        %v3294 = vpop.f32.mrf.mxu0
        %v3295 = vadd.f32 %v3212, %v3294
        %3296 = vmatmul.f32.gmra.mxu0 %v3233
        %v3297 = vpop.f32.mrf.mxu0
        %v3298 = vadd.f32 %v3212, %v3297
        %3299 = vmatmul.f32.gmra.mxu0 %v3236
        %v3300 = vpop.f32.mrf.mxu0
        %v3301 = vadd.f32 %v3212, %v3300
        %3302 = vmatmul.f32.gmra.mxu0 %v3239
        %v3303 = vpop.f32.mrf.mxu0
        %v3304 = vadd.f32 %v3212, %v3303
        %3305 = vmatmul.f32.gmra.mxu0 %v3242
        %v3306 = vpop.f32.mrf.mxu0
        %v3307 = vadd.f32 %v3212, %v3306
        %3308 = vmatmul.f32.gmra.mxu0 %v3245
        %v3309 = vpop.f32.mrf.mxu0
        %v3310 = vadd.f32 %v3212, %v3309
        %3311 = vmatmul.f32.gmra.mxu0 %v3248
        %v3312 = vpop.f32.mrf.mxu0
        %v3313 = vadd.f32 %v3212, %v3312
        %3314 = vmatmul.f32.gmra.mxu0 %v3251
        %v3315 = vpop.f32.mrf.mxu0
        %v3316 = vadd.f32 %v3212, %v3315
        %3317 = vmatmul.f32.gmra.mxu0 %v3254
        %v3318 = vpop.f32.mrf.mxu0
        %v3319 = vadd.f32 %v3212, %v3318
        %3320 = vmatmul.f32.gmra.mxu0 %v3257
        %v3321 = vpop.f32.mrf.mxu0
        %v3322 = vadd.f32 %v3212, %v3321
        %3323 = vmatmul.f32.gmra.mxu0 %v3260
        %v3324 = vpop.f32.mrf.mxu0
        %v3325 = vadd.f32 %v3212, %v3324
        %3326 = vdwg.mxu0
        %v3328 = vsel %vm524, %v3180, 0
        %v3331 = vsel %vm524, %v3280, 0
        %v3334 = vsel %vm524, %v3283, 0
        %3336 = vmatpush.xpose.msra.mxu0 0.0
        %3337 = vmatpush.xpose.msra.mxu0 0.0
        %3338 = vmatpush.xpose.msra.mxu0 0.0
        %3339 = vmatpush.xpose.msra.mxu0 0.0
        %3340 = vmatpush.xpose.msra.mxu0 0.0
        %3341 = vmatpush.xpose.msra.mxu0 0.0
        %3342 = vmatpush.xpose.msra.mxu0 0.0
        %3343 = vmatpush.xpose.msra.mxu0 0.0
        %3344 = vmatpush.xpose.msra.mxu0 0.0
        %3345 = vmatpush.xpose.msra.mxu0 0.0
        %3346 = vmatpush.xpose.msra.mxu0 0.0
        %3347 = vmatpush.xpose.msra.mxu0 0.0
        %3348 = vmatpush.xpose.msra.mxu0 0.0
        %3349 = vmatpush.xpose.msra.mxu0 0.0
        %3350 = vmatpush.xpose.msra.mxu0 %v3334
        %3351 = vmatpush.xpose.msra.mxu0 %v3331
        %3352 = vmatmul.f32.gmra.mxu0 %v3328
        %v3353 = vpop.f32.mrf.mxu0
        %v3354 = vadd.f32 0.0, %v3353
        %3355 = vdwg.mxu0
        %v3357 = vsel %vm524, %v3183, 0
        %v3360 = vsel %vm524, %v3286, 0
        %v3363 = vsel %vm524, %v3289, 0
        %3365 = vmatpush.xpose.msra.mxu0 0.0
        %3366 = vmatpush.xpose.msra.mxu0 0.0
        %3367 = vmatpush.xpose.msra.mxu0 0.0
        %3368 = vmatpush.xpose.msra.mxu0 0.0
        %3369 = vmatpush.xpose.msra.mxu0 0.0
        %3370 = vmatpush.xpose.msra.mxu0 0.0
        %3371 = vmatpush.xpose.msra.mxu0 0.0
        %3372 = vmatpush.xpose.msra.mxu0 0.0
        %3373 = vmatpush.xpose.msra.mxu0 0.0
        %3374 = vmatpush.xpose.msra.mxu0 0.0
        %3375 = vmatpush.xpose.msra.mxu0 0.0
        %3376 = vmatpush.xpose.msra.mxu0 0.0
        %3377 = vmatpush.xpose.msra.mxu0 0.0
        %3378 = vmatpush.xpose.msra.mxu0 0.0
        %3379 = vmatpush.xpose.msra.mxu0 %v3363
        %3380 = vmatpush.xpose.msra.mxu0 %v3360
        %3381 = vmatmul.f32.gmra.mxu0 %v3357
        %v3382 = vpop.f32.mrf.mxu0
        %v3383 = vadd.f32 0.0, %v3382
        %3384 = vdwg.mxu0
        %v3386 = vsel %vm524, %v3186, 0
        %v3389 = vsel %vm524, %v3292, 0
        %v3392 = vsel %vm524, %v3295, 0
        %3394 = vmatpush.xpose.msra.mxu0 0.0
        %3395 = vmatpush.xpose.msra.mxu0 0.0
        %3396 = vmatpush.xpose.msra.mxu0 0.0
        %3397 = vmatpush.xpose.msra.mxu0 0.0
        %3398 = vmatpush.xpose.msra.mxu0 0.0
        %3399 = vmatpush.xpose.msra.mxu0 0.0
        %3400 = vmatpush.xpose.msra.mxu0 0.0
        %3401 = vmatpush.xpose.msra.mxu0 0.0
        %3402 = vmatpush.xpose.msra.mxu0 0.0
        %3403 = vmatpush.xpose.msra.mxu0 0.0
        %3404 = vmatpush.xpose.msra.mxu0 0.0
        %3405 = vmatpush.xpose.msra.mxu0 0.0
        %3406 = vmatpush.xpose.msra.mxu0 0.0
        %3407 = vmatpush.xpose.msra.mxu0 0.0
        %3408 = vmatpush.xpose.msra.mxu0 %v3392
        %3409 = vmatpush.xpose.msra.mxu0 %v3389
        %3410 = vmatmul.f32.gmra.mxu0 %v3386
        %v3411 = vpop.f32.mrf.mxu0
        %v3412 = vadd.f32 0.0, %v3411
        %3413 = vdwg.mxu0
        %v3415 = vsel %vm524, %v3189, 0
        %v3418 = vsel %vm524, %v3298, 0
        %v3421 = vsel %vm524, %v3301, 0
        %3423 = vmatpush.xpose.msra.mxu0 0.0
        %3424 = vmatpush.xpose.msra.mxu0 0.0
        %3425 = vmatpush.xpose.msra.mxu0 0.0
        %3426 = vmatpush.xpose.msra.mxu0 0.0
        %3427 = vmatpush.xpose.msra.mxu0 0.0
        %3428 = vmatpush.xpose.msra.mxu0 0.0
        %3429 = vmatpush.xpose.msra.mxu0 0.0
        %3430 = vmatpush.xpose.msra.mxu0 0.0
        %3431 = vmatpush.xpose.msra.mxu0 0.0
        %3432 = vmatpush.xpose.msra.mxu0 0.0
        %3433 = vmatpush.xpose.msra.mxu0 0.0
        %3434 = vmatpush.xpose.msra.mxu0 0.0
        %3435 = vmatpush.xpose.msra.mxu0 0.0
        %3436 = vmatpush.xpose.msra.mxu0 0.0
        %3437 = vmatpush.xpose.msra.mxu0 %v3421
        %3438 = vmatpush.xpose.msra.mxu0 %v3418
        %3439 = vmatmul.f32.gmra.mxu0 %v3415
        %v3440 = vpop.f32.mrf.mxu0
        %v3441 = vadd.f32 0.0, %v3440
        %3442 = vdwg.mxu0
        %v3444 = vsel %vm524, %v3192, 0
        %v3447 = vsel %vm524, %v3304, 0
        %v3450 = vsel %vm524, %v3307, 0
        %3452 = vmatpush.xpose.msra.mxu0 0.0
        %3453 = vmatpush.xpose.msra.mxu0 0.0
        %3454 = vmatpush.xpose.msra.mxu0 0.0
        %3455 = vmatpush.xpose.msra.mxu0 0.0
        %3456 = vmatpush.xpose.msra.mxu0 0.0
        %3457 = vmatpush.xpose.msra.mxu0 0.0
        %3458 = vmatpush.xpose.msra.mxu0 0.0
        %3459 = vmatpush.xpose.msra.mxu0 0.0
        %3460 = vmatpush.xpose.msra.mxu0 0.0
        %3461 = vmatpush.xpose.msra.mxu0 0.0
        %3462 = vmatpush.xpose.msra.mxu0 0.0
        %3463 = vmatpush.xpose.msra.mxu0 0.0
        %3464 = vmatpush.xpose.msra.mxu0 0.0
        %3465 = vmatpush.xpose.msra.mxu0 0.0
        %3466 = vmatpush.xpose.msra.mxu0 %v3450
        %3467 = vmatpush.xpose.msra.mxu0 %v3447
        %3468 = vmatmul.f32.gmra.mxu0 %v3444
        %v3469 = vpop.f32.mrf.mxu0
        %v3470 = vadd.f32 0.0, %v3469
        %3471 = vdwg.mxu0
        %v3473 = vsel %vm524, %v3195, 0
        %v3476 = vsel %vm524, %v3310, 0
        %v3479 = vsel %vm524, %v3313, 0
        %3481 = vmatpush.xpose.msra.mxu0 0.0
        %3482 = vmatpush.xpose.msra.mxu0 0.0
        %3483 = vmatpush.xpose.msra.mxu0 0.0
        %3484 = vmatpush.xpose.msra.mxu0 0.0
        %3485 = vmatpush.xpose.msra.mxu0 0.0
        %3486 = vmatpush.xpose.msra.mxu0 0.0
        %3487 = vmatpush.xpose.msra.mxu0 0.0
        %3488 = vmatpush.xpose.msra.mxu0 0.0
        %3489 = vmatpush.xpose.msra.mxu0 0.0
        %3490 = vmatpush.xpose.msra.mxu0 0.0
        %3491 = vmatpush.xpose.msra.mxu0 0.0
        %3492 = vmatpush.xpose.msra.mxu0 0.0
        %3493 = vmatpush.xpose.msra.mxu0 0.0
        %3494 = vmatpush.xpose.msra.mxu0 0.0
        %3495 = vmatpush.xpose.msra.mxu0 %v3479
        %3496 = vmatpush.xpose.msra.mxu0 %v3476
        %3497 = vmatmul.f32.gmra.mxu0 %v3473
        %v3498 = vpop.f32.mrf.mxu0
        %v3499 = vadd.f32 0.0, %v3498
        %3500 = vdwg.mxu0
        %v3502 = vsel %vm524, %v3198, 0
        %v3505 = vsel %vm524, %v3316, 0
        %v3508 = vsel %vm524, %v3319, 0
        %3510 = vmatpush.xpose.msra.mxu0 0.0
        %3511 = vmatpush.xpose.msra.mxu0 0.0
        %3512 = vmatpush.xpose.msra.mxu0 0.0
        %3513 = vmatpush.xpose.msra.mxu0 0.0
        %3514 = vmatpush.xpose.msra.mxu0 0.0
        %3515 = vmatpush.xpose.msra.mxu0 0.0
        %3516 = vmatpush.xpose.msra.mxu0 0.0
        %3517 = vmatpush.xpose.msra.mxu0 0.0
        %3518 = vmatpush.xpose.msra.mxu0 0.0
        %3519 = vmatpush.xpose.msra.mxu0 0.0
        %3520 = vmatpush.xpose.msra.mxu0 0.0
        %3521 = vmatpush.xpose.msra.mxu0 0.0
        %3522 = vmatpush.xpose.msra.mxu0 0.0
        %3523 = vmatpush.xpose.msra.mxu0 0.0
        %3524 = vmatpush.xpose.msra.mxu0 %v3508
        %3525 = vmatpush.xpose.msra.mxu0 %v3505
        %3526 = vmatmul.f32.gmra.mxu0 %v3502
        %v3527 = vpop.f32.mrf.mxu0
        %v3528 = vadd.f32 0.0, %v3527
        %3529 = vdwg.mxu0
        %v3531 = vsel %vm524, %v3201, 0
        %v3534 = vsel %vm524, %v3322, 0
        %v3537 = vsel %vm524, %v3325, 0
        %3539 = vmatpush.xpose.msra.mxu0 0.0
        %3540 = vmatpush.xpose.msra.mxu0 0.0
        %3541 = vmatpush.xpose.msra.mxu0 0.0
        %3542 = vmatpush.xpose.msra.mxu0 0.0
        %3543 = vmatpush.xpose.msra.mxu0 0.0
        %3544 = vmatpush.xpose.msra.mxu0 0.0
        %3545 = vmatpush.xpose.msra.mxu0 0.0
        %3546 = vmatpush.xpose.msra.mxu0 0.0
        %3547 = vmatpush.xpose.msra.mxu0 0.0
        %3548 = vmatpush.xpose.msra.mxu0 0.0
        %3549 = vmatpush.xpose.msra.mxu0 0.0
        %3550 = vmatpush.xpose.msra.mxu0 0.0
        %3551 = vmatpush.xpose.msra.mxu0 0.0
        %3552 = vmatpush.xpose.msra.mxu0 0.0
        %3553 = vmatpush.xpose.msra.mxu0 %v3537
        %3554 = vmatpush.xpose.msra.mxu0 %v3534
        %3555 = vmatmul.f32.gmra.mxu0 %v3531
        %v3556 = vpop.f32.mrf.mxu0
        %v3557 = vadd.f32 0.0, %v3556
        %3558 = vdwg.mxu0
        %v3559 = vsel %vm3114, %v3354, -inf
        %3560 = vmax.xlane.f32.xlu0 %v3559
        %v3561 = vpop.xlane.xlu0 %3560
        %v3562 = vsel %vm3114, %v3383, -inf
        %3563 = vmax.xlane.f32.xlu0 %v3562
        %v3564 = vpop.xlane.xlu0 %3563
        %v3565 = vsel %vm3114, %v3412, -inf
        %3566 = vmax.xlane.f32.xlu0 %v3565
        %v3567 = vpop.xlane.xlu0 %3566
        %v3568 = vsel %vm3114, %v3441, -inf
        %3569 = vmax.xlane.f32.xlu0 %v3568
        %v3570 = vpop.xlane.xlu0 %3569
        %v3571 = vsel %vm3114, %v3470, -inf
        %3572 = vmax.xlane.f32.xlu0 %v3571
        %v3573 = vpop.xlane.xlu0 %3572
        %v3574 = vsel %vm3114, %v3499, -inf
        %3575 = vmax.xlane.f32.xlu0 %v3574
        %v3576 = vpop.xlane.xlu0 %3575
        %v3577 = vsel %vm3114, %v3528, -inf
        %3578 = vmax.xlane.f32.xlu0 %v3577
        %v3579 = vpop.xlane.xlu0 %3578
        %v3580 = vsel %vm3114, %v3557, -inf
        %3581 = vmax.xlane.f32.xlu0 %v3580
        %v3582 = vpop.xlane.xlu0 %3581
        %v3583 = vsub.f32 %v3354, %v3561
        %v3584 = vsub.f32 %v3383, %v3564
        %v3585 = vsub.f32 %v3412, %v3567
        %v3586 = vsub.f32 %v3441, %v3570
        %v3587 = vsub.f32 %v3470, %v3573
        %v3588 = vsub.f32 %v3499, %v3576
        %v3589 = vsub.f32 %v3528, %v3579
        %v3590 = vsub.f32 %v3557, %v3582
        %v3591 = vmul.f32 %v3583, 1.442695
        %v3592 = vpow.pop %v3591
        %v3593 = vmul.f32 %v3584, 1.442695
        %v3594 = vpow.pop %v3593
        %v3595 = vmul.f32 %v3585, 1.442695
        %v3596 = vpow.pop %v3595
        %v3597 = vmul.f32 %v3586, 1.442695
        %v3598 = vpow.pop %v3597
        %v3599 = vmul.f32 %v3587, 1.442695
        %v3600 = vpow.pop %v3599
        %v3601 = vmul.f32 %v3588, 1.442695
        %v3602 = vpow.pop %v3601
        %v3603 = vmul.f32 %v3589, 1.442695
        %v3604 = vpow.pop %v3603
        %v3605 = vmul.f32 %v3590, 1.442695
        %v3606 = vpow.pop %v3605
        %v3607 = vsel %vm3114, %v3592, 0.0
        %3608 = vadd.xlane.f32.xlu0 %v3607
        %v3609 = vpop.xlane.xlu0 %3608
        %v3610 = vsel %vm3114, %v3594, 0.0
        %3611 = vadd.xlane.f32.xlu0 %v3610
        %v3612 = vpop.xlane.xlu0 %3611
        %v3613 = vsel %vm3114, %v3596, 0.0
        %3614 = vadd.xlane.f32.xlu0 %v3613
        %v3615 = vpop.xlane.xlu0 %3614
        %v3616 = vsel %vm3114, %v3598, 0.0
        %3617 = vadd.xlane.f32.xlu0 %v3616
        %v3618 = vpop.xlane.xlu0 %3617
        %v3619 = vsel %vm3114, %v3600, 0.0
        %3620 = vadd.xlane.f32.xlu0 %v3619
        %v3621 = vpop.xlane.xlu0 %3620
        %v3622 = vsel %vm3114, %v3602, 0.0
        %3623 = vadd.xlane.f32.xlu0 %v3622
        %v3624 = vpop.xlane.xlu0 %3623
        %v3625 = vsel %vm3114, %v3604, 0.0
        %3626 = vadd.xlane.f32.xlu0 %v3625
        %v3627 = vpop.xlane.xlu0 %3626
        %v3628 = vsel %vm3114, %v3606, 0.0
        %3629 = vadd.xlane.f32.xlu0 %v3628
        %v3630 = vpop.xlane.xlu0 %3629
        %v3631 = vrcp.pop %v3609
        %v3632 = vmul.f32 %v3609, %v3631
        %v3633 = vsub.f32 1.0, %v3632
        %v3634 = vmul.f32 %v3631, %v3633
        %v3635 = vadd.f32 %v3631, %v3634
        %vm3636 = vweird.f32 %v3609
        %vm3637 = vweird.f32 %v3631
        %vm3638 = vmor %vm3636, %vm3637
        %v3639 = vsel %vm3638, %v3631, %v3635
        %v3640 = vand.u32 2147483647, %v3609
        %vm3641 = vcmp.eq.f32.partialorder %v3640, 8.507059e+37
        %v3642 = vand.u32 %v3609, 2147483648
        %v3643 = vor.u32 1.1754944e-38, %v3642
        %v3644 = vsel %vm3641, %v3643, %v3639
        %v3645 = vmul.f32 %v3592, %v3644
        %v3646 = vrcp.pop %v3612
        %v3647 = vmul.f32 %v3612, %v3646
        %v3648 = vsub.f32 1.0, %v3647
        %v3649 = vmul.f32 %v3646, %v3648
        %v3650 = vadd.f32 %v3646, %v3649
        %vm3651 = vweird.f32 %v3612
        %vm3652 = vweird.f32 %v3646
        %vm3653 = vmor %vm3651, %vm3652
        %v3654 = vsel %vm3653, %v3646, %v3650
        %v3655 = vand.u32 2147483647, %v3612
        %vm3656 = vcmp.eq.f32.partialorder %v3655, 8.507059e+37
        %v3657 = vand.u32 %v3612, 2147483648
        %v3658 = vor.u32 1.1754944e-38, %v3657
        %v3659 = vsel %vm3656, %v3658, %v3654
        %v3660 = vmul.f32 %v3594, %v3659
        %v3661 = vrcp.pop %v3615
        %v3662 = vmul.f32 %v3615, %v3661
        %v3663 = vsub.f32 1.0, %v3662
        %v3664 = vmul.f32 %v3661, %v3663
        %v3665 = vadd.f32 %v3661, %v3664
        %vm3666 = vweird.f32 %v3615
        %vm3667 = vweird.f32 %v3661
        %vm3668 = vmor %vm3666, %vm3667
        %v3669 = vsel %vm3668, %v3661, %v3665
        %v3670 = vand.u32 2147483647, %v3615
        %vm3671 = vcmp.eq.f32.partialorder %v3670, 8.507059e+37
        %v3672 = vand.u32 %v3615, 2147483648
        %v3673 = vor.u32 1.1754944e-38, %v3672
        %v3674 = vsel %vm3671, %v3673, %v3669
        %v3675 = vmul.f32 %v3596, %v3674
        %v3676 = vrcp.pop %v3618
        %v3677 = vmul.f32 %v3618, %v3676
        %v3678 = vsub.f32 1.0, %v3677
        %v3679 = vmul.f32 %v3676, %v3678
        %v3680 = vadd.f32 %v3676, %v3679
        %vm3681 = vweird.f32 %v3618
        %vm3682 = vweird.f32 %v3676
        %vm3683 = vmor %vm3681, %vm3682
        %v3684 = vsel %vm3683, %v3676, %v3680
        %v3685 = vand.u32 2147483647, %v3618
        %vm3686 = vcmp.eq.f32.partialorder %v3685, 8.507059e+37
        %v3687 = vand.u32 %v3618, 2147483648
        %v3688 = vor.u32 1.1754944e-38, %v3687
        %v3689 = vsel %vm3686, %v3688, %v3684
        %v3690 = vmul.f32 %v3598, %v3689
        %v3691 = vrcp.pop %v3621
        %v3692 = vmul.f32 %v3621, %v3691
        %v3693 = vsub.f32 1.0, %v3692
        %v3694 = vmul.f32 %v3691, %v3693
        %v3695 = vadd.f32 %v3691, %v3694
        %vm3696 = vweird.f32 %v3621
        %vm3697 = vweird.f32 %v3691
        %vm3698 = vmor %vm3696, %vm3697
        %v3699 = vsel %vm3698, %v3691, %v3695
        %v3700 = vand.u32 2147483647, %v3621
        %vm3701 = vcmp.eq.f32.partialorder %v3700, 8.507059e+37
        %v3702 = vand.u32 %v3621, 2147483648
        %v3703 = vor.u32 1.1754944e-38, %v3702
        %v3704 = vsel %vm3701, %v3703, %v3699
        %v3705 = vmul.f32 %v3600, %v3704
        %v3706 = vrcp.pop %v3624
        %v3707 = vmul.f32 %v3624, %v3706
        %v3708 = vsub.f32 1.0, %v3707
        %v3709 = vmul.f32 %v3706, %v3708
        %v3710 = vadd.f32 %v3706, %v3709
        %vm3711 = vweird.f32 %v3624
        %vm3712 = vweird.f32 %v3706
        %vm3713 = vmor %vm3711, %vm3712
        %v3714 = vsel %vm3713, %v3706, %v3710
        %v3715 = vand.u32 2147483647, %v3624
        %vm3716 = vcmp.eq.f32.partialorder %v3715, 8.507059e+37
        %v3717 = vand.u32 %v3624, 2147483648
        %v3718 = vor.u32 1.1754944e-38, %v3717
        %v3719 = vsel %vm3716, %v3718, %v3714
        %v3720 = vmul.f32 %v3602, %v3719
        %v3721 = vrcp.pop %v3627
        %v3722 = vmul.f32 %v3627, %v3721
        %v3723 = vsub.f32 1.0, %v3722
        %v3724 = vmul.f32 %v3721, %v3723
        %v3725 = vadd.f32 %v3721, %v3724
        %vm3726 = vweird.f32 %v3627
        %vm3727 = vweird.f32 %v3721
        %vm3728 = vmor %vm3726, %vm3727
        %v3729 = vsel %vm3728, %v3721, %v3725
        %v3730 = vand.u32 2147483647, %v3627
        %vm3731 = vcmp.eq.f32.partialorder %v3730, 8.507059e+37
        %v3732 = vand.u32 %v3627, 2147483648
        %v3733 = vor.u32 1.1754944e-38, %v3732
        %v3734 = vsel %vm3731, %v3733, %v3729
        %v3735 = vmul.f32 %v3604, %v3734
        %v3736 = vrcp.pop %v3630
        %v3737 = vmul.f32 %v3630, %v3736
        %v3738 = vsub.f32 1.0, %v3737
        %v3739 = vmul.f32 %v3736, %v3738
        %v3740 = vadd.f32 %v3736, %v3739
        %vm3741 = vweird.f32 %v3630
        %vm3742 = vweird.f32 %v3736
        %vm3743 = vmor %vm3741, %vm3742
        %v3744 = vsel %vm3743, %v3736, %v3740
        %v3745 = vand.u32 2147483647, %v3630
        %vm3746 = vcmp.eq.f32.partialorder %v3745, 8.507059e+37
        %v3747 = vand.u32 %v3630, 2147483648
        %v3748 = vor.u32 1.1754944e-38, %v3747
        %v3749 = vsel %vm3746, %v3748, %v3744
        %v3750 = vmul.f32 %v3606, %v3749
        %3751 = vrot.lane.b32.xlu0 %v3280, 96
        %v3752 = vpop.permute.xlu0 %3751
        %3753 = vrot.lane.b32.xlu0 %v3283, 96
        %v3754 = vpop.permute.xlu0 %3753
        %v3758 = vsel %vm3114, %v3645, 0
        %3760 = vmatpush.msra.mxu0 0.0
        %3761 = vmatpush.msra.mxu0 0.0
        %3762 = vmatpush.msra.mxu0 0.0
        %3763 = vmatpush.msra.mxu0 0.0
        %3764 = vmatpush.msra.mxu0 0.0
        %3765 = vmatpush.msra.mxu0 0.0
        %3766 = vmatpush.msra.mxu0 0.0
        %3767 = vmatpush.msra.mxu0 0.0
        %3768 = vmatpush.msra.mxu0 0.0
        %3769 = vmatpush.msra.mxu0 0.0
        %3770 = vmatpush.msra.mxu0 0.0
        %3771 = vmatpush.msra.mxu0 0.0
        %3772 = vmatpush.msra.mxu0 0.0
        %3773 = vmatpush.msra.mxu0 0.0
        %3774 = vmatpush.msra.mxu0 %v3754
        %3775 = vmatpush.msra.mxu0 %v3752
        %3776 = vmatmul.f32.gmra.mxu0 %v3758
        %v3777 = vpop.f32.mrf.mxu0
        %v3778 = vadd.f32 0.0, %v3777
        %3779 = vdwg.mxu0
        %3780 = vrot.lane.b32.xlu0 %v3286, 96
        %v3781 = vpop.permute.xlu0 %3780
        %3782 = vrot.lane.b32.xlu0 %v3289, 96
        %v3783 = vpop.permute.xlu0 %3782
        %v3787 = vsel %vm3114, %v3660, 0
        %3789 = vmatpush.msra.mxu0 0.0
        %3790 = vmatpush.msra.mxu0 0.0
        %3791 = vmatpush.msra.mxu0 0.0
        %3792 = vmatpush.msra.mxu0 0.0
        %3793 = vmatpush.msra.mxu0 0.0
        %3794 = vmatpush.msra.mxu0 0.0
        %3795 = vmatpush.msra.mxu0 0.0
        %3796 = vmatpush.msra.mxu0 0.0
        %3797 = vmatpush.msra.mxu0 0.0
        %3798 = vmatpush.msra.mxu0 0.0
        %3799 = vmatpush.msra.mxu0 0.0
        %3800 = vmatpush.msra.mxu0 0.0
        %3801 = vmatpush.msra.mxu0 0.0
        %3802 = vmatpush.msra.mxu0 0.0
        %3803 = vmatpush.msra.mxu0 %v3783
        %3804 = vmatpush.msra.mxu0 %v3781
        %3805 = vmatmul.f32.gmra.mxu0 %v3787
        %v3806 = vpop.f32.mrf.mxu0
        %v3807 = vadd.f32 0.0, %v3806
        %3808 = vdwg.mxu0
        %3809 = vrot.lane.b32.xlu0 %v3292, 96
        %v3810 = vpop.permute.xlu0 %3809
        %3811 = vrot.lane.b32.xlu0 %v3295, 96
        %v3812 = vpop.permute.xlu0 %3811
        %v3816 = vsel %vm3114, %v3675, 0
        %3818 = vmatpush.msra.mxu0 0.0
        %3819 = vmatpush.msra.mxu0 0.0
        %3820 = vmatpush.msra.mxu0 0.0
        %3821 = vmatpush.msra.mxu0 0.0
        %3822 = vmatpush.msra.mxu0 0.0
        %3823 = vmatpush.msra.mxu0 0.0
        %3824 = vmatpush.msra.mxu0 0.0
        %3825 = vmatpush.msra.mxu0 0.0
        %3826 = vmatpush.msra.mxu0 0.0
        %3827 = vmatpush.msra.mxu0 0.0
        %3828 = vmatpush.msra.mxu0 0.0
        %3829 = vmatpush.msra.mxu0 0.0
        %3830 = vmatpush.msra.mxu0 0.0
        %3831 = vmatpush.msra.mxu0 0.0
        %3832 = vmatpush.msra.mxu0 %v3812
        %3833 = vmatpush.msra.mxu0 %v3810
        %3834 = vmatmul.f32.gmra.mxu0 %v3816
        %v3835 = vpop.f32.mrf.mxu0
        %v3836 = vadd.f32 0.0, %v3835
        %3837 = vdwg.mxu0
        %3838 = vrot.lane.b32.xlu0 %v3298, 96
        %v3839 = vpop.permute.xlu0 %3838
        %3840 = vrot.lane.b32.xlu0 %v3301, 96
        %v3841 = vpop.permute.xlu0 %3840
        %v3845 = vsel %vm3114, %v3690, 0
        %3847 = vmatpush.msra.mxu0 0.0
        %3848 = vmatpush.msra.mxu0 0.0
        %3849 = vmatpush.msra.mxu0 0.0
        %3850 = vmatpush.msra.mxu0 0.0
        %3851 = vmatpush.msra.mxu0 0.0
        %3852 = vmatpush.msra.mxu0 0.0
        %3853 = vmatpush.msra.mxu0 0.0
        %3854 = vmatpush.msra.mxu0 0.0
        %3855 = vmatpush.msra.mxu0 0.0
        %3856 = vmatpush.msra.mxu0 0.0
        %3857 = vmatpush.msra.mxu0 0.0
        %3858 = vmatpush.msra.mxu0 0.0
        %3859 = vmatpush.msra.mxu0 0.0
        %3860 = vmatpush.msra.mxu0 0.0
        %3861 = vmatpush.msra.mxu0 %v3841
        %3862 = vmatpush.msra.mxu0 %v3839
        %3863 = vmatmul.f32.gmra.mxu0 %v3845
        %v3864 = vpop.f32.mrf.mxu0
        %v3865 = vadd.f32 0.0, %v3864
        %3866 = vdwg.mxu0
        %3867 = vrot.lane.b32.xlu0 %v3304, 96
        %v3868 = vpop.permute.xlu0 %3867
        %3869 = vrot.lane.b32.xlu0 %v3307, 96
        %v3870 = vpop.permute.xlu0 %3869
        %v3874 = vsel %vm3114, %v3705, 0
        %3876 = vmatpush.msra.mxu0 0.0
        %3877 = vmatpush.msra.mxu0 0.0
        %3878 = vmatpush.msra.mxu0 0.0
        %3879 = vmatpush.msra.mxu0 0.0
        %3880 = vmatpush.msra.mxu0 0.0
        %3881 = vmatpush.msra.mxu0 0.0
        %3882 = vmatpush.msra.mxu0 0.0
        %3883 = vmatpush.msra.mxu0 0.0
        %3884 = vmatpush.msra.mxu0 0.0
        %3885 = vmatpush.msra.mxu0 0.0
        %3886 = vmatpush.msra.mxu0 0.0
        %3887 = vmatpush.msra.mxu0 0.0
        %3888 = vmatpush.msra.mxu0 0.0
        %3889 = vmatpush.msra.mxu0 0.0
        %3890 = vmatpush.msra.mxu0 %v3870
        %3891 = vmatpush.msra.mxu0 %v3868
        %3892 = vmatmul.f32.gmra.mxu0 %v3874
        %v3893 = vpop.f32.mrf.mxu0
        %v3894 = vadd.f32 0.0, %v3893
        %3895 = vdwg.mxu0
        %3896 = vrot.lane.b32.xlu0 %v3310, 96
        %v3897 = vpop.permute.xlu0 %3896
        %3898 = vrot.lane.b32.xlu0 %v3313, 96
        %v3899 = vpop.permute.xlu0 %3898
        %v3903 = vsel %vm3114, %v3720, 0
        %3905 = vmatpush.msra.mxu0 0.0
        %3906 = vmatpush.msra.mxu0 0.0
        %3907 = vmatpush.msra.mxu0 0.0
        %3908 = vmatpush.msra.mxu0 0.0
        %3909 = vmatpush.msra.mxu0 0.0
        %3910 = vmatpush.msra.mxu0 0.0
        %3911 = vmatpush.msra.mxu0 0.0
        %3912 = vmatpush.msra.mxu0 0.0
        %3913 = vmatpush.msra.mxu0 0.0
        %3914 = vmatpush.msra.mxu0 0.0
        %3915 = vmatpush.msra.mxu0 0.0
        %3916 = vmatpush.msra.mxu0 0.0
        %3917 = vmatpush.msra.mxu0 0.0
        %3918 = vmatpush.msra.mxu0 0.0
        %3919 = vmatpush.msra.mxu0 %v3899
        %3920 = vmatpush.msra.mxu0 %v3897
        %3921 = vmatmul.f32.gmra.mxu0 %v3903
        %v3922 = vpop.f32.mrf.mxu0
        %v3923 = vadd.f32 0.0, %v3922
        %3924 = vdwg.mxu0
        %3925 = vrot.lane.b32.xlu0 %v3316, 96
        %v3926 = vpop.permute.xlu0 %3925
        %3927 = vrot.lane.b32.xlu0 %v3319, 96
        %v3928 = vpop.permute.xlu0 %3927
        %v3932 = vsel %vm3114, %v3735, 0
        %3934 = vmatpush.msra.mxu0 0.0
        %3935 = vmatpush.msra.mxu0 0.0
        %3936 = vmatpush.msra.mxu0 0.0
        %3937 = vmatpush.msra.mxu0 0.0
        %3938 = vmatpush.msra.mxu0 0.0
        %3939 = vmatpush.msra.mxu0 0.0
        %3940 = vmatpush.msra.mxu0 0.0
        %3941 = vmatpush.msra.mxu0 0.0
        %3942 = vmatpush.msra.mxu0 0.0
        %3943 = vmatpush.msra.mxu0 0.0
        %3944 = vmatpush.msra.mxu0 0.0
        %3945 = vmatpush.msra.mxu0 0.0
        %3946 = vmatpush.msra.mxu0 0.0
        %3947 = vmatpush.msra.mxu0 0.0
        %3948 = vmatpush.msra.mxu0 %v3928
        %3949 = vmatpush.msra.mxu0 %v3926
        %3950 = vmatmul.f32.gmra.mxu0 %v3932
        %v3951 = vpop.f32.mrf.mxu0
        %v3952 = vadd.f32 0.0, %v3951
        %3953 = vdwg.mxu0
        %3954 = vrot.lane.b32.xlu0 %v3322, 96
        %v3955 = vpop.permute.xlu0 %3954
        %3956 = vrot.lane.b32.xlu0 %v3325, 96
        %v3957 = vpop.permute.xlu0 %3956
        %v3961 = vsel %vm3114, %v3750, 0
        %3963 = vmatpush.msra.mxu0 0.0
        %3964 = vmatpush.msra.mxu0 0.0
        %3965 = vmatpush.msra.mxu0 0.0
        %3966 = vmatpush.msra.mxu0 0.0
        %3967 = vmatpush.msra.mxu0 0.0
        %3968 = vmatpush.msra.mxu0 0.0
        %3969 = vmatpush.msra.mxu0 0.0
        %3970 = vmatpush.msra.mxu0 0.0
        %3971 = vmatpush.msra.mxu0 0.0
        %3972 = vmatpush.msra.mxu0 0.0
        %3973 = vmatpush.msra.mxu0 0.0
        %3974 = vmatpush.msra.mxu0 0.0
        %3975 = vmatpush.msra.mxu0 0.0
        %3976 = vmatpush.msra.mxu0 0.0
        %3977 = vmatpush.msra.mxu0 %v3957
        %3978 = vmatpush.msra.mxu0 %v3955
        %3979 = vmatmul.f32.gmra.mxu0 %v3961
        %v3980 = vpop.f32.mrf.mxu0
        %v3981 = vadd.f32 0.0, %v3980
        %3982 = vdwg.mxu0
        %3983 = vrot.lane.b32.xlu0 %v3180, 120
        %v3984 = vpop.permute.xlu0 %3983
        %3985 = vrot.lane.b32.xlu0 %v3280, 120
        %v3986 = vpop.permute.xlu0 %3985
        %3987 = vrot.lane.b32.xlu0 %v3283, 120
        %v3988 = vpop.permute.xlu0 %3987
        %v3989 = vsel %vm524, %v3984, 0
        %v3991 = vsel %vm524, %v3986, 0
        %v3993 = vsel %vm524, %v3988, 0
        %3995 = vmatpush.xpose.msra.mxu0 0.0
        %3996 = vmatpush.xpose.msra.mxu0 0.0
        %3997 = vmatpush.xpose.msra.mxu0 0.0
        %3998 = vmatpush.xpose.msra.mxu0 0.0
        %3999 = vmatpush.xpose.msra.mxu0 0.0
        %4000 = vmatpush.xpose.msra.mxu0 0.0
        %4001 = vmatpush.xpose.msra.mxu0 0.0
        %4002 = vmatpush.xpose.msra.mxu0 0.0
        %4003 = vmatpush.xpose.msra.mxu0 0.0
        %4004 = vmatpush.xpose.msra.mxu0 0.0
        %4005 = vmatpush.xpose.msra.mxu0 0.0
        %4006 = vmatpush.xpose.msra.mxu0 0.0
        %4007 = vmatpush.xpose.msra.mxu0 0.0
        %4008 = vmatpush.xpose.msra.mxu0 0.0
        %4009 = vmatpush.xpose.msra.mxu0 %v3993
        %4010 = vmatpush.xpose.msra.mxu0 %v3991
        %4011 = vmatmul.f32.gmra.mxu0 %v3989
        %v4012 = vpop.f32.mrf.mxu0
        %v4013 = vadd.f32 0.0, %v4012
        %4014 = vdwg.mxu0
        %4015 = vrot.lane.b32.xlu0 %v3183, 120
        %v4016 = vpop.permute.xlu0 %4015
        %4017 = vrot.lane.b32.xlu0 %v3286, 120
        %v4018 = vpop.permute.xlu0 %4017
        %4019 = vrot.lane.b32.xlu0 %v3289, 120
        %v4020 = vpop.permute.xlu0 %4019
        %v4021 = vsel %vm524, %v4016, 0
        %v4023 = vsel %vm524, %v4018, 0
        %v4025 = vsel %vm524, %v4020, 0
        %4027 = vmatpush.xpose.msra.mxu0 0.0
        %4028 = vmatpush.xpose.msra.mxu0 0.0
        %4029 = vmatpush.xpose.msra.mxu0 0.0
        %4030 = vmatpush.xpose.msra.mxu0 0.0
        %4031 = vmatpush.xpose.msra.mxu0 0.0
        %4032 = vmatpush.xpose.msra.mxu0 0.0
        %4033 = vmatpush.xpose.msra.mxu0 0.0
        %4034 = vmatpush.xpose.msra.mxu0 0.0
        %4035 = vmatpush.xpose.msra.mxu0 0.0
        %4036 = vmatpush.xpose.msra.mxu0 0.0
        %4037 = vmatpush.xpose.msra.mxu0 0.0
        %4038 = vmatpush.xpose.msra.mxu0 0.0
        %4039 = vmatpush.xpose.msra.mxu0 0.0
        %4040 = vmatpush.xpose.msra.mxu0 0.0
        %4041 = vmatpush.xpose.msra.mxu0 %v4025
        %4042 = vmatpush.xpose.msra.mxu0 %v4023
        %4043 = vmatmul.f32.gmra.mxu0 %v4021
        %v4044 = vpop.f32.mrf.mxu0
        %v4045 = vadd.f32 0.0, %v4044
        %4046 = vdwg.mxu0
        %4047 = vrot.lane.b32.xlu0 %v3186, 120
        %v4048 = vpop.permute.xlu0 %4047
        %4049 = vrot.lane.b32.xlu0 %v3292, 120
        %v4050 = vpop.permute.xlu0 %4049
        %4051 = vrot.lane.b32.xlu0 %v3295, 120
        %v4052 = vpop.permute.xlu0 %4051
        %v4053 = vsel %vm524, %v4048, 0
        %v4055 = vsel %vm524, %v4050, 0
        %v4057 = vsel %vm524, %v4052, 0
        %4059 = vmatpush.xpose.msra.mxu0 0.0
        %4060 = vmatpush.xpose.msra.mxu0 0.0
        %4061 = vmatpush.xpose.msra.mxu0 0.0
        %4062 = vmatpush.xpose.msra.mxu0 0.0
        %4063 = vmatpush.xpose.msra.mxu0 0.0
        %4064 = vmatpush.xpose.msra.mxu0 0.0
        %4065 = vmatpush.xpose.msra.mxu0 0.0
        %4066 = vmatpush.xpose.msra.mxu0 0.0
        %4067 = vmatpush.xpose.msra.mxu0 0.0
        %4068 = vmatpush.xpose.msra.mxu0 0.0
        %4069 = vmatpush.xpose.msra.mxu0 0.0
        %4070 = vmatpush.xpose.msra.mxu0 0.0
        %4071 = vmatpush.xpose.msra.mxu0 0.0
        %4072 = vmatpush.xpose.msra.mxu0 0.0
        %4073 = vmatpush.xpose.msra.mxu0 %v4057
        %4074 = vmatpush.xpose.msra.mxu0 %v4055
        %4075 = vmatmul.f32.gmra.mxu0 %v4053
        %v4076 = vpop.f32.mrf.mxu0
        %v4077 = vadd.f32 0.0, %v4076
        %4078 = vdwg.mxu0
        %4079 = vrot.lane.b32.xlu0 %v3189, 120
        %v4080 = vpop.permute.xlu0 %4079
        %4081 = vrot.lane.b32.xlu0 %v3298, 120
        %v4082 = vpop.permute.xlu0 %4081
        %4083 = vrot.lane.b32.xlu0 %v3301, 120
        %v4084 = vpop.permute.xlu0 %4083
        %v4085 = vsel %vm524, %v4080, 0
        %v4087 = vsel %vm524, %v4082, 0
        %v4089 = vsel %vm524, %v4084, 0
        %4091 = vmatpush.xpose.msra.mxu0 0.0
        %4092 = vmatpush.xpose.msra.mxu0 0.0
        %4093 = vmatpush.xpose.msra.mxu0 0.0
        %4094 = vmatpush.xpose.msra.mxu0 0.0
        %4095 = vmatpush.xpose.msra.mxu0 0.0
        %4096 = vmatpush.xpose.msra.mxu0 0.0
        %4097 = vmatpush.xpose.msra.mxu0 0.0
        %4098 = vmatpush.xpose.msra.mxu0 0.0
        %4099 = vmatpush.xpose.msra.mxu0 0.0
        %4100 = vmatpush.xpose.msra.mxu0 0.0
        %4101 = vmatpush.xpose.msra.mxu0 0.0
        %4102 = vmatpush.xpose.msra.mxu0 0.0
        %4103 = vmatpush.xpose.msra.mxu0 0.0
        %4104 = vmatpush.xpose.msra.mxu0 0.0
        %4105 = vmatpush.xpose.msra.mxu0 %v4089
        %4106 = vmatpush.xpose.msra.mxu0 %v4087
        %4107 = vmatmul.f32.gmra.mxu0 %v4085
        %v4108 = vpop.f32.mrf.mxu0
        %v4109 = vadd.f32 0.0, %v4108
        %4110 = vdwg.mxu0
        %4111 = vrot.lane.b32.xlu0 %v3192, 120
        %v4112 = vpop.permute.xlu0 %4111
        %4113 = vrot.lane.b32.xlu0 %v3304, 120
        %v4114 = vpop.permute.xlu0 %4113
        %4115 = vrot.lane.b32.xlu0 %v3307, 120
        %v4116 = vpop.permute.xlu0 %4115
        %v4117 = vsel %vm524, %v4112, 0
        %v4119 = vsel %vm524, %v4114, 0
        %v4121 = vsel %vm524, %v4116, 0
        %4123 = vmatpush.xpose.msra.mxu0 0.0
        %4124 = vmatpush.xpose.msra.mxu0 0.0
        %4125 = vmatpush.xpose.msra.mxu0 0.0
        %4126 = vmatpush.xpose.msra.mxu0 0.0
        %4127 = vmatpush.xpose.msra.mxu0 0.0
        %4128 = vmatpush.xpose.msra.mxu0 0.0
        %4129 = vmatpush.xpose.msra.mxu0 0.0
        %4130 = vmatpush.xpose.msra.mxu0 0.0
        %4131 = vmatpush.xpose.msra.mxu0 0.0
        %4132 = vmatpush.xpose.msra.mxu0 0.0
        %4133 = vmatpush.xpose.msra.mxu0 0.0
        %4134 = vmatpush.xpose.msra.mxu0 0.0
        %4135 = vmatpush.xpose.msra.mxu0 0.0
        %4136 = vmatpush.xpose.msra.mxu0 0.0
        %4137 = vmatpush.xpose.msra.mxu0 %v4121
        %4138 = vmatpush.xpose.msra.mxu0 %v4119
        %4139 = vmatmul.f32.gmra.mxu0 %v4117
        %v4140 = vpop.f32.mrf.mxu0
        %v4141 = vadd.f32 0.0, %v4140
        %4142 = vdwg.mxu0
        %4143 = vrot.lane.b32.xlu0 %v3195, 120
        %v4144 = vpop.permute.xlu0 %4143
        %4145 = vrot.lane.b32.xlu0 %v3310, 120
        %v4146 = vpop.permute.xlu0 %4145
        %4147 = vrot.lane.b32.xlu0 %v3313, 120
        %v4148 = vpop.permute.xlu0 %4147
        %v4149 = vsel %vm524, %v4144, 0
        %v4151 = vsel %vm524, %v4146, 0
        %v4153 = vsel %vm524, %v4148, 0
        %4155 = vmatpush.xpose.msra.mxu0 0.0
        %4156 = vmatpush.xpose.msra.mxu0 0.0
        %4157 = vmatpush.xpose.msra.mxu0 0.0
        %4158 = vmatpush.xpose.msra.mxu0 0.0
        %4159 = vmatpush.xpose.msra.mxu0 0.0
        %4160 = vmatpush.xpose.msra.mxu0 0.0
        %4161 = vmatpush.xpose.msra.mxu0 0.0
        %4162 = vmatpush.xpose.msra.mxu0 0.0
        %4163 = vmatpush.xpose.msra.mxu0 0.0
        %4164 = vmatpush.xpose.msra.mxu0 0.0
        %4165 = vmatpush.xpose.msra.mxu0 0.0
        %4166 = vmatpush.xpose.msra.mxu0 0.0
        %4167 = vmatpush.xpose.msra.mxu0 0.0
        %4168 = vmatpush.xpose.msra.mxu0 0.0
        %4169 = vmatpush.xpose.msra.mxu0 %v4153
        %4170 = vmatpush.xpose.msra.mxu0 %v4151
        %4171 = vmatmul.f32.gmra.mxu0 %v4149
        %v4172 = vpop.f32.mrf.mxu0
        %v4173 = vadd.f32 0.0, %v4172
        %4174 = vdwg.mxu0
        %4175 = vrot.lane.b32.xlu0 %v3198, 120
        %v4176 = vpop.permute.xlu0 %4175
        %4177 = vrot.lane.b32.xlu0 %v3316, 120
        %v4178 = vpop.permute.xlu0 %4177
        %4179 = vrot.lane.b32.xlu0 %v3319, 120
        %v4180 = vpop.permute.xlu0 %4179
        %v4181 = vsel %vm524, %v4176, 0
        %v4183 = vsel %vm524, %v4178, 0
        %v4185 = vsel %vm524, %v4180, 0
        %4187 = vmatpush.xpose.msra.mxu0 0.0
        %4188 = vmatpush.xpose.msra.mxu0 0.0
        %4189 = vmatpush.xpose.msra.mxu0 0.0
        %4190 = vmatpush.xpose.msra.mxu0 0.0
        %4191 = vmatpush.xpose.msra.mxu0 0.0
        %4192 = vmatpush.xpose.msra.mxu0 0.0
        %4193 = vmatpush.xpose.msra.mxu0 0.0
        %4194 = vmatpush.xpose.msra.mxu0 0.0
        %4195 = vmatpush.xpose.msra.mxu0 0.0
        %4196 = vmatpush.xpose.msra.mxu0 0.0
        %4197 = vmatpush.xpose.msra.mxu0 0.0
        %4198 = vmatpush.xpose.msra.mxu0 0.0
        %4199 = vmatpush.xpose.msra.mxu0 0.0
        %4200 = vmatpush.xpose.msra.mxu0 0.0
        %4201 = vmatpush.xpose.msra.mxu0 %v4185
        %4202 = vmatpush.xpose.msra.mxu0 %v4183
        %4203 = vmatmul.f32.gmra.mxu0 %v4181
        %v4204 = vpop.f32.mrf.mxu0
        %v4205 = vadd.f32 0.0, %v4204
        %4206 = vdwg.mxu0
        %4207 = vrot.lane.b32.xlu0 %v3201, 120
        %v4208 = vpop.permute.xlu0 %4207
        %4209 = vrot.lane.b32.xlu0 %v3322, 120
        %v4210 = vpop.permute.xlu0 %4209
        %4211 = vrot.lane.b32.xlu0 %v3325, 120
        %v4212 = vpop.permute.xlu0 %4211
        %v4213 = vsel %vm524, %v4208, 0
        %v4215 = vsel %vm524, %v4210, 0
        %v4217 = vsel %vm524, %v4212, 0
        %4219 = vmatpush.xpose.msra.mxu0 0.0
        %4220 = vmatpush.xpose.msra.mxu0 0.0
        %4221 = vmatpush.xpose.msra.mxu0 0.0
        %4222 = vmatpush.xpose.msra.mxu0 0.0
        %4223 = vmatpush.xpose.msra.mxu0 0.0
        %4224 = vmatpush.xpose.msra.mxu0 0.0
        %4225 = vmatpush.xpose.msra.mxu0 0.0
        %4226 = vmatpush.xpose.msra.mxu0 0.0
        %4227 = vmatpush.xpose.msra.mxu0 0.0
        %4228 = vmatpush.xpose.msra.mxu0 0.0
        %4229 = vmatpush.xpose.msra.mxu0 0.0
        %4230 = vmatpush.xpose.msra.mxu0 0.0
        %4231 = vmatpush.xpose.msra.mxu0 0.0
        %4232 = vmatpush.xpose.msra.mxu0 0.0
        %4233 = vmatpush.xpose.msra.mxu0 %v4217
        %4234 = vmatpush.xpose.msra.mxu0 %v4215
        %4235 = vmatmul.f32.gmra.mxu0 %v4213
        %v4236 = vpop.f32.mrf.mxu0
        %v4237 = vadd.f32 0.0, %v4236
        %4238 = vdwg.mxu0
        %v4239 = vsel %vm3114, %v4013, -inf
        %4240 = vmax.xlane.f32.xlu0 %v4239
        %v4241 = vpop.xlane.xlu0 %4240
        %v4242 = vsel %vm3114, %v4045, -inf
        %4243 = vmax.xlane.f32.xlu0 %v4242
        %v4244 = vpop.xlane.xlu0 %4243
        %v4245 = vsel %vm3114, %v4077, -inf
        %4246 = vmax.xlane.f32.xlu0 %v4245
        %v4247 = vpop.xlane.xlu0 %4246
        %v4248 = vsel %vm3114, %v4109, -inf
        %4249 = vmax.xlane.f32.xlu0 %v4248
        %v4250 = vpop.xlane.xlu0 %4249
        %v4251 = vsel %vm3114, %v4141, -inf
        %4252 = vmax.xlane.f32.xlu0 %v4251
        %v4253 = vpop.xlane.xlu0 %4252
        %v4254 = vsel %vm3114, %v4173, -inf
        %4255 = vmax.xlane.f32.xlu0 %v4254
        %v4256 = vpop.xlane.xlu0 %4255
        %v4257 = vsel %vm3114, %v4205, -inf
        %4258 = vmax.xlane.f32.xlu0 %v4257
        %v4259 = vpop.xlane.xlu0 %4258
        %v4260 = vsel %vm3114, %v4237, -inf
        %4261 = vmax.xlane.f32.xlu0 %v4260
        %v4262 = vpop.xlane.xlu0 %4261
        %v4263 = vsub.f32 %v4013, %v4241
        %v4264 = vsub.f32 %v4045, %v4244
        %v4265 = vsub.f32 %v4077, %v4247
        %v4266 = vsub.f32 %v4109, %v4250
        %v4267 = vsub.f32 %v4141, %v4253
        %v4268 = vsub.f32 %v4173, %v4256
        %v4269 = vsub.f32 %v4205, %v4259
        %v4270 = vsub.f32 %v4237, %v4262
        %v4271 = vmul.f32 %v4263, 1.442695
        %v4272 = vpow.pop %v4271
        %v4273 = vmul.f32 %v4264, 1.442695
        %v4274 = vpow.pop %v4273
        %v4275 = vmul.f32 %v4265, 1.442695
        %v4276 = vpow.pop %v4275
        %v4277 = vmul.f32 %v4266, 1.442695
        %v4278 = vpow.pop %v4277
        %v4279 = vmul.f32 %v4267, 1.442695
        %v4280 = vpow.pop %v4279
        %v4281 = vmul.f32 %v4268, 1.442695
        %v4282 = vpow.pop %v4281
        %v4283 = vmul.f32 %v4269, 1.442695
        %v4284 = vpow.pop %v4283
        %v4285 = vmul.f32 %v4270, 1.442695
        %v4286 = vpow.pop %v4285
        %v4287 = vsel %vm3114, %v4272, 0.0
        %4288 = vadd.xlane.f32.xlu0 %v4287
        %v4289 = vpop.xlane.xlu0 %4288
        %v4290 = vsel %vm3114, %v4274, 0.0
        %4291 = vadd.xlane.f32.xlu0 %v4290
        %v4292 = vpop.xlane.xlu0 %4291
        %v4293 = vsel %vm3114, %v4276, 0.0
        %4294 = vadd.xlane.f32.xlu0 %v4293
        %v4295 = vpop.xlane.xlu0 %4294
        %v4296 = vsel %vm3114, %v4278, 0.0
        %4297 = vadd.xlane.f32.xlu0 %v4296
        %v4298 = vpop.xlane.xlu0 %4297
        %v4299 = vsel %vm3114, %v4280, 0.0
        %4300 = vadd.xlane.f32.xlu0 %v4299
        %v4301 = vpop.xlane.xlu0 %4300
        %v4302 = vsel %vm3114, %v4282, 0.0
        %4303 = vadd.xlane.f32.xlu0 %v4302
        %v4304 = vpop.xlane.xlu0 %4303
        %v4305 = vsel %vm3114, %v4284, 0.0
        %4306 = vadd.xlane.f32.xlu0 %v4305
        %v4307 = vpop.xlane.xlu0 %4306
        %v4308 = vsel %vm3114, %v4286, 0.0
        %4309 = vadd.xlane.f32.xlu0 %v4308
        %v4310 = vpop.xlane.xlu0 %4309
        %v4311 = vrcp.pop %v4289
        %v4312 = vmul.f32 %v4289, %v4311
        %v4313 = vsub.f32 1.0, %v4312
        %v4314 = vmul.f32 %v4311, %v4313
        %v4315 = vadd.f32 %v4311, %v4314
        %vm4316 = vweird.f32 %v4289
        %vm4317 = vweird.f32 %v4311
        %vm4318 = vmor %vm4316, %vm4317
        %v4319 = vsel %vm4318, %v4311, %v4315
        %v4320 = vand.u32 2147483647, %v4289
        %vm4321 = vcmp.eq.f32.partialorder %v4320, 8.507059e+37
        %v4322 = vand.u32 %v4289, 2147483648
        %v4323 = vor.u32 1.1754944e-38, %v4322
        %v4324 = vsel %vm4321, %v4323, %v4319
        %v4325 = vmul.f32 %v4272, %v4324
        %v4326 = vrcp.pop %v4292
        %v4327 = vmul.f32 %v4292, %v4326
        %v4328 = vsub.f32 1.0, %v4327
        %v4329 = vmul.f32 %v4326, %v4328
        %v4330 = vadd.f32 %v4326, %v4329
        %vm4331 = vweird.f32 %v4292
        %vm4332 = vweird.f32 %v4326
        %vm4333 = vmor %vm4331, %vm4332
        %v4334 = vsel %vm4333, %v4326, %v4330
        %v4335 = vand.u32 2147483647, %v4292
        %vm4336 = vcmp.eq.f32.partialorder %v4335, 8.507059e+37
        %v4337 = vand.u32 %v4292, 2147483648
        %v4338 = vor.u32 1.1754944e-38, %v4337
        %v4339 = vsel %vm4336, %v4338, %v4334
        %v4340 = vmul.f32 %v4274, %v4339
        %v4341 = vrcp.pop %v4295
        %v4342 = vmul.f32 %v4295, %v4341
        %v4343 = vsub.f32 1.0, %v4342
        %v4344 = vmul.f32 %v4341, %v4343
        %v4345 = vadd.f32 %v4341, %v4344
        %vm4346 = vweird.f32 %v4295
        %vm4347 = vweird.f32 %v4341
        %vm4348 = vmor %vm4346, %vm4347
        %v4349 = vsel %vm4348, %v4341, %v4345
        %v4350 = vand.u32 2147483647, %v4295
        %vm4351 = vcmp.eq.f32.partialorder %v4350, 8.507059e+37
        %v4352 = vand.u32 %v4295, 2147483648
        %v4353 = vor.u32 1.1754944e-38, %v4352
        %v4354 = vsel %vm4351, %v4353, %v4349
        %v4355 = vmul.f32 %v4276, %v4354
        %v4356 = vrcp.pop %v4298
        %v4357 = vmul.f32 %v4298, %v4356
        %v4358 = vsub.f32 1.0, %v4357
        %v4359 = vmul.f32 %v4356, %v4358
        %v4360 = vadd.f32 %v4356, %v4359
        %vm4361 = vweird.f32 %v4298
        %vm4362 = vweird.f32 %v4356
        %vm4363 = vmor %vm4361, %vm4362
        %v4364 = vsel %vm4363, %v4356, %v4360
        %v4365 = vand.u32 2147483647, %v4298
        %vm4366 = vcmp.eq.f32.partialorder %v4365, 8.507059e+37
        %v4367 = vand.u32 %v4298, 2147483648
        %v4368 = vor.u32 1.1754944e-38, %v4367
        %v4369 = vsel %vm4366, %v4368, %v4364
        %v4370 = vmul.f32 %v4278, %v4369
        %v4371 = vrcp.pop %v4301
        %v4372 = vmul.f32 %v4301, %v4371
        %v4373 = vsub.f32 1.0, %v4372
        %v4374 = vmul.f32 %v4371, %v4373
        %v4375 = vadd.f32 %v4371, %v4374
        %vm4376 = vweird.f32 %v4301
        %vm4377 = vweird.f32 %v4371
        %vm4378 = vmor %vm4376, %vm4377
        %v4379 = vsel %vm4378, %v4371, %v4375
        %v4380 = vand.u32 2147483647, %v4301
        %vm4381 = vcmp.eq.f32.partialorder %v4380, 8.507059e+37
        %v4382 = vand.u32 %v4301, 2147483648
        %v4383 = vor.u32 1.1754944e-38, %v4382
        %v4384 = vsel %vm4381, %v4383, %v4379
        %v4385 = vmul.f32 %v4280, %v4384
        %v4386 = vrcp.pop %v4304
        %v4387 = vmul.f32 %v4304, %v4386
        %v4388 = vsub.f32 1.0, %v4387
        %v4389 = vmul.f32 %v4386, %v4388
        %v4390 = vadd.f32 %v4386, %v4389
        %vm4391 = vweird.f32 %v4304
        %vm4392 = vweird.f32 %v4386
        %vm4393 = vmor %vm4391, %vm4392
        %v4394 = vsel %vm4393, %v4386, %v4390
        %v4395 = vand.u32 2147483647, %v4304
        %vm4396 = vcmp.eq.f32.partialorder %v4395, 8.507059e+37
        %v4397 = vand.u32 %v4304, 2147483648
        %v4398 = vor.u32 1.1754944e-38, %v4397
        %v4399 = vsel %vm4396, %v4398, %v4394
        %v4400 = vmul.f32 %v4282, %v4399
        %v4401 = vrcp.pop %v4307
        %v4402 = vmul.f32 %v4307, %v4401
        %v4403 = vsub.f32 1.0, %v4402
        %v4404 = vmul.f32 %v4401, %v4403
        %v4405 = vadd.f32 %v4401, %v4404
        %vm4406 = vweird.f32 %v4307
        %vm4407 = vweird.f32 %v4401
        %vm4408 = vmor %vm4406, %vm4407
        %v4409 = vsel %vm4408, %v4401, %v4405
        %v4410 = vand.u32 2147483647, %v4307
        %vm4411 = vcmp.eq.f32.partialorder %v4410, 8.507059e+37
        %v4412 = vand.u32 %v4307, 2147483648
        %v4413 = vor.u32 1.1754944e-38, %v4412
        %v4414 = vsel %vm4411, %v4413, %v4409
        %v4415 = vmul.f32 %v4284, %v4414
        %v4416 = vrcp.pop %v4310
        %v4417 = vmul.f32 %v4310, %v4416
        %v4418 = vsub.f32 1.0, %v4417
        %v4419 = vmul.f32 %v4416, %v4418
        %v4420 = vadd.f32 %v4416, %v4419
        %vm4421 = vweird.f32 %v4310
        %vm4422 = vweird.f32 %v4416
        %vm4423 = vmor %vm4421, %vm4422
        %v4424 = vsel %vm4423, %v4416, %v4420
        %v4425 = vand.u32 2147483647, %v4310
        %vm4426 = vcmp.eq.f32.partialorder %v4425, 8.507059e+37
        %v4427 = vand.u32 %v4310, 2147483648
        %v4428 = vor.u32 1.1754944e-38, %v4427
        %v4429 = vsel %vm4426, %v4428, %v4424
        %v4430 = vmul.f32 %v4286, %v4429
        %4431 = vrot.lane.b32.xlu0 %v3280, 88
        %v4432 = vpop.permute.xlu0 %4431
        %4433 = vrot.lane.b32.xlu0 %v3283, 88
        %v4434 = vpop.permute.xlu0 %4433
        %v4438 = vsel %vm3114, %v4325, 0
        %4440 = vmatpush.msra.mxu0 0.0
        %4441 = vmatpush.msra.mxu0 0.0
        %4442 = vmatpush.msra.mxu0 0.0
        %4443 = vmatpush.msra.mxu0 0.0
        %4444 = vmatpush.msra.mxu0 0.0
        %4445 = vmatpush.msra.mxu0 0.0
        %4446 = vmatpush.msra.mxu0 0.0
        %4447 = vmatpush.msra.mxu0 0.0
        %4448 = vmatpush.msra.mxu0 0.0
        %4449 = vmatpush.msra.mxu0 0.0
        %4450 = vmatpush.msra.mxu0 0.0
        %4451 = vmatpush.msra.mxu0 0.0
        %4452 = vmatpush.msra.mxu0 0.0
        %4453 = vmatpush.msra.mxu0 0.0
        %4454 = vmatpush.msra.mxu0 %v4434
        %4455 = vmatpush.msra.mxu0 %v4432
        %4456 = vmatmul.f32.gmra.mxu0 %v4438
        %v4457 = vpop.f32.mrf.mxu0
        %v4458 = vadd.f32 0.0, %v4457
        %4459 = vdwg.mxu0
        %4460 = vrot.lane.b32.xlu0 %v3286, 88
        %v4461 = vpop.permute.xlu0 %4460
        %4462 = vrot.lane.b32.xlu0 %v3289, 88
        %v4463 = vpop.permute.xlu0 %4462
        %v4467 = vsel %vm3114, %v4340, 0
        %4469 = vmatpush.msra.mxu0 0.0
        %4470 = vmatpush.msra.mxu0 0.0
        %4471 = vmatpush.msra.mxu0 0.0
        %4472 = vmatpush.msra.mxu0 0.0
        %4473 = vmatpush.msra.mxu0 0.0
        %4474 = vmatpush.msra.mxu0 0.0
        %4475 = vmatpush.msra.mxu0 0.0
        %4476 = vmatpush.msra.mxu0 0.0
        %4477 = vmatpush.msra.mxu0 0.0
        %4478 = vmatpush.msra.mxu0 0.0
        %4479 = vmatpush.msra.mxu0 0.0
        %4480 = vmatpush.msra.mxu0 0.0
        %4481 = vmatpush.msra.mxu0 0.0
        %4482 = vmatpush.msra.mxu0 0.0
        %4483 = vmatpush.msra.mxu0 %v4463
        %4484 = vmatpush.msra.mxu0 %v4461
        %4485 = vmatmul.f32.gmra.mxu0 %v4467
        %v4486 = vpop.f32.mrf.mxu0
        %v4487 = vadd.f32 0.0, %v4486
        %4488 = vdwg.mxu0
        %4489 = vrot.lane.b32.xlu0 %v3292, 88
        %v4490 = vpop.permute.xlu0 %4489
        %4491 = vrot.lane.b32.xlu0 %v3295, 88
        %v4492 = vpop.permute.xlu0 %4491
        %v4496 = vsel %vm3114, %v4355, 0
        %4498 = vmatpush.msra.mxu0 0.0
        %4499 = vmatpush.msra.mxu0 0.0
        %4500 = vmatpush.msra.mxu0 0.0
        %4501 = vmatpush.msra.mxu0 0.0
        %4502 = vmatpush.msra.mxu0 0.0
        %4503 = vmatpush.msra.mxu0 0.0
        %4504 = vmatpush.msra.mxu0 0.0
        %4505 = vmatpush.msra.mxu0 0.0
        %4506 = vmatpush.msra.mxu0 0.0
        %4507 = vmatpush.msra.mxu0 0.0
        %4508 = vmatpush.msra.mxu0 0.0
        %4509 = vmatpush.msra.mxu0 0.0
        %4510 = vmatpush.msra.mxu0 0.0
        %4511 = vmatpush.msra.mxu0 0.0
        %4512 = vmatpush.msra.mxu0 %v4492
        %4513 = vmatpush.msra.mxu0 %v4490
        %4514 = vmatmul.f32.gmra.mxu0 %v4496
        %v4515 = vpop.f32.mrf.mxu0
        %v4516 = vadd.f32 0.0, %v4515
        %4517 = vdwg.mxu0
        %4518 = vrot.lane.b32.xlu0 %v3298, 88
        %v4519 = vpop.permute.xlu0 %4518
        %4520 = vrot.lane.b32.xlu0 %v3301, 88
        %v4521 = vpop.permute.xlu0 %4520
        %v4525 = vsel %vm3114, %v4370, 0
        %4527 = vmatpush.msra.mxu0 0.0
        %4528 = vmatpush.msra.mxu0 0.0
        %4529 = vmatpush.msra.mxu0 0.0
        %4530 = vmatpush.msra.mxu0 0.0
        %4531 = vmatpush.msra.mxu0 0.0
        %4532 = vmatpush.msra.mxu0 0.0
        %4533 = vmatpush.msra.mxu0 0.0
        %4534 = vmatpush.msra.mxu0 0.0
        %4535 = vmatpush.msra.mxu0 0.0
        %4536 = vmatpush.msra.mxu0 0.0
        %4537 = vmatpush.msra.mxu0 0.0
        %4538 = vmatpush.msra.mxu0 0.0
        %4539 = vmatpush.msra.mxu0 0.0
        %4540 = vmatpush.msra.mxu0 0.0
        %4541 = vmatpush.msra.mxu0 %v4521
        %4542 = vmatpush.msra.mxu0 %v4519
        %4543 = vmatmul.f32.gmra.mxu0 %v4525
        %v4544 = vpop.f32.mrf.mxu0
        %v4545 = vadd.f32 0.0, %v4544
        %4546 = vdwg.mxu0
        %4547 = vrot.lane.b32.xlu0 %v3304, 88
        %v4548 = vpop.permute.xlu0 %4547
        %4549 = vrot.lane.b32.xlu0 %v3307, 88
        %v4550 = vpop.permute.xlu0 %4549
        %v4554 = vsel %vm3114, %v4385, 0
        %4556 = vmatpush.msra.mxu0 0.0
        %4557 = vmatpush.msra.mxu0 0.0
        %4558 = vmatpush.msra.mxu0 0.0
        %4559 = vmatpush.msra.mxu0 0.0
        %4560 = vmatpush.msra.mxu0 0.0
        %4561 = vmatpush.msra.mxu0 0.0
        %4562 = vmatpush.msra.mxu0 0.0
        %4563 = vmatpush.msra.mxu0 0.0
        %4564 = vmatpush.msra.mxu0 0.0
        %4565 = vmatpush.msra.mxu0 0.0
        %4566 = vmatpush.msra.mxu0 0.0
        %4567 = vmatpush.msra.mxu0 0.0
        %4568 = vmatpush.msra.mxu0 0.0
        %4569 = vmatpush.msra.mxu0 0.0
        %4570 = vmatpush.msra.mxu0 %v4550
        %4571 = vmatpush.msra.mxu0 %v4548
        %4572 = vmatmul.f32.gmra.mxu0 %v4554
        %v4573 = vpop.f32.mrf.mxu0
        %v4574 = vadd.f32 0.0, %v4573
        %4575 = vdwg.mxu0
        %4576 = vrot.lane.b32.xlu0 %v3310, 88
        %v4577 = vpop.permute.xlu0 %4576
        %4578 = vrot.lane.b32.xlu0 %v3313, 88
        %v4579 = vpop.permute.xlu0 %4578
        %v4583 = vsel %vm3114, %v4400, 0
        %4585 = vmatpush.msra.mxu0 0.0
        %4586 = vmatpush.msra.mxu0 0.0
        %4587 = vmatpush.msra.mxu0 0.0
        %4588 = vmatpush.msra.mxu0 0.0
        %4589 = vmatpush.msra.mxu0 0.0
        %4590 = vmatpush.msra.mxu0 0.0
        %4591 = vmatpush.msra.mxu0 0.0
        %4592 = vmatpush.msra.mxu0 0.0
        %4593 = vmatpush.msra.mxu0 0.0
        %4594 = vmatpush.msra.mxu0 0.0
        %4595 = vmatpush.msra.mxu0 0.0
        %4596 = vmatpush.msra.mxu0 0.0
        %4597 = vmatpush.msra.mxu0 0.0
        %4598 = vmatpush.msra.mxu0 0.0
        %4599 = vmatpush.msra.mxu0 %v4579
        %4600 = vmatpush.msra.mxu0 %v4577
        %4601 = vmatmul.f32.gmra.mxu0 %v4583
        %v4602 = vpop.f32.mrf.mxu0
        %v4603 = vadd.f32 0.0, %v4602
        %4604 = vdwg.mxu0
        %4605 = vrot.lane.b32.xlu0 %v3316, 88
        %v4606 = vpop.permute.xlu0 %4605
        %4607 = vrot.lane.b32.xlu0 %v3319, 88
        %v4608 = vpop.permute.xlu0 %4607
        %v4612 = vsel %vm3114, %v4415, 0
        %4614 = vmatpush.msra.mxu0 0.0
        %4615 = vmatpush.msra.mxu0 0.0
        %4616 = vmatpush.msra.mxu0 0.0
        %4617 = vmatpush.msra.mxu0 0.0
        %4618 = vmatpush.msra.mxu0 0.0
        %4619 = vmatpush.msra.mxu0 0.0
        %4620 = vmatpush.msra.mxu0 0.0
        %4621 = vmatpush.msra.mxu0 0.0
        %4622 = vmatpush.msra.mxu0 0.0
        %4623 = vmatpush.msra.mxu0 0.0
        %4624 = vmatpush.msra.mxu0 0.0
        %4625 = vmatpush.msra.mxu0 0.0
        %4626 = vmatpush.msra.mxu0 0.0
        %4627 = vmatpush.msra.mxu0 0.0
        %4628 = vmatpush.msra.mxu0 %v4608
        %4629 = vmatpush.msra.mxu0 %v4606
        %4630 = vmatmul.f32.gmra.mxu0 %v4612
        %v4631 = vpop.f32.mrf.mxu0
        %v4632 = vadd.f32 0.0, %v4631
        %4633 = vdwg.mxu0
        %4634 = vrot.lane.b32.xlu0 %v3322, 88
        %v4635 = vpop.permute.xlu0 %4634
        %4636 = vrot.lane.b32.xlu0 %v3325, 88
        %v4637 = vpop.permute.xlu0 %4636
        %v4641 = vsel %vm3114, %v4430, 0
        %4643 = vmatpush.msra.mxu0 0.0
        %4644 = vmatpush.msra.mxu0 0.0
        %4645 = vmatpush.msra.mxu0 0.0
        %4646 = vmatpush.msra.mxu0 0.0
        %4647 = vmatpush.msra.mxu0 0.0
        %4648 = vmatpush.msra.mxu0 0.0
        %4649 = vmatpush.msra.mxu0 0.0
        %4650 = vmatpush.msra.mxu0 0.0
        %4651 = vmatpush.msra.mxu0 0.0
        %4652 = vmatpush.msra.mxu0 0.0
        %4653 = vmatpush.msra.mxu0 0.0
        %4654 = vmatpush.msra.mxu0 0.0
        %4655 = vmatpush.msra.mxu0 0.0
        %4656 = vmatpush.msra.mxu0 0.0
        %4657 = vmatpush.msra.mxu0 %v4637
        %4658 = vmatpush.msra.mxu0 %v4635
        %4659 = vmatmul.f32.gmra.mxu0 %v4641
        %v4660 = vpop.f32.mrf.mxu0
        %v4661 = vadd.f32 0.0, %v4660
        %4662 = vdwg.mxu0
        %4663 = vrot.lane.b32.xlu0 %v3180, 112
        %v4664 = vpop.permute.xlu0 %4663
        %4665 = vrot.lane.b32.xlu0 %v3280, 112
        %v4666 = vpop.permute.xlu0 %4665
        %4667 = vrot.lane.b32.xlu0 %v3283, 112
        %v4668 = vpop.permute.xlu0 %4667
        %v4669 = vsel %vm524, %v4664, 0
        %v4671 = vsel %vm524, %v4666, 0
        %v4673 = vsel %vm524, %v4668, 0
        %4675 = vmatpush.xpose.msra.mxu0 0.0
        %4676 = vmatpush.xpose.msra.mxu0 0.0
        %4677 = vmatpush.xpose.msra.mxu0 0.0
        %4678 = vmatpush.xpose.msra.mxu0 0.0
        %4679 = vmatpush.xpose.msra.mxu0 0.0
        %4680 = vmatpush.xpose.msra.mxu0 0.0
        %4681 = vmatpush.xpose.msra.mxu0 0.0
        %4682 = vmatpush.xpose.msra.mxu0 0.0
        %4683 = vmatpush.xpose.msra.mxu0 0.0
        %4684 = vmatpush.xpose.msra.mxu0 0.0
        %4685 = vmatpush.xpose.msra.mxu0 0.0
        %4686 = vmatpush.xpose.msra.mxu0 0.0
        %4687 = vmatpush.xpose.msra.mxu0 0.0
        %4688 = vmatpush.xpose.msra.mxu0 0.0
        %4689 = vmatpush.xpose.msra.mxu0 %v4673
        %4690 = vmatpush.xpose.msra.mxu0 %v4671
        %4691 = vmatmul.f32.gmra.mxu0 %v4669
        %v4692 = vpop.f32.mrf.mxu0
        %v4693 = vadd.f32 0.0, %v4692
        %4694 = vdwg.mxu0
        %4695 = vrot.lane.b32.xlu0 %v3183, 112
        %v4696 = vpop.permute.xlu0 %4695
        %4697 = vrot.lane.b32.xlu0 %v3286, 112
        %v4698 = vpop.permute.xlu0 %4697
        %4699 = vrot.lane.b32.xlu0 %v3289, 112
        %v4700 = vpop.permute.xlu0 %4699
        %v4701 = vsel %vm524, %v4696, 0
        %v4703 = vsel %vm524, %v4698, 0
        %v4705 = vsel %vm524, %v4700, 0
        %4707 = vmatpush.xpose.msra.mxu0 0.0
        %4708 = vmatpush.xpose.msra.mxu0 0.0
        %4709 = vmatpush.xpose.msra.mxu0 0.0
        %4710 = vmatpush.xpose.msra.mxu0 0.0
        %4711 = vmatpush.xpose.msra.mxu0 0.0
        %4712 = vmatpush.xpose.msra.mxu0 0.0
        %4713 = vmatpush.xpose.msra.mxu0 0.0
        %4714 = vmatpush.xpose.msra.mxu0 0.0
        %4715 = vmatpush.xpose.msra.mxu0 0.0
        %4716 = vmatpush.xpose.msra.mxu0 0.0
        %4717 = vmatpush.xpose.msra.mxu0 0.0
        %4718 = vmatpush.xpose.msra.mxu0 0.0
        %4719 = vmatpush.xpose.msra.mxu0 0.0
        %4720 = vmatpush.xpose.msra.mxu0 0.0
        %4721 = vmatpush.xpose.msra.mxu0 %v4705
        %4722 = vmatpush.xpose.msra.mxu0 %v4703
        %4723 = vmatmul.f32.gmra.mxu0 %v4701
        %v4724 = vpop.f32.mrf.mxu0
        %v4725 = vadd.f32 0.0, %v4724
        %4726 = vdwg.mxu0
        %4727 = vrot.lane.b32.xlu0 %v3186, 112
        %v4728 = vpop.permute.xlu0 %4727
        %4729 = vrot.lane.b32.xlu0 %v3292, 112
        %v4730 = vpop.permute.xlu0 %4729
        %4731 = vrot.lane.b32.xlu0 %v3295, 112
        %v4732 = vpop.permute.xlu0 %4731
        %v4733 = vsel %vm524, %v4728, 0
        %v4735 = vsel %vm524, %v4730, 0
        %v4737 = vsel %vm524, %v4732, 0
        %4739 = vmatpush.xpose.msra.mxu0 0.0
        %4740 = vmatpush.xpose.msra.mxu0 0.0
        %4741 = vmatpush.xpose.msra.mxu0 0.0
        %4742 = vmatpush.xpose.msra.mxu0 0.0
        %4743 = vmatpush.xpose.msra.mxu0 0.0
        %4744 = vmatpush.xpose.msra.mxu0 0.0
        %4745 = vmatpush.xpose.msra.mxu0 0.0
        %4746 = vmatpush.xpose.msra.mxu0 0.0
        %4747 = vmatpush.xpose.msra.mxu0 0.0
        %4748 = vmatpush.xpose.msra.mxu0 0.0
        %4749 = vmatpush.xpose.msra.mxu0 0.0
        %4750 = vmatpush.xpose.msra.mxu0 0.0
        %4751 = vmatpush.xpose.msra.mxu0 0.0
        %4752 = vmatpush.xpose.msra.mxu0 0.0
        %4753 = vmatpush.xpose.msra.mxu0 %v4737
        %4754 = vmatpush.xpose.msra.mxu0 %v4735
        %4755 = vmatmul.f32.gmra.mxu0 %v4733
        %v4756 = vpop.f32.mrf.mxu0
        %v4757 = vadd.f32 0.0, %v4756
        %4758 = vdwg.mxu0
        %4759 = vrot.lane.b32.xlu0 %v3189, 112
        %v4760 = vpop.permute.xlu0 %4759
        %4761 = vrot.lane.b32.xlu0 %v3298, 112
        %v4762 = vpop.permute.xlu0 %4761
        %4763 = vrot.lane.b32.xlu0 %v3301, 112
        %v4764 = vpop.permute.xlu0 %4763
        %v4765 = vsel %vm524, %v4760, 0
        %v4767 = vsel %vm524, %v4762, 0
        %v4769 = vsel %vm524, %v4764, 0
        %4771 = vmatpush.xpose.msra.mxu0 0.0
        %4772 = vmatpush.xpose.msra.mxu0 0.0
        %4773 = vmatpush.xpose.msra.mxu0 0.0
        %4774 = vmatpush.xpose.msra.mxu0 0.0
        %4775 = vmatpush.xpose.msra.mxu0 0.0
        %4776 = vmatpush.xpose.msra.mxu0 0.0
        %4777 = vmatpush.xpose.msra.mxu0 0.0
        %4778 = vmatpush.xpose.msra.mxu0 0.0
        %4779 = vmatpush.xpose.msra.mxu0 0.0
        %4780 = vmatpush.xpose.msra.mxu0 0.0
        %4781 = vmatpush.xpose.msra.mxu0 0.0
        %4782 = vmatpush.xpose.msra.mxu0 0.0
        %4783 = vmatpush.xpose.msra.mxu0 0.0
        %4784 = vmatpush.xpose.msra.mxu0 0.0
        %4785 = vmatpush.xpose.msra.mxu0 %v4769
        %4786 = vmatpush.xpose.msra.mxu0 %v4767
        %4787 = vmatmul.f32.gmra.mxu0 %v4765
        %v4788 = vpop.f32.mrf.mxu0
        %v4789 = vadd.f32 0.0, %v4788
        %4790 = vdwg.mxu0
        %4791 = vrot.lane.b32.xlu0 %v3192, 112
        %v4792 = vpop.permute.xlu0 %4791
        %4793 = vrot.lane.b32.xlu0 %v3304, 112
        %v4794 = vpop.permute.xlu0 %4793
        %4795 = vrot.lane.b32.xlu0 %v3307, 112
        %v4796 = vpop.permute.xlu0 %4795
        %v4797 = vsel %vm524, %v4792, 0
        %v4799 = vsel %vm524, %v4794, 0
        %v4801 = vsel %vm524, %v4796, 0
        %4803 = vmatpush.xpose.msra.mxu0 0.0
        %4804 = vmatpush.xpose.msra.mxu0 0.0
        %4805 = vmatpush.xpose.msra.mxu0 0.0
        %4806 = vmatpush.xpose.msra.mxu0 0.0
        %4807 = vmatpush.xpose.msra.mxu0 0.0
        %4808 = vmatpush.xpose.msra.mxu0 0.0
        %4809 = vmatpush.xpose.msra.mxu0 0.0
        %4810 = vmatpush.xpose.msra.mxu0 0.0
        %4811 = vmatpush.xpose.msra.mxu0 0.0
        %4812 = vmatpush.xpose.msra.mxu0 0.0
        %4813 = vmatpush.xpose.msra.mxu0 0.0
        %4814 = vmatpush.xpose.msra.mxu0 0.0
        %4815 = vmatpush.xpose.msra.mxu0 0.0
        %4816 = vmatpush.xpose.msra.mxu0 0.0
        %4817 = vmatpush.xpose.msra.mxu0 %v4801
        %4818 = vmatpush.xpose.msra.mxu0 %v4799
        %4819 = vmatmul.f32.gmra.mxu0 %v4797
        %v4820 = vpop.f32.mrf.mxu0
        %v4821 = vadd.f32 0.0, %v4820
        %4822 = vdwg.mxu0
        %4823 = vrot.lane.b32.xlu0 %v3195, 112
        %v4824 = vpop.permute.xlu0 %4823
        %4825 = vrot.lane.b32.xlu0 %v3310, 112
        %v4826 = vpop.permute.xlu0 %4825
        %4827 = vrot.lane.b32.xlu0 %v3313, 112
        %v4828 = vpop.permute.xlu0 %4827
        %v4829 = vsel %vm524, %v4824, 0
        %v4831 = vsel %vm524, %v4826, 0
        %v4833 = vsel %vm524, %v4828, 0
        %4835 = vmatpush.xpose.msra.mxu0 0.0
        %4836 = vmatpush.xpose.msra.mxu0 0.0
        %4837 = vmatpush.xpose.msra.mxu0 0.0
        %4838 = vmatpush.xpose.msra.mxu0 0.0
        %4839 = vmatpush.xpose.msra.mxu0 0.0
        %4840 = vmatpush.xpose.msra.mxu0 0.0
        %4841 = vmatpush.xpose.msra.mxu0 0.0
        %4842 = vmatpush.xpose.msra.mxu0 0.0
        %4843 = vmatpush.xpose.msra.mxu0 0.0
        %4844 = vmatpush.xpose.msra.mxu0 0.0
        %4845 = vmatpush.xpose.msra.mxu0 0.0
        %4846 = vmatpush.xpose.msra.mxu0 0.0
        %4847 = vmatpush.xpose.msra.mxu0 0.0
        %4848 = vmatpush.xpose.msra.mxu0 0.0
        %4849 = vmatpush.xpose.msra.mxu0 %v4833
        %4850 = vmatpush.xpose.msra.mxu0 %v4831
        %4851 = vmatmul.f32.gmra.mxu0 %v4829
        %v4852 = vpop.f32.mrf.mxu0
        %v4853 = vadd.f32 0.0, %v4852
        %4854 = vdwg.mxu0
        %4855 = vrot.lane.b32.xlu0 %v3198, 112
        %v4856 = vpop.permute.xlu0 %4855
        %4857 = vrot.lane.b32.xlu0 %v3316, 112
        %v4858 = vpop.permute.xlu0 %4857
        %4859 = vrot.lane.b32.xlu0 %v3319, 112
        %v4860 = vpop.permute.xlu0 %4859
        %v4861 = vsel %vm524, %v4856, 0
        %v4863 = vsel %vm524, %v4858, 0
        %v4865 = vsel %vm524, %v4860, 0
        %4867 = vmatpush.xpose.msra.mxu0 0.0
        %4868 = vmatpush.xpose.msra.mxu0 0.0
        %4869 = vmatpush.xpose.msra.mxu0 0.0
        %4870 = vmatpush.xpose.msra.mxu0 0.0
        %4871 = vmatpush.xpose.msra.mxu0 0.0
        %4872 = vmatpush.xpose.msra.mxu0 0.0
        %4873 = vmatpush.xpose.msra.mxu0 0.0
        %4874 = vmatpush.xpose.msra.mxu0 0.0
        %4875 = vmatpush.xpose.msra.mxu0 0.0
        %4876 = vmatpush.xpose.msra.mxu0 0.0
        %4877 = vmatpush.xpose.msra.mxu0 0.0
        %4878 = vmatpush.xpose.msra.mxu0 0.0
        %4879 = vmatpush.xpose.msra.mxu0 0.0
        %4880 = vmatpush.xpose.msra.mxu0 0.0
        %4881 = vmatpush.xpose.msra.mxu0 %v4865
        %4882 = vmatpush.xpose.msra.mxu0 %v4863
        %4883 = vmatmul.f32.gmra.mxu0 %v4861
        %v4884 = vpop.f32.mrf.mxu0
        %v4885 = vadd.f32 0.0, %v4884
        %4886 = vdwg.mxu0
        %4887 = vrot.lane.b32.xlu0 %v3201, 112
        %v4888 = vpop.permute.xlu0 %4887
        %4889 = vrot.lane.b32.xlu0 %v3322, 112
        %v4890 = vpop.permute.xlu0 %4889
        %4891 = vrot.lane.b32.xlu0 %v3325, 112
        %v4892 = vpop.permute.xlu0 %4891
        %v4893 = vsel %vm524, %v4888, 0
        %v4895 = vsel %vm524, %v4890, 0
        %v4897 = vsel %vm524, %v4892, 0
        %4899 = vmatpush.xpose.msra.mxu0 0.0
        %4900 = vmatpush.xpose.msra.mxu0 0.0
        %4901 = vmatpush.xpose.msra.mxu0 0.0
        %4902 = vmatpush.xpose.msra.mxu0 0.0
        %4903 = vmatpush.xpose.msra.mxu0 0.0
        %4904 = vmatpush.xpose.msra.mxu0 0.0
        %4905 = vmatpush.xpose.msra.mxu0 0.0
        %4906 = vmatpush.xpose.msra.mxu0 0.0
        %4907 = vmatpush.xpose.msra.mxu0 0.0
        %4908 = vmatpush.xpose.msra.mxu0 0.0
        %4909 = vmatpush.xpose.msra.mxu0 0.0
        %4910 = vmatpush.xpose.msra.mxu0 0.0
        %4911 = vmatpush.xpose.msra.mxu0 0.0
        %4912 = vmatpush.xpose.msra.mxu0 0.0
        %4913 = vmatpush.xpose.msra.mxu0 %v4897
        %4914 = vmatpush.xpose.msra.mxu0 %v4895
        %4915 = vmatmul.f32.gmra.mxu0 %v4893
        %v4916 = vpop.f32.mrf.mxu0
        %v4917 = vadd.f32 0.0, %v4916
        %4918 = vdwg.mxu0
        %v4919 = vsel %vm3114, %v4693, -inf
        %4920 = vmax.xlane.f32.xlu0 %v4919
        %v4921 = vpop.xlane.xlu0 %4920
        %v4922 = vsel %vm3114, %v4725, -inf
        %4923 = vmax.xlane.f32.xlu0 %v4922
        %v4924 = vpop.xlane.xlu0 %4923
        %v4925 = vsel %vm3114, %v4757, -inf
        %4926 = vmax.xlane.f32.xlu0 %v4925
        %v4927 = vpop.xlane.xlu0 %4926
        %v4928 = vsel %vm3114, %v4789, -inf
        %4929 = vmax.xlane.f32.xlu0 %v4928
        %v4930 = vpop.xlane.xlu0 %4929
        %v4931 = vsel %vm3114, %v4821, -inf
        %4932 = vmax.xlane.f32.xlu0 %v4931
        %v4933 = vpop.xlane.xlu0 %4932
        %v4934 = vsel %vm3114, %v4853, -inf
        %4935 = vmax.xlane.f32.xlu0 %v4934
        %v4936 = vpop.xlane.xlu0 %4935
        %v4937 = vsel %vm3114, %v4885, -inf
        %4938 = vmax.xlane.f32.xlu0 %v4937
        %v4939 = vpop.xlane.xlu0 %4938
        %v4940 = vsel %vm3114, %v4917, -inf
        %4941 = vmax.xlane.f32.xlu0 %v4940
        %v4942 = vpop.xlane.xlu0 %4941
        %v4943 = vsub.f32 %v4693, %v4921
        %v4944 = vsub.f32 %v4725, %v4924
        %v4945 = vsub.f32 %v4757, %v4927
        %v4946 = vsub.f32 %v4789, %v4930
        %v4947 = vsub.f32 %v4821, %v4933
        %v4948 = vsub.f32 %v4853, %v4936
        %v4949 = vsub.f32 %v4885, %v4939
        %v4950 = vsub.f32 %v4917, %v4942
        %v4951 = vmul.f32 %v4943, 1.442695
        %v4952 = vpow.pop %v4951
        %v4953 = vmul.f32 %v4944, 1.442695
        %v4954 = vpow.pop %v4953
        %v4955 = vmul.f32 %v4945, 1.442695
        %v4956 = vpow.pop %v4955
        %v4957 = vmul.f32 %v4946, 1.442695
        %v4958 = vpow.pop %v4957
        %v4959 = vmul.f32 %v4947, 1.442695
        %v4960 = vpow.pop %v4959
        %v4961 = vmul.f32 %v4948, 1.442695
        %v4962 = vpow.pop %v4961
        %v4963 = vmul.f32 %v4949, 1.442695
        %v4964 = vpow.pop %v4963
        %v4965 = vmul.f32 %v4950, 1.442695
        %v4966 = vpow.pop %v4965
        %v4967 = vsel %vm3114, %v4952, 0.0
        %4968 = vadd.xlane.f32.xlu0 %v4967
        %v4969 = vpop.xlane.xlu0 %4968
        %v4970 = vsel %vm3114, %v4954, 0.0
        %4971 = vadd.xlane.f32.xlu0 %v4970
        %v4972 = vpop.xlane.xlu0 %4971
        %v4973 = vsel %vm3114, %v4956, 0.0
        %4974 = vadd.xlane.f32.xlu0 %v4973
        %v4975 = vpop.xlane.xlu0 %4974
        %v4976 = vsel %vm3114, %v4958, 0.0
        %4977 = vadd.xlane.f32.xlu0 %v4976
        %v4978 = vpop.xlane.xlu0 %4977
        %v4979 = vsel %vm3114, %v4960, 0.0
        %4980 = vadd.xlane.f32.xlu0 %v4979
        %v4981 = vpop.xlane.xlu0 %4980
        %v4982 = vsel %vm3114, %v4962, 0.0
        %4983 = vadd.xlane.f32.xlu0 %v4982
        %v4984 = vpop.xlane.xlu0 %4983
        %v4985 = vsel %vm3114, %v4964, 0.0
        %4986 = vadd.xlane.f32.xlu0 %v4985
        %v4987 = vpop.xlane.xlu0 %4986
        %v4988 = vsel %vm3114, %v4966, 0.0
        %4989 = vadd.xlane.f32.xlu0 %v4988
        %v4990 = vpop.xlane.xlu0 %4989
        %v4991 = vrcp.pop %v4969
        %v4992 = vmul.f32 %v4969, %v4991
        %v4993 = vsub.f32 1.0, %v4992
        %v4994 = vmul.f32 %v4991, %v4993
        %v4995 = vadd.f32 %v4991, %v4994
        %vm4996 = vweird.f32 %v4969
        %vm4997 = vweird.f32 %v4991
        %vm4998 = vmor %vm4996, %vm4997
        %v4999 = vsel %vm4998, %v4991, %v4995
        %v5000 = vand.u32 2147483647, %v4969
        %vm5001 = vcmp.eq.f32.partialorder %v5000, 8.507059e+37
        %v5002 = vand.u32 %v4969, 2147483648
        %v5003 = vor.u32 1.1754944e-38, %v5002
        %v5004 = vsel %vm5001, %v5003, %v4999
        %v5005 = vmul.f32 %v4952, %v5004
        %v5006 = vrcp.pop %v4972
        %v5007 = vmul.f32 %v4972, %v5006
        %v5008 = vsub.f32 1.0, %v5007
        %v5009 = vmul.f32 %v5006, %v5008
        %v5010 = vadd.f32 %v5006, %v5009
        %vm5011 = vweird.f32 %v4972
        %vm5012 = vweird.f32 %v5006
        %vm5013 = vmor %vm5011, %vm5012
        %v5014 = vsel %vm5013, %v5006, %v5010
        %v5015 = vand.u32 2147483647, %v4972
        %vm5016 = vcmp.eq.f32.partialorder %v5015, 8.507059e+37
        %v5017 = vand.u32 %v4972, 2147483648
        %v5018 = vor.u32 1.1754944e-38, %v5017
        %v5019 = vsel %vm5016, %v5018, %v5014
        %v5020 = vmul.f32 %v4954, %v5019
        %v5021 = vrcp.pop %v4975
        %v5022 = vmul.f32 %v4975, %v5021
        %v5023 = vsub.f32 1.0, %v5022
        %v5024 = vmul.f32 %v5021, %v5023
        %v5025 = vadd.f32 %v5021, %v5024
        %vm5026 = vweird.f32 %v4975
        %vm5027 = vweird.f32 %v5021
        %vm5028 = vmor %vm5026, %vm5027
        %v5029 = vsel %vm5028, %v5021, %v5025
        %v5030 = vand.u32 2147483647, %v4975
        %vm5031 = vcmp.eq.f32.partialorder %v5030, 8.507059e+37
        %v5032 = vand.u32 %v4975, 2147483648
        %v5033 = vor.u32 1.1754944e-38, %v5032
        %v5034 = vsel %vm5031, %v5033, %v5029
        %v5035 = vmul.f32 %v4956, %v5034
        %v5036 = vrcp.pop %v4978
        %v5037 = vmul.f32 %v4978, %v5036
        %v5038 = vsub.f32 1.0, %v5037
        %v5039 = vmul.f32 %v5036, %v5038
        %v5040 = vadd.f32 %v5036, %v5039
        %vm5041 = vweird.f32 %v4978
        %vm5042 = vweird.f32 %v5036
        %vm5043 = vmor %vm5041, %vm5042
        %v5044 = vsel %vm5043, %v5036, %v5040
        %v5045 = vand.u32 2147483647, %v4978
        %vm5046 = vcmp.eq.f32.partialorder %v5045, 8.507059e+37
        %v5047 = vand.u32 %v4978, 2147483648
        %v5048 = vor.u32 1.1754944e-38, %v5047
        %v5049 = vsel %vm5046, %v5048, %v5044
        %v5050 = vmul.f32 %v4958, %v5049
        %v5051 = vrcp.pop %v4981
        %v5052 = vmul.f32 %v4981, %v5051
        %v5053 = vsub.f32 1.0, %v5052
        %v5054 = vmul.f32 %v5051, %v5053
        %v5055 = vadd.f32 %v5051, %v5054
        %vm5056 = vweird.f32 %v4981
        %vm5057 = vweird.f32 %v5051
        %vm5058 = vmor %vm5056, %vm5057
        %v5059 = vsel %vm5058, %v5051, %v5055
        %v5060 = vand.u32 2147483647, %v4981
        %vm5061 = vcmp.eq.f32.partialorder %v5060, 8.507059e+37
        %v5062 = vand.u32 %v4981, 2147483648
        %v5063 = vor.u32 1.1754944e-38, %v5062
        %v5064 = vsel %vm5061, %v5063, %v5059
        %v5065 = vmul.f32 %v4960, %v5064
        %v5066 = vrcp.pop %v4984
        %v5067 = vmul.f32 %v4984, %v5066
        %v5068 = vsub.f32 1.0, %v5067
        %v5069 = vmul.f32 %v5066, %v5068
        %v5070 = vadd.f32 %v5066, %v5069
        %vm5071 = vweird.f32 %v4984
        %vm5072 = vweird.f32 %v5066
        %vm5073 = vmor %vm5071, %vm5072
        %v5074 = vsel %vm5073, %v5066, %v5070
        %v5075 = vand.u32 2147483647, %v4984
        %vm5076 = vcmp.eq.f32.partialorder %v5075, 8.507059e+37
        %v5077 = vand.u32 %v4984, 2147483648
        %v5078 = vor.u32 1.1754944e-38, %v5077
        %v5079 = vsel %vm5076, %v5078, %v5074
        %v5080 = vmul.f32 %v4962, %v5079
        %v5081 = vrcp.pop %v4987
        %v5082 = vmul.f32 %v4987, %v5081
        %v5083 = vsub.f32 1.0, %v5082
        %v5084 = vmul.f32 %v5081, %v5083
        %v5085 = vadd.f32 %v5081, %v5084
        %vm5086 = vweird.f32 %v4987
        %vm5087 = vweird.f32 %v5081
        %vm5088 = vmor %vm5086, %vm5087
        %v5089 = vsel %vm5088, %v5081, %v5085
        %v5090 = vand.u32 2147483647, %v4987
        %vm5091 = vcmp.eq.f32.partialorder %v5090, 8.507059e+37
        %v5092 = vand.u32 %v4987, 2147483648
        %v5093 = vor.u32 1.1754944e-38, %v5092
        %v5094 = vsel %vm5091, %v5093, %v5089
        %v5095 = vmul.f32 %v4964, %v5094
        %v5096 = vrcp.pop %v4990
        %v5097 = vmul.f32 %v4990, %v5096
        %v5098 = vsub.f32 1.0, %v5097
        %v5099 = vmul.f32 %v5096, %v5098
        %v5100 = vadd.f32 %v5096, %v5099
        %vm5101 = vweird.f32 %v4990
        %vm5102 = vweird.f32 %v5096
        %vm5103 = vmor %vm5101, %vm5102
        %v5104 = vsel %vm5103, %v5096, %v5100
        %v5105 = vand.u32 2147483647, %v4990
        %vm5106 = vcmp.eq.f32.partialorder %v5105, 8.507059e+37
        %v5107 = vand.u32 %v4990, 2147483648
        %v5108 = vor.u32 1.1754944e-38, %v5107
        %v5109 = vsel %vm5106, %v5108, %v5104
        %v5110 = vmul.f32 %v4966, %v5109
        %5111 = vrot.lane.b32.xlu0 %v3280, 80
        %v5112 = vpop.permute.xlu0 %5111
        %5113 = vrot.lane.b32.xlu0 %v3283, 80
        %v5114 = vpop.permute.xlu0 %5113
        %v5118 = vsel %vm3114, %v5005, 0
        %5120 = vmatpush.msra.mxu0 0.0
        %5121 = vmatpush.msra.mxu0 0.0
        %5122 = vmatpush.msra.mxu0 0.0
        %5123 = vmatpush.msra.mxu0 0.0
        %5124 = vmatpush.msra.mxu0 0.0
        %5125 = vmatpush.msra.mxu0 0.0
        %5126 = vmatpush.msra.mxu0 0.0
        %5127 = vmatpush.msra.mxu0 0.0
        %5128 = vmatpush.msra.mxu0 0.0
        %5129 = vmatpush.msra.mxu0 0.0
        %5130 = vmatpush.msra.mxu0 0.0
        %5131 = vmatpush.msra.mxu0 0.0
        %5132 = vmatpush.msra.mxu0 0.0
        %5133 = vmatpush.msra.mxu0 0.0
        %5134 = vmatpush.msra.mxu0 %v5114
        %5135 = vmatpush.msra.mxu0 %v5112
        %5136 = vmatmul.f32.gmra.mxu0 %v5118
        %v5137 = vpop.f32.mrf.mxu0
        %v5138 = vadd.f32 0.0, %v5137
        %5139 = vdwg.mxu0
        %5140 = vrot.lane.b32.xlu0 %v3286, 80
        %v5141 = vpop.permute.xlu0 %5140
        %5142 = vrot.lane.b32.xlu0 %v3289, 80
        %v5143 = vpop.permute.xlu0 %5142
        %v5147 = vsel %vm3114, %v5020, 0
        %5149 = vmatpush.msra.mxu0 0.0
        %5150 = vmatpush.msra.mxu0 0.0
        %5151 = vmatpush.msra.mxu0 0.0
        %5152 = vmatpush.msra.mxu0 0.0
        %5153 = vmatpush.msra.mxu0 0.0
        %5154 = vmatpush.msra.mxu0 0.0
        %5155 = vmatpush.msra.mxu0 0.0
        %5156 = vmatpush.msra.mxu0 0.0
        %5157 = vmatpush.msra.mxu0 0.0
        %5158 = vmatpush.msra.mxu0 0.0
        %5159 = vmatpush.msra.mxu0 0.0
        %5160 = vmatpush.msra.mxu0 0.0
        %5161 = vmatpush.msra.mxu0 0.0
        %5162 = vmatpush.msra.mxu0 0.0
        %5163 = vmatpush.msra.mxu0 %v5143
        %5164 = vmatpush.msra.mxu0 %v5141
        %5165 = vmatmul.f32.gmra.mxu0 %v5147
        %v5166 = vpop.f32.mrf.mxu0
        %v5167 = vadd.f32 0.0, %v5166
        %5168 = vdwg.mxu0
        %5169 = vrot.lane.b32.xlu0 %v3292, 80
        %v5170 = vpop.permute.xlu0 %5169
        %5171 = vrot.lane.b32.xlu0 %v3295, 80
        %v5172 = vpop.permute.xlu0 %5171
        %v5176 = vsel %vm3114, %v5035, 0
        %5178 = vmatpush.msra.mxu0 0.0
        %5179 = vmatpush.msra.mxu0 0.0
        %5180 = vmatpush.msra.mxu0 0.0
        %5181 = vmatpush.msra.mxu0 0.0
        %5182 = vmatpush.msra.mxu0 0.0
        %5183 = vmatpush.msra.mxu0 0.0
        %5184 = vmatpush.msra.mxu0 0.0
        %5185 = vmatpush.msra.mxu0 0.0
        %5186 = vmatpush.msra.mxu0 0.0
        %5187 = vmatpush.msra.mxu0 0.0
        %5188 = vmatpush.msra.mxu0 0.0
        %5189 = vmatpush.msra.mxu0 0.0
        %5190 = vmatpush.msra.mxu0 0.0
        %5191 = vmatpush.msra.mxu0 0.0
        %5192 = vmatpush.msra.mxu0 %v5172
        %5193 = vmatpush.msra.mxu0 %v5170
        %5194 = vmatmul.f32.gmra.mxu0 %v5176
        %v5195 = vpop.f32.mrf.mxu0
        %v5196 = vadd.f32 0.0, %v5195
        %5197 = vdwg.mxu0
        %5198 = vrot.lane.b32.xlu0 %v3298, 80
        %v5199 = vpop.permute.xlu0 %5198
        %5200 = vrot.lane.b32.xlu0 %v3301, 80
        %v5201 = vpop.permute.xlu0 %5200
        %v5205 = vsel %vm3114, %v5050, 0
        %5207 = vmatpush.msra.mxu0 0.0
        %5208 = vmatpush.msra.mxu0 0.0
        %5209 = vmatpush.msra.mxu0 0.0
        %5210 = vmatpush.msra.mxu0 0.0
        %5211 = vmatpush.msra.mxu0 0.0
        %5212 = vmatpush.msra.mxu0 0.0
        %5213 = vmatpush.msra.mxu0 0.0
        %5214 = vmatpush.msra.mxu0 0.0
        %5215 = vmatpush.msra.mxu0 0.0
        %5216 = vmatpush.msra.mxu0 0.0
        %5217 = vmatpush.msra.mxu0 0.0
        %5218 = vmatpush.msra.mxu0 0.0
        %5219 = vmatpush.msra.mxu0 0.0
        %5220 = vmatpush.msra.mxu0 0.0
        %5221 = vmatpush.msra.mxu0 %v5201
        %5222 = vmatpush.msra.mxu0 %v5199
        %5223 = vmatmul.f32.gmra.mxu0 %v5205
        %v5224 = vpop.f32.mrf.mxu0
        %v5225 = vadd.f32 0.0, %v5224
        %5226 = vdwg.mxu0
        %5227 = vrot.lane.b32.xlu0 %v3304, 80
        %v5228 = vpop.permute.xlu0 %5227
        %5229 = vrot.lane.b32.xlu0 %v3307, 80
        %v5230 = vpop.permute.xlu0 %5229
        %v5234 = vsel %vm3114, %v5065, 0
        %5236 = vmatpush.msra.mxu0 0.0
        %5237 = vmatpush.msra.mxu0 0.0
        %5238 = vmatpush.msra.mxu0 0.0
        %5239 = vmatpush.msra.mxu0 0.0
        %5240 = vmatpush.msra.mxu0 0.0
        %5241 = vmatpush.msra.mxu0 0.0
        %5242 = vmatpush.msra.mxu0 0.0
        %5243 = vmatpush.msra.mxu0 0.0
        %5244 = vmatpush.msra.mxu0 0.0
        %5245 = vmatpush.msra.mxu0 0.0
        %5246 = vmatpush.msra.mxu0 0.0
        %5247 = vmatpush.msra.mxu0 0.0
        %5248 = vmatpush.msra.mxu0 0.0
        %5249 = vmatpush.msra.mxu0 0.0
        %5250 = vmatpush.msra.mxu0 %v5230
        %5251 = vmatpush.msra.mxu0 %v5228
        %5252 = vmatmul.f32.gmra.mxu0 %v5234
        %v5253 = vpop.f32.mrf.mxu0
        %v5254 = vadd.f32 0.0, %v5253
        %5255 = vdwg.mxu0
        %5256 = vrot.lane.b32.xlu0 %v3310, 80
        %v5257 = vpop.permute.xlu0 %5256
        %5258 = vrot.lane.b32.xlu0 %v3313, 80
        %v5259 = vpop.permute.xlu0 %5258
        %v5263 = vsel %vm3114, %v5080, 0
        %5265 = vmatpush.msra.mxu0 0.0
        %5266 = vmatpush.msra.mxu0 0.0
        %5267 = vmatpush.msra.mxu0 0.0
        %5268 = vmatpush.msra.mxu0 0.0
        %5269 = vmatpush.msra.mxu0 0.0
        %5270 = vmatpush.msra.mxu0 0.0
        %5271 = vmatpush.msra.mxu0 0.0
        %5272 = vmatpush.msra.mxu0 0.0
        %5273 = vmatpush.msra.mxu0 0.0
        %5274 = vmatpush.msra.mxu0 0.0
        %5275 = vmatpush.msra.mxu0 0.0
        %5276 = vmatpush.msra.mxu0 0.0
        %5277 = vmatpush.msra.mxu0 0.0
        %5278 = vmatpush.msra.mxu0 0.0
        %5279 = vmatpush.msra.mxu0 %v5259
        %5280 = vmatpush.msra.mxu0 %v5257
        %5281 = vmatmul.f32.gmra.mxu0 %v5263
        %v5282 = vpop.f32.mrf.mxu0
        %v5283 = vadd.f32 0.0, %v5282
        %5284 = vdwg.mxu0
        %5285 = vrot.lane.b32.xlu0 %v3316, 80
        %v5286 = vpop.permute.xlu0 %5285
        %5287 = vrot.lane.b32.xlu0 %v3319, 80
        %v5288 = vpop.permute.xlu0 %5287
        %v5292 = vsel %vm3114, %v5095, 0
        %5294 = vmatpush.msra.mxu0 0.0
        %5295 = vmatpush.msra.mxu0 0.0
        %5296 = vmatpush.msra.mxu0 0.0
        %5297 = vmatpush.msra.mxu0 0.0
        %5298 = vmatpush.msra.mxu0 0.0
        %5299 = vmatpush.msra.mxu0 0.0
        %5300 = vmatpush.msra.mxu0 0.0
        %5301 = vmatpush.msra.mxu0 0.0
        %5302 = vmatpush.msra.mxu0 0.0
        %5303 = vmatpush.msra.mxu0 0.0
        %5304 = vmatpush.msra.mxu0 0.0
        %5305 = vmatpush.msra.mxu0 0.0
        %5306 = vmatpush.msra.mxu0 0.0
        %5307 = vmatpush.msra.mxu0 0.0
        %5308 = vmatpush.msra.mxu0 %v5288
        %5309 = vmatpush.msra.mxu0 %v5286
        %5310 = vmatmul.f32.gmra.mxu0 %v5292
        %v5311 = vpop.f32.mrf.mxu0
        %v5312 = vadd.f32 0.0, %v5311
        %5313 = vdwg.mxu0
        %5314 = vrot.lane.b32.xlu0 %v3322, 80
        %v5315 = vpop.permute.xlu0 %5314
        %5316 = vrot.lane.b32.xlu0 %v3325, 80
        %v5317 = vpop.permute.xlu0 %5316
        %v5321 = vsel %vm3114, %v5110, 0
        %5323 = vmatpush.msra.mxu0 0.0
        %5324 = vmatpush.msra.mxu0 0.0
        %5325 = vmatpush.msra.mxu0 0.0
        %5326 = vmatpush.msra.mxu0 0.0
        %5327 = vmatpush.msra.mxu0 0.0
        %5328 = vmatpush.msra.mxu0 0.0
        %5329 = vmatpush.msra.mxu0 0.0
        %5330 = vmatpush.msra.mxu0 0.0
        %5331 = vmatpush.msra.mxu0 0.0
        %5332 = vmatpush.msra.mxu0 0.0
        %5333 = vmatpush.msra.mxu0 0.0
        %5334 = vmatpush.msra.mxu0 0.0
        %5335 = vmatpush.msra.mxu0 0.0
        %5336 = vmatpush.msra.mxu0 0.0
        %5337 = vmatpush.msra.mxu0 %v5317
        %5338 = vmatpush.msra.mxu0 %v5315
        %5339 = vmatmul.f32.gmra.mxu0 %v5321
        %v5340 = vpop.f32.mrf.mxu0
        %v5341 = vadd.f32 0.0, %v5340
        %5342 = vdwg.mxu0
        %5343 = vrot.lane.b32.xlu0 %v3180, 104
        %v5344 = vpop.permute.xlu0 %5343
        %5345 = vrot.lane.b32.xlu0 %v3280, 104
        %v5346 = vpop.permute.xlu0 %5345
        %5347 = vrot.lane.b32.xlu0 %v3283, 104
        %v5348 = vpop.permute.xlu0 %5347
        %v5349 = vsel %vm524, %v5344, 0
        %v5351 = vsel %vm524, %v5346, 0
        %v5353 = vsel %vm524, %v5348, 0
        %5355 = vmatpush.xpose.msra.mxu0 0.0
        %5356 = vmatpush.xpose.msra.mxu0 0.0
        %5357 = vmatpush.xpose.msra.mxu0 0.0
        %5358 = vmatpush.xpose.msra.mxu0 0.0
        %5359 = vmatpush.xpose.msra.mxu0 0.0
        %5360 = vmatpush.xpose.msra.mxu0 0.0
        %5361 = vmatpush.xpose.msra.mxu0 0.0
        %5362 = vmatpush.xpose.msra.mxu0 0.0
        %5363 = vmatpush.xpose.msra.mxu0 0.0
        %5364 = vmatpush.xpose.msra.mxu0 0.0
        %5365 = vmatpush.xpose.msra.mxu0 0.0
        %5366 = vmatpush.xpose.msra.mxu0 0.0
        %5367 = vmatpush.xpose.msra.mxu0 0.0
        %5368 = vmatpush.xpose.msra.mxu0 0.0
        %5369 = vmatpush.xpose.msra.mxu0 %v5353
        %5370 = vmatpush.xpose.msra.mxu0 %v5351
        %5371 = vmatmul.f32.gmra.mxu0 %v5349
        %v5372 = vpop.f32.mrf.mxu0
        %v5373 = vadd.f32 0.0, %v5372
        %5374 = vdwg.mxu0
        %5375 = vrot.lane.b32.xlu0 %v3183, 104
        %v5376 = vpop.permute.xlu0 %5375
        %5377 = vrot.lane.b32.xlu0 %v3286, 104
        %v5378 = vpop.permute.xlu0 %5377
        %5379 = vrot.lane.b32.xlu0 %v3289, 104
        %v5380 = vpop.permute.xlu0 %5379
        %v5381 = vsel %vm524, %v5376, 0
        %v5383 = vsel %vm524, %v5378, 0
        %v5385 = vsel %vm524, %v5380, 0
        %5387 = vmatpush.xpose.msra.mxu0 0.0
        %5388 = vmatpush.xpose.msra.mxu0 0.0
        %5389 = vmatpush.xpose.msra.mxu0 0.0
        %5390 = vmatpush.xpose.msra.mxu0 0.0
        %5391 = vmatpush.xpose.msra.mxu0 0.0
        %5392 = vmatpush.xpose.msra.mxu0 0.0
        %5393 = vmatpush.xpose.msra.mxu0 0.0
        %5394 = vmatpush.xpose.msra.mxu0 0.0
        %5395 = vmatpush.xpose.msra.mxu0 0.0
        %5396 = vmatpush.xpose.msra.mxu0 0.0
        %5397 = vmatpush.xpose.msra.mxu0 0.0
        %5398 = vmatpush.xpose.msra.mxu0 0.0
        %5399 = vmatpush.xpose.msra.mxu0 0.0
        %5400 = vmatpush.xpose.msra.mxu0 0.0
        %5401 = vmatpush.xpose.msra.mxu0 %v5385
        %5402 = vmatpush.xpose.msra.mxu0 %v5383
        %5403 = vmatmul.f32.gmra.mxu0 %v5381
        %v5404 = vpop.f32.mrf.mxu0
        %v5405 = vadd.f32 0.0, %v5404
        %5406 = vdwg.mxu0
        %5407 = vrot.lane.b32.xlu0 %v3186, 104
        %v5408 = vpop.permute.xlu0 %5407
        %5409 = vrot.lane.b32.xlu0 %v3292, 104
        %v5410 = vpop.permute.xlu0 %5409
        %5411 = vrot.lane.b32.xlu0 %v3295, 104
        %v5412 = vpop.permute.xlu0 %5411
        %v5413 = vsel %vm524, %v5408, 0
        %v5415 = vsel %vm524, %v5410, 0
        %v5417 = vsel %vm524, %v5412, 0
        %5419 = vmatpush.xpose.msra.mxu0 0.0
        %5420 = vmatpush.xpose.msra.mxu0 0.0
        %5421 = vmatpush.xpose.msra.mxu0 0.0
        %5422 = vmatpush.xpose.msra.mxu0 0.0
        %5423 = vmatpush.xpose.msra.mxu0 0.0
        %5424 = vmatpush.xpose.msra.mxu0 0.0
        %5425 = vmatpush.xpose.msra.mxu0 0.0
        %5426 = vmatpush.xpose.msra.mxu0 0.0
        %5427 = vmatpush.xpose.msra.mxu0 0.0
        %5428 = vmatpush.xpose.msra.mxu0 0.0
        %5429 = vmatpush.xpose.msra.mxu0 0.0
        %5430 = vmatpush.xpose.msra.mxu0 0.0
        %5431 = vmatpush.xpose.msra.mxu0 0.0
        %5432 = vmatpush.xpose.msra.mxu0 0.0
        %5433 = vmatpush.xpose.msra.mxu0 %v5417
        %5434 = vmatpush.xpose.msra.mxu0 %v5415
        %5435 = vmatmul.f32.gmra.mxu0 %v5413
        %v5436 = vpop.f32.mrf.mxu0
        %v5437 = vadd.f32 0.0, %v5436
        %5438 = vdwg.mxu0
        %5439 = vrot.lane.b32.xlu0 %v3189, 104
        %v5440 = vpop.permute.xlu0 %5439
        %5441 = vrot.lane.b32.xlu0 %v3298, 104
        %v5442 = vpop.permute.xlu0 %5441
        %5443 = vrot.lane.b32.xlu0 %v3301, 104
        %v5444 = vpop.permute.xlu0 %5443
        %v5445 = vsel %vm524, %v5440, 0
        %v5447 = vsel %vm524, %v5442, 0
        %v5449 = vsel %vm524, %v5444, 0
        %5451 = vmatpush.xpose.msra.mxu0 0.0
        %5452 = vmatpush.xpose.msra.mxu0 0.0
        %5453 = vmatpush.xpose.msra.mxu0 0.0
        %5454 = vmatpush.xpose.msra.mxu0 0.0
        %5455 = vmatpush.xpose.msra.mxu0 0.0
        %5456 = vmatpush.xpose.msra.mxu0 0.0
        %5457 = vmatpush.xpose.msra.mxu0 0.0
        %5458 = vmatpush.xpose.msra.mxu0 0.0
        %5459 = vmatpush.xpose.msra.mxu0 0.0
        %5460 = vmatpush.xpose.msra.mxu0 0.0
        %5461 = vmatpush.xpose.msra.mxu0 0.0
        %5462 = vmatpush.xpose.msra.mxu0 0.0
        %5463 = vmatpush.xpose.msra.mxu0 0.0
        %5464 = vmatpush.xpose.msra.mxu0 0.0
        %5465 = vmatpush.xpose.msra.mxu0 %v5449
        %5466 = vmatpush.xpose.msra.mxu0 %v5447
        %5467 = vmatmul.f32.gmra.mxu0 %v5445
        %v5468 = vpop.f32.mrf.mxu0
        %v5469 = vadd.f32 0.0, %v5468
        %5470 = vdwg.mxu0
        %5471 = vrot.lane.b32.xlu0 %v3192, 104
        %v5472 = vpop.permute.xlu0 %5471
        %5473 = vrot.lane.b32.xlu0 %v3304, 104
        %v5474 = vpop.permute.xlu0 %5473
        %5475 = vrot.lane.b32.xlu0 %v3307, 104
        %v5476 = vpop.permute.xlu0 %5475
        %v5477 = vsel %vm524, %v5472, 0
        %v5479 = vsel %vm524, %v5474, 0
        %v5481 = vsel %vm524, %v5476, 0
        %5483 = vmatpush.xpose.msra.mxu0 0.0
        %5484 = vmatpush.xpose.msra.mxu0 0.0
        %5485 = vmatpush.xpose.msra.mxu0 0.0
        %5486 = vmatpush.xpose.msra.mxu0 0.0
        %5487 = vmatpush.xpose.msra.mxu0 0.0
        %5488 = vmatpush.xpose.msra.mxu0 0.0
        %5489 = vmatpush.xpose.msra.mxu0 0.0
        %5490 = vmatpush.xpose.msra.mxu0 0.0
        %5491 = vmatpush.xpose.msra.mxu0 0.0
        %5492 = vmatpush.xpose.msra.mxu0 0.0
        %5493 = vmatpush.xpose.msra.mxu0 0.0
        %5494 = vmatpush.xpose.msra.mxu0 0.0
        %5495 = vmatpush.xpose.msra.mxu0 0.0
        %5496 = vmatpush.xpose.msra.mxu0 0.0
        %5497 = vmatpush.xpose.msra.mxu0 %v5481
        %5498 = vmatpush.xpose.msra.mxu0 %v5479
        %5499 = vmatmul.f32.gmra.mxu0 %v5477
        %v5500 = vpop.f32.mrf.mxu0
        %v5501 = vadd.f32 0.0, %v5500
        %5502 = vdwg.mxu0
        %5503 = vrot.lane.b32.xlu0 %v3195, 104
        %v5504 = vpop.permute.xlu0 %5503
        %5505 = vrot.lane.b32.xlu0 %v3310, 104
        %v5506 = vpop.permute.xlu0 %5505
        %5507 = vrot.lane.b32.xlu0 %v3313, 104
        %v5508 = vpop.permute.xlu0 %5507
        %v5509 = vsel %vm524, %v5504, 0
        %v5511 = vsel %vm524, %v5506, 0
        %v5513 = vsel %vm524, %v5508, 0
        %5515 = vmatpush.xpose.msra.mxu0 0.0
        %5516 = vmatpush.xpose.msra.mxu0 0.0
        %5517 = vmatpush.xpose.msra.mxu0 0.0
        %5518 = vmatpush.xpose.msra.mxu0 0.0
        %5519 = vmatpush.xpose.msra.mxu0 0.0
        %5520 = vmatpush.xpose.msra.mxu0 0.0
        %5521 = vmatpush.xpose.msra.mxu0 0.0
        %5522 = vmatpush.xpose.msra.mxu0 0.0
        %5523 = vmatpush.xpose.msra.mxu0 0.0
        %5524 = vmatpush.xpose.msra.mxu0 0.0
        %5525 = vmatpush.xpose.msra.mxu0 0.0
        %5526 = vmatpush.xpose.msra.mxu0 0.0
        %5527 = vmatpush.xpose.msra.mxu0 0.0
        %5528 = vmatpush.xpose.msra.mxu0 0.0
        %5529 = vmatpush.xpose.msra.mxu0 %v5513
        %5530 = vmatpush.xpose.msra.mxu0 %v5511
        %5531 = vmatmul.f32.gmra.mxu0 %v5509
        %v5532 = vpop.f32.mrf.mxu0
        %v5533 = vadd.f32 0.0, %v5532
        %5534 = vdwg.mxu0
        %5535 = vrot.lane.b32.xlu0 %v3198, 104
        %v5536 = vpop.permute.xlu0 %5535
        %5537 = vrot.lane.b32.xlu0 %v3316, 104
        %v5538 = vpop.permute.xlu0 %5537
        %5539 = vrot.lane.b32.xlu0 %v3319, 104
        %v5540 = vpop.permute.xlu0 %5539
        %v5541 = vsel %vm524, %v5536, 0
        %v5543 = vsel %vm524, %v5538, 0
        %v5545 = vsel %vm524, %v5540, 0
        %5547 = vmatpush.xpose.msra.mxu0 0.0
        %5548 = vmatpush.xpose.msra.mxu0 0.0
        %5549 = vmatpush.xpose.msra.mxu0 0.0
        %5550 = vmatpush.xpose.msra.mxu0 0.0
        %5551 = vmatpush.xpose.msra.mxu0 0.0
        %5552 = vmatpush.xpose.msra.mxu0 0.0
        %5553 = vmatpush.xpose.msra.mxu0 0.0
        %5554 = vmatpush.xpose.msra.mxu0 0.0
        %5555 = vmatpush.xpose.msra.mxu0 0.0
        %5556 = vmatpush.xpose.msra.mxu0 0.0
        %5557 = vmatpush.xpose.msra.mxu0 0.0
        %5558 = vmatpush.xpose.msra.mxu0 0.0
        %5559 = vmatpush.xpose.msra.mxu0 0.0
        %5560 = vmatpush.xpose.msra.mxu0 0.0
        %5561 = vmatpush.xpose.msra.mxu0 %v5545
        %5562 = vmatpush.xpose.msra.mxu0 %v5543
        %5563 = vmatmul.f32.gmra.mxu0 %v5541
        %v5564 = vpop.f32.mrf.mxu0
        %v5565 = vadd.f32 0.0, %v5564
        %5566 = vdwg.mxu0
        %5567 = vrot.lane.b32.xlu0 %v3201, 104
        %v5568 = vpop.permute.xlu0 %5567
        %5569 = vrot.lane.b32.xlu0 %v3322, 104
        %v5570 = vpop.permute.xlu0 %5569
        %5571 = vrot.lane.b32.xlu0 %v3325, 104
        %v5572 = vpop.permute.xlu0 %5571
        %v5573 = vsel %vm524, %v5568, 0
        %v5575 = vsel %vm524, %v5570, 0
        %v5577 = vsel %vm524, %v5572, 0
        %5579 = vmatpush.xpose.msra.mxu0 0.0
        %5580 = vmatpush.xpose.msra.mxu0 0.0
        %5581 = vmatpush.xpose.msra.mxu0 0.0
        %5582 = vmatpush.xpose.msra.mxu0 0.0
        %5583 = vmatpush.xpose.msra.mxu0 0.0
        %5584 = vmatpush.xpose.msra.mxu0 0.0
        %5585 = vmatpush.xpose.msra.mxu0 0.0
        %5586 = vmatpush.xpose.msra.mxu0 0.0
        %5587 = vmatpush.xpose.msra.mxu0 0.0
        %5588 = vmatpush.xpose.msra.mxu0 0.0
        %5589 = vmatpush.xpose.msra.mxu0 0.0
        %5590 = vmatpush.xpose.msra.mxu0 0.0
        %5591 = vmatpush.xpose.msra.mxu0 0.0
        %5592 = vmatpush.xpose.msra.mxu0 0.0
        %5593 = vmatpush.xpose.msra.mxu0 %v5577
        %5594 = vmatpush.xpose.msra.mxu0 %v5575
        %5595 = vmatmul.f32.gmra.mxu0 %v5573
        %v5596 = vpop.f32.mrf.mxu0
        %v5597 = vadd.f32 0.0, %v5596
        %5598 = vdwg.mxu0
        %v5599 = vsel %vm3114, %v5373, -inf
        %5600 = vmax.xlane.f32.xlu0 %v5599
        %v5601 = vpop.xlane.xlu0 %5600
        %v5602 = vsel %vm3114, %v5405, -inf
        %5603 = vmax.xlane.f32.xlu0 %v5602
        %v5604 = vpop.xlane.xlu0 %5603
        %v5605 = vsel %vm3114, %v5437, -inf
        %5606 = vmax.xlane.f32.xlu0 %v5605
        %v5607 = vpop.xlane.xlu0 %5606
        %v5608 = vsel %vm3114, %v5469, -inf
        %5609 = vmax.xlane.f32.xlu0 %v5608
        %v5610 = vpop.xlane.xlu0 %5609
        %v5611 = vsel %vm3114, %v5501, -inf
        %5612 = vmax.xlane.f32.xlu0 %v5611
        %v5613 = vpop.xlane.xlu0 %5612
        %v5614 = vsel %vm3114, %v5533, -inf
        %5615 = vmax.xlane.f32.xlu0 %v5614
        %v5616 = vpop.xlane.xlu0 %5615
        %v5617 = vsel %vm3114, %v5565, -inf
        %5618 = vmax.xlane.f32.xlu0 %v5617
        %v5619 = vpop.xlane.xlu0 %5618
        %v5620 = vsel %vm3114, %v5597, -inf
        %5621 = vmax.xlane.f32.xlu0 %v5620
        %v5622 = vpop.xlane.xlu0 %5621
        %v5623 = vsub.f32 %v5373, %v5601
        %v5624 = vsub.f32 %v5405, %v5604
        %v5625 = vsub.f32 %v5437, %v5607
        %v5626 = vsub.f32 %v5469, %v5610
        %v5627 = vsub.f32 %v5501, %v5613
        %v5628 = vsub.f32 %v5533, %v5616
        %v5629 = vsub.f32 %v5565, %v5619
        %v5630 = vsub.f32 %v5597, %v5622
        %v5631 = vmul.f32 %v5623, 1.442695
        %v5632 = vpow.pop %v5631
        %v5633 = vmul.f32 %v5624, 1.442695
        %v5634 = vpow.pop %v5633
        %v5635 = vmul.f32 %v5625, 1.442695
        %v5636 = vpow.pop %v5635
        %v5637 = vmul.f32 %v5626, 1.442695
        %v5638 = vpow.pop %v5637
        %v5639 = vmul.f32 %v5627, 1.442695
        %v5640 = vpow.pop %v5639
        %v5641 = vmul.f32 %v5628, 1.442695
        %v5642 = vpow.pop %v5641
        %v5643 = vmul.f32 %v5629, 1.442695
        %v5644 = vpow.pop %v5643
        %v5645 = vmul.f32 %v5630, 1.442695
        %v5646 = vpow.pop %v5645
        %v5647 = vsel %vm3114, %v5632, 0.0
        %5648 = vadd.xlane.f32.xlu0 %v5647
        %v5649 = vpop.xlane.xlu0 %5648
        %v5650 = vsel %vm3114, %v5634, 0.0
        %5651 = vadd.xlane.f32.xlu0 %v5650
        %v5652 = vpop.xlane.xlu0 %5651
        %v5653 = vsel %vm3114, %v5636, 0.0
        %5654 = vadd.xlane.f32.xlu0 %v5653
        %v5655 = vpop.xlane.xlu0 %5654
        %v5656 = vsel %vm3114, %v5638, 0.0
        %5657 = vadd.xlane.f32.xlu0 %v5656
        %v5658 = vpop.xlane.xlu0 %5657
        %v5659 = vsel %vm3114, %v5640, 0.0
        %5660 = vadd.xlane.f32.xlu0 %v5659
        %v5661 = vpop.xlane.xlu0 %5660
        %v5662 = vsel %vm3114, %v5642, 0.0
        %5663 = vadd.xlane.f32.xlu0 %v5662
        %v5664 = vpop.xlane.xlu0 %5663
        %v5665 = vsel %vm3114, %v5644, 0.0
        %5666 = vadd.xlane.f32.xlu0 %v5665
        %v5667 = vpop.xlane.xlu0 %5666
        %v5668 = vsel %vm3114, %v5646, 0.0
        %5669 = vadd.xlane.f32.xlu0 %v5668
        %v5670 = vpop.xlane.xlu0 %5669
        %v5671 = vrcp.pop %v5649
        %v5672 = vmul.f32 %v5649, %v5671
        %v5673 = vsub.f32 1.0, %v5672
        %v5674 = vmul.f32 %v5671, %v5673
        %v5675 = vadd.f32 %v5671, %v5674
        %vm5676 = vweird.f32 %v5649
        %vm5677 = vweird.f32 %v5671
        %vm5678 = vmor %vm5676, %vm5677
        %v5679 = vsel %vm5678, %v5671, %v5675
        %v5680 = vand.u32 2147483647, %v5649
        %vm5681 = vcmp.eq.f32.partialorder %v5680, 8.507059e+37
        %v5682 = vand.u32 %v5649, 2147483648
        %v5683 = vor.u32 1.1754944e-38, %v5682
        %v5684 = vsel %vm5681, %v5683, %v5679
        %v5685 = vmul.f32 %v5632, %v5684
        %v5686 = vrcp.pop %v5652
        %v5687 = vmul.f32 %v5652, %v5686
        %v5688 = vsub.f32 1.0, %v5687
        %v5689 = vmul.f32 %v5686, %v5688
        %v5690 = vadd.f32 %v5686, %v5689
        %vm5691 = vweird.f32 %v5652
        %vm5692 = vweird.f32 %v5686
        %vm5693 = vmor %vm5691, %vm5692
        %v5694 = vsel %vm5693, %v5686, %v5690
        %v5695 = vand.u32 2147483647, %v5652
        %vm5696 = vcmp.eq.f32.partialorder %v5695, 8.507059e+37
        %v5697 = vand.u32 %v5652, 2147483648
        %v5698 = vor.u32 1.1754944e-38, %v5697
        %v5699 = vsel %vm5696, %v5698, %v5694
        %v5700 = vmul.f32 %v5634, %v5699
        %v5701 = vrcp.pop %v5655
        %v5702 = vmul.f32 %v5655, %v5701
        %v5703 = vsub.f32 1.0, %v5702
        %v5704 = vmul.f32 %v5701, %v5703
        %v5705 = vadd.f32 %v5701, %v5704
        %vm5706 = vweird.f32 %v5655
        %vm5707 = vweird.f32 %v5701
        %vm5708 = vmor %vm5706, %vm5707
        %v5709 = vsel %vm5708, %v5701, %v5705
        %v5710 = vand.u32 2147483647, %v5655
        %vm5711 = vcmp.eq.f32.partialorder %v5710, 8.507059e+37
        %v5712 = vand.u32 %v5655, 2147483648
        %v5713 = vor.u32 1.1754944e-38, %v5712
        %v5714 = vsel %vm5711, %v5713, %v5709
        %v5715 = vmul.f32 %v5636, %v5714
        %v5716 = vrcp.pop %v5658
        %v5717 = vmul.f32 %v5658, %v5716
        %v5718 = vsub.f32 1.0, %v5717
        %v5719 = vmul.f32 %v5716, %v5718
        %v5720 = vadd.f32 %v5716, %v5719
        %vm5721 = vweird.f32 %v5658
        %vm5722 = vweird.f32 %v5716
        %vm5723 = vmor %vm5721, %vm5722
        %v5724 = vsel %vm5723, %v5716, %v5720
        %v5725 = vand.u32 2147483647, %v5658
        %vm5726 = vcmp.eq.f32.partialorder %v5725, 8.507059e+37
        %v5727 = vand.u32 %v5658, 2147483648
        %v5728 = vor.u32 1.1754944e-38, %v5727
        %v5729 = vsel %vm5726, %v5728, %v5724
        %v5730 = vmul.f32 %v5638, %v5729
        %v5731 = vrcp.pop %v5661
        %v5732 = vmul.f32 %v5661, %v5731
        %v5733 = vsub.f32 1.0, %v5732
        %v5734 = vmul.f32 %v5731, %v5733
        %v5735 = vadd.f32 %v5731, %v5734
        %vm5736 = vweird.f32 %v5661
        %vm5737 = vweird.f32 %v5731
        %vm5738 = vmor %vm5736, %vm5737
        %v5739 = vsel %vm5738, %v5731, %v5735
        %v5740 = vand.u32 2147483647, %v5661
        %vm5741 = vcmp.eq.f32.partialorder %v5740, 8.507059e+37
        %v5742 = vand.u32 %v5661, 2147483648
        %v5743 = vor.u32 1.1754944e-38, %v5742
        %v5744 = vsel %vm5741, %v5743, %v5739
        %v5745 = vmul.f32 %v5640, %v5744
        %v5746 = vrcp.pop %v5664
        %v5747 = vmul.f32 %v5664, %v5746
        %v5748 = vsub.f32 1.0, %v5747
        %v5749 = vmul.f32 %v5746, %v5748
        %v5750 = vadd.f32 %v5746, %v5749
        %vm5751 = vweird.f32 %v5664
        %vm5752 = vweird.f32 %v5746
        %vm5753 = vmor %vm5751, %vm5752
        %v5754 = vsel %vm5753, %v5746, %v5750
        %v5755 = vand.u32 2147483647, %v5664
        %vm5756 = vcmp.eq.f32.partialorder %v5755, 8.507059e+37
        %v5757 = vand.u32 %v5664, 2147483648
        %v5758 = vor.u32 1.1754944e-38, %v5757
        %v5759 = vsel %vm5756, %v5758, %v5754
        %v5760 = vmul.f32 %v5642, %v5759
        %v5761 = vrcp.pop %v5667
        %v5762 = vmul.f32 %v5667, %v5761
        %v5763 = vsub.f32 1.0, %v5762
        %v5764 = vmul.f32 %v5761, %v5763
        %v5765 = vadd.f32 %v5761, %v5764
        %vm5766 = vweird.f32 %v5667
        %vm5767 = vweird.f32 %v5761
        %vm5768 = vmor %vm5766, %vm5767
        %v5769 = vsel %vm5768, %v5761, %v5765
        %v5770 = vand.u32 2147483647, %v5667
        %vm5771 = vcmp.eq.f32.partialorder %v5770, 8.507059e+37
        %v5772 = vand.u32 %v5667, 2147483648
        %v5773 = vor.u32 1.1754944e-38, %v5772
        %v5774 = vsel %vm5771, %v5773, %v5769
        %v5775 = vmul.f32 %v5644, %v5774
        %v5776 = vrcp.pop %v5670
        %v5777 = vmul.f32 %v5670, %v5776
        %v5778 = vsub.f32 1.0, %v5777
        %v5779 = vmul.f32 %v5776, %v5778
        %v5780 = vadd.f32 %v5776, %v5779
        %vm5781 = vweird.f32 %v5670
        %vm5782 = vweird.f32 %v5776
        %vm5783 = vmor %vm5781, %vm5782
        %v5784 = vsel %vm5783, %v5776, %v5780
        %v5785 = vand.u32 2147483647, %v5670
        %vm5786 = vcmp.eq.f32.partialorder %v5785, 8.507059e+37
        %v5787 = vand.u32 %v5670, 2147483648
        %v5788 = vor.u32 1.1754944e-38, %v5787
        %v5789 = vsel %vm5786, %v5788, %v5784
        %v5790 = vmul.f32 %v5646, %v5789
        %5791 = vrot.lane.b32.xlu0 %v3280, 72
        %v5792 = vpop.permute.xlu0 %5791
        %5793 = vrot.lane.b32.xlu0 %v3283, 72
        %v5794 = vpop.permute.xlu0 %5793
        %v5798 = vsel %vm3114, %v5685, 0
        %5800 = vmatpush.msra.mxu0 0.0
        %5801 = vmatpush.msra.mxu0 0.0
        %5802 = vmatpush.msra.mxu0 0.0
        %5803 = vmatpush.msra.mxu0 0.0
        %5804 = vmatpush.msra.mxu0 0.0
        %5805 = vmatpush.msra.mxu0 0.0
        %5806 = vmatpush.msra.mxu0 0.0
        %5807 = vmatpush.msra.mxu0 0.0
        %5808 = vmatpush.msra.mxu0 0.0
        %5809 = vmatpush.msra.mxu0 0.0
        %5810 = vmatpush.msra.mxu0 0.0
        %5811 = vmatpush.msra.mxu0 0.0
        %5812 = vmatpush.msra.mxu0 0.0
        %5813 = vmatpush.msra.mxu0 0.0
        %5814 = vmatpush.msra.mxu0 %v5794
        %5815 = vmatpush.msra.mxu0 %v5792
        %5816 = vmatmul.f32.gmra.mxu0 %v5798
        %v5817 = vpop.f32.mrf.mxu0
        %v5818 = vadd.f32 0.0, %v5817
        %5819 = vdwg.mxu0
        %5820 = vrot.lane.b32.xlu0 %v3286, 72
        %v5821 = vpop.permute.xlu0 %5820
        %5822 = vrot.lane.b32.xlu0 %v3289, 72
        %v5823 = vpop.permute.xlu0 %5822
        %v5827 = vsel %vm3114, %v5700, 0
        %5829 = vmatpush.msra.mxu0 0.0
        %5830 = vmatpush.msra.mxu0 0.0
        %5831 = vmatpush.msra.mxu0 0.0
        %5832 = vmatpush.msra.mxu0 0.0
        %5833 = vmatpush.msra.mxu0 0.0
        %5834 = vmatpush.msra.mxu0 0.0
        %5835 = vmatpush.msra.mxu0 0.0
        %5836 = vmatpush.msra.mxu0 0.0
        %5837 = vmatpush.msra.mxu0 0.0
        %5838 = vmatpush.msra.mxu0 0.0
        %5839 = vmatpush.msra.mxu0 0.0
        %5840 = vmatpush.msra.mxu0 0.0
        %5841 = vmatpush.msra.mxu0 0.0
        %5842 = vmatpush.msra.mxu0 0.0
        %5843 = vmatpush.msra.mxu0 %v5823
        %5844 = vmatpush.msra.mxu0 %v5821
        %5845 = vmatmul.f32.gmra.mxu0 %v5827
        %v5846 = vpop.f32.mrf.mxu0
        %v5847 = vadd.f32 0.0, %v5846
        %5848 = vdwg.mxu0
        %5849 = vrot.lane.b32.xlu0 %v3292, 72
        %v5850 = vpop.permute.xlu0 %5849
        %5851 = vrot.lane.b32.xlu0 %v3295, 72
        %v5852 = vpop.permute.xlu0 %5851
        %v5856 = vsel %vm3114, %v5715, 0
        %5858 = vmatpush.msra.mxu0 0.0
        %5859 = vmatpush.msra.mxu0 0.0
        %5860 = vmatpush.msra.mxu0 0.0
        %5861 = vmatpush.msra.mxu0 0.0
        %5862 = vmatpush.msra.mxu0 0.0
        %5863 = vmatpush.msra.mxu0 0.0
        %5864 = vmatpush.msra.mxu0 0.0
        %5865 = vmatpush.msra.mxu0 0.0
        %5866 = vmatpush.msra.mxu0 0.0
        %5867 = vmatpush.msra.mxu0 0.0
        %5868 = vmatpush.msra.mxu0 0.0
        %5869 = vmatpush.msra.mxu0 0.0
        %5870 = vmatpush.msra.mxu0 0.0
        %5871 = vmatpush.msra.mxu0 0.0
        %5872 = vmatpush.msra.mxu0 %v5852
        %5873 = vmatpush.msra.mxu0 %v5850
        %5874 = vmatmul.f32.gmra.mxu0 %v5856
        %v5875 = vpop.f32.mrf.mxu0
        %v5876 = vadd.f32 0.0, %v5875
        %5877 = vdwg.mxu0
        %5878 = vrot.lane.b32.xlu0 %v3298, 72
        %v5879 = vpop.permute.xlu0 %5878
        %5880 = vrot.lane.b32.xlu0 %v3301, 72
        %v5881 = vpop.permute.xlu0 %5880
        %v5885 = vsel %vm3114, %v5730, 0
        %5887 = vmatpush.msra.mxu0 0.0
        %5888 = vmatpush.msra.mxu0 0.0
        %5889 = vmatpush.msra.mxu0 0.0
        %5890 = vmatpush.msra.mxu0 0.0
        %5891 = vmatpush.msra.mxu0 0.0
        %5892 = vmatpush.msra.mxu0 0.0
        %5893 = vmatpush.msra.mxu0 0.0
        %5894 = vmatpush.msra.mxu0 0.0
        %5895 = vmatpush.msra.mxu0 0.0
        %5896 = vmatpush.msra.mxu0 0.0
        %5897 = vmatpush.msra.mxu0 0.0
        %5898 = vmatpush.msra.mxu0 0.0
        %5899 = vmatpush.msra.mxu0 0.0
        %5900 = vmatpush.msra.mxu0 0.0
        %5901 = vmatpush.msra.mxu0 %v5881
        %5902 = vmatpush.msra.mxu0 %v5879
        %5903 = vmatmul.f32.gmra.mxu0 %v5885
        %v5904 = vpop.f32.mrf.mxu0
        %v5905 = vadd.f32 0.0, %v5904
        %5906 = vdwg.mxu0
        %5907 = vrot.lane.b32.xlu0 %v3304, 72
        %v5908 = vpop.permute.xlu0 %5907
        %5909 = vrot.lane.b32.xlu0 %v3307, 72
        %v5910 = vpop.permute.xlu0 %5909
        %v5914 = vsel %vm3114, %v5745, 0
        %5916 = vmatpush.msra.mxu0 0.0
        %5917 = vmatpush.msra.mxu0 0.0
        %5918 = vmatpush.msra.mxu0 0.0
        %5919 = vmatpush.msra.mxu0 0.0
        %5920 = vmatpush.msra.mxu0 0.0
        %5921 = vmatpush.msra.mxu0 0.0
        %5922 = vmatpush.msra.mxu0 0.0
        %5923 = vmatpush.msra.mxu0 0.0
        %5924 = vmatpush.msra.mxu0 0.0
        %5925 = vmatpush.msra.mxu0 0.0
        %5926 = vmatpush.msra.mxu0 0.0
        %5927 = vmatpush.msra.mxu0 0.0
        %5928 = vmatpush.msra.mxu0 0.0
        %5929 = vmatpush.msra.mxu0 0.0
        %5930 = vmatpush.msra.mxu0 %v5910
        %5931 = vmatpush.msra.mxu0 %v5908
        %5932 = vmatmul.f32.gmra.mxu0 %v5914
        %v5933 = vpop.f32.mrf.mxu0
        %v5934 = vadd.f32 0.0, %v5933
        %5935 = vdwg.mxu0
        %5936 = vrot.lane.b32.xlu0 %v3310, 72
        %v5937 = vpop.permute.xlu0 %5936
        %5938 = vrot.lane.b32.xlu0 %v3313, 72
        %v5939 = vpop.permute.xlu0 %5938
        %v5943 = vsel %vm3114, %v5760, 0
        %5945 = vmatpush.msra.mxu0 0.0
        %5946 = vmatpush.msra.mxu0 0.0
        %5947 = vmatpush.msra.mxu0 0.0
        %5948 = vmatpush.msra.mxu0 0.0
        %5949 = vmatpush.msra.mxu0 0.0
        %5950 = vmatpush.msra.mxu0 0.0
        %5951 = vmatpush.msra.mxu0 0.0
        %5952 = vmatpush.msra.mxu0 0.0
        %5953 = vmatpush.msra.mxu0 0.0
        %5954 = vmatpush.msra.mxu0 0.0
        %5955 = vmatpush.msra.mxu0 0.0
        %5956 = vmatpush.msra.mxu0 0.0
        %5957 = vmatpush.msra.mxu0 0.0
        %5958 = vmatpush.msra.mxu0 0.0
        %5959 = vmatpush.msra.mxu0 %v5939
        %5960 = vmatpush.msra.mxu0 %v5937
        %5961 = vmatmul.f32.gmra.mxu0 %v5943
        %v5962 = vpop.f32.mrf.mxu0
        %v5963 = vadd.f32 0.0, %v5962
        %5964 = vdwg.mxu0
        %5965 = vrot.lane.b32.xlu0 %v3316, 72
        %v5966 = vpop.permute.xlu0 %5965
        %5967 = vrot.lane.b32.xlu0 %v3319, 72
        %v5968 = vpop.permute.xlu0 %5967
        %v5972 = vsel %vm3114, %v5775, 0
        %5974 = vmatpush.msra.mxu0 0.0
        %5975 = vmatpush.msra.mxu0 0.0
        %5976 = vmatpush.msra.mxu0 0.0
        %5977 = vmatpush.msra.mxu0 0.0
        %5978 = vmatpush.msra.mxu0 0.0
        %5979 = vmatpush.msra.mxu0 0.0
        %5980 = vmatpush.msra.mxu0 0.0
        %5981 = vmatpush.msra.mxu0 0.0
        %5982 = vmatpush.msra.mxu0 0.0
        %5983 = vmatpush.msra.mxu0 0.0
        %5984 = vmatpush.msra.mxu0 0.0
        %5985 = vmatpush.msra.mxu0 0.0
        %5986 = vmatpush.msra.mxu0 0.0
        %5987 = vmatpush.msra.mxu0 0.0
        %5988 = vmatpush.msra.mxu0 %v5968
        %5989 = vmatpush.msra.mxu0 %v5966
        %5990 = vmatmul.f32.gmra.mxu0 %v5972
        %v5991 = vpop.f32.mrf.mxu0
        %v5992 = vadd.f32 0.0, %v5991
        %5993 = vdwg.mxu0
        %5994 = vrot.lane.b32.xlu0 %v3322, 72
        %v5995 = vpop.permute.xlu0 %5994
        %5996 = vrot.lane.b32.xlu0 %v3325, 72
        %v5997 = vpop.permute.xlu0 %5996
        %v6001 = vsel %vm3114, %v5790, 0
        %6003 = vmatpush.msra.mxu0 0.0
        %6004 = vmatpush.msra.mxu0 0.0
        %6005 = vmatpush.msra.mxu0 0.0
        %6006 = vmatpush.msra.mxu0 0.0
        %6007 = vmatpush.msra.mxu0 0.0
        %6008 = vmatpush.msra.mxu0 0.0
        %6009 = vmatpush.msra.mxu0 0.0
        %6010 = vmatpush.msra.mxu0 0.0
        %6011 = vmatpush.msra.mxu0 0.0
        %6012 = vmatpush.msra.mxu0 0.0
        %6013 = vmatpush.msra.mxu0 0.0
        %6014 = vmatpush.msra.mxu0 0.0
        %6015 = vmatpush.msra.mxu0 0.0
        %6016 = vmatpush.msra.mxu0 0.0
        %6017 = vmatpush.msra.mxu0 %v5997
        %6018 = vmatpush.msra.mxu0 %v5995
        %6019 = vmatmul.f32.gmra.mxu0 %v6001
        %v6020 = vpop.f32.mrf.mxu0
        %v6021 = vadd.f32 0.0, %v6020
        %6022 = vdwg.mxu0
        %6031 = vrot.lane.b32.xlu0 %v4458, 8
        %v6032 = vpop.permute.xlu0 %6031
        %6033 = vrot.lane.b32.xlu0 %v4487, 8
        %v6034 = vpop.permute.xlu0 %6033
        %6035 = vrot.lane.b32.xlu0 %v4516, 8
        %v6036 = vpop.permute.xlu0 %6035
        %6037 = vrot.lane.b32.xlu0 %v4545, 8
        %v6038 = vpop.permute.xlu0 %6037
        %6039 = vrot.lane.b32.xlu0 %v4574, 8
        %v6040 = vpop.permute.xlu0 %6039
        %6041 = vrot.lane.b32.xlu0 %v4603, 8
        %v6042 = vpop.permute.xlu0 %6041
        %6043 = vrot.lane.b32.xlu0 %v4632, 8
        %v6044 = vpop.permute.xlu0 %6043
        %6045 = vrot.lane.b32.xlu0 %v4661, 8
        %v6046 = vpop.permute.xlu0 %6045
        %6063 = vrot.lane.b32.xlu0 %v5138, 16
        %v6064 = vpop.permute.xlu0 %6063
        %6065 = vrot.lane.b32.xlu0 %v5167, 16
        %v6066 = vpop.permute.xlu0 %6065
        %6067 = vrot.lane.b32.xlu0 %v5196, 16
        %v6068 = vpop.permute.xlu0 %6067
        %6069 = vrot.lane.b32.xlu0 %v5225, 16
        %v6070 = vpop.permute.xlu0 %6069
        %6071 = vrot.lane.b32.xlu0 %v5254, 16
        %v6072 = vpop.permute.xlu0 %6071
        %6073 = vrot.lane.b32.xlu0 %v5283, 16
        %v6074 = vpop.permute.xlu0 %6073
        %6075 = vrot.lane.b32.xlu0 %v5312, 16
        %v6076 = vpop.permute.xlu0 %6075
        %6077 = vrot.lane.b32.xlu0 %v5341, 16
        %v6078 = vpop.permute.xlu0 %6077
        %6095 = vrot.lane.b32.xlu0 %v5818, 24
        %v6096 = vpop.permute.xlu0 %6095
        %6097 = vrot.lane.b32.xlu0 %v5847, 24
        %v6098 = vpop.permute.xlu0 %6097
        %6099 = vrot.lane.b32.xlu0 %v5876, 24
        %v6100 = vpop.permute.xlu0 %6099
        %6101 = vrot.lane.b32.xlu0 %v5905, 24
        %v6102 = vpop.permute.xlu0 %6101
        %6103 = vrot.lane.b32.xlu0 %v5934, 24
        %v6104 = vpop.permute.xlu0 %6103
        %6105 = vrot.lane.b32.xlu0 %v5963, 24
        %v6106 = vpop.permute.xlu0 %6105
        %6107 = vrot.lane.b32.xlu0 %v5992, 24
        %v6108 = vpop.permute.xlu0 %6107
        %6109 = vrot.lane.b32.xlu0 %v6021, 24
        %v6110 = vpop.permute.xlu0 %6109
        %v6119 = vsel %vm524, %v3778, %v6032
        %v6120 = vsel %vm524, %v3807, %v6034
        %v6121 = vsel %vm524, %v3836, %v6036
        %v6122 = vsel %vm524, %v3865, %v6038
        %v6123 = vsel %vm524, %v3894, %v6040
        %v6124 = vsel %vm524, %v3923, %v6042
        %v6125 = vsel %vm524, %v3952, %v6044
        %v6126 = vsel %vm524, %v3981, %v6046
        %v6127 = vsel %vm3114, %v6119, %v6064
        %v6128 = vsel %vm3114, %v6120, %v6066
        %v6129 = vsel %vm3114, %v6121, %v6068
        %v6130 = vsel %vm3114, %v6122, %v6070
        %v6131 = vsel %vm3114, %v6123, %v6072
        %v6132 = vsel %vm3114, %v6124, %v6074
        %v6133 = vsel %vm3114, %v6125, %v6076
        %v6134 = vsel %vm3114, %v6126, %v6078
        %v6135 = vsel %vm3123, %v6127, %v6096
        %v6136 = vsel %vm3123, %v6128, %v6098
        %v6137 = vsel %vm3123, %v6129, %v6100
        %v6138 = vsel %vm3123, %v6130, %v6102
        %v6139 = vsel %vm3123, %v6131, %v6104
        %v6140 = vsel %vm3123, %v6132, %v6106
        %v6141 = vsel %vm3123, %v6133, %v6108
        %v6142 = vsel %vm3123, %v6134, %v6110
        %v6143 = vld [vmem:[#allocation8] sm:$0xff]
        %v6144 = vld [vmem:[#allocation8 + $0x8] sm:$0xff]
        %v6145 = vld [vmem:[#allocation8 + $0x10] sm:$0xff]
        %v6146 = vld [vmem:[#allocation8 + $0x18] sm:$0xff]
        %v6147 = vld [vmem:[#allocation10 + $0x3] sm:$0x1]
        %v6148 = vperm.slane %v6147, 0
        %v6150 = vsel %vm455, %v6135, 0
        %v6153 = vsel %vm455, %v6136, 0
        %v6156 = vsel %vm455, %v6137, 0
        %v6159 = vsel %vm455, %v6138, 0
        %v6162 = vsel %vm455, %v6139, 0
        %v6165 = vsel %vm455, %v6140, 0
        %v6168 = vsel %vm455, %v6141, 0
        %v6171 = vsel %vm455, %v6142, 0
        %6173 = vmatpush.msra.mxu0 0.0
        %6174 = vmatpush.msra.mxu0 0.0
        %6175 = vmatpush.msra.mxu0 0.0
        %6176 = vmatpush.msra.mxu0 0.0
        %6177 = vmatpush.msra.mxu0 0.0
        %6178 = vmatpush.msra.mxu0 0.0
        %6179 = vmatpush.msra.mxu0 0.0
        %6180 = vmatpush.msra.mxu0 0.0
        %6181 = vmatpush.msra.mxu0 0.0
        %6182 = vmatpush.msra.mxu0 0.0
        %6183 = vmatpush.msra.mxu0 0.0
        %6184 = vmatpush.msra.mxu0 0.0
        %6185 = vmatpush.msra.mxu0 %v6146
        %6186 = vmatpush.msra.mxu0 %v6145
        %6187 = vmatpush.msra.mxu0 %v6144
        %6188 = vmatpush.msra.mxu0 %v6143
        %6189 = vmatmul.f32.gmra.mxu0 %v6150
        %v6190 = vpop.f32.mrf.mxu0
        %v6191 = vadd.f32 %v6148, %v6190
        %6192 = vmatmul.f32.gmra.mxu0 %v6153
        %v6193 = vpop.f32.mrf.mxu0
        %v6194 = vadd.f32 %v6148, %v6193
        %6195 = vmatmul.f32.gmra.mxu0 %v6156
        %v6196 = vpop.f32.mrf.mxu0
        %v6197 = vadd.f32 %v6148, %v6196
        %6198 = vmatmul.f32.gmra.mxu0 %v6159
        %v6199 = vpop.f32.mrf.mxu0
        %v6200 = vadd.f32 %v6148, %v6199
        %6201 = vmatmul.f32.gmra.mxu0 %v6162
        %v6202 = vpop.f32.mrf.mxu0
        %v6203 = vadd.f32 %v6148, %v6202
        %6204 = vmatmul.f32.gmra.mxu0 %v6165
        %v6205 = vpop.f32.mrf.mxu0
        %v6206 = vadd.f32 %v6148, %v6205
        %6207 = vmatmul.f32.gmra.mxu0 %v6168
        %v6208 = vpop.f32.mrf.mxu0
        %v6209 = vadd.f32 %v6148, %v6208
        %6210 = vmatmul.f32.gmra.mxu0 %v6171
        %v6211 = vpop.f32.mrf.mxu0
        %v6212 = vadd.f32 %v6148, %v6211
        %6213 = vdwg.mxu0
        %v6214 = vmax.f32 %v6191, 0.0
        %v6215 = vmax.f32 %v6194, 0.0
        %v6216 = vmax.f32 %v6197, 0.0
        %v6217 = vmax.f32 %v6200, 0.0
        %v6218 = vmax.f32 %v6203, 0.0
        %v6219 = vmax.f32 %v6206, 0.0
        %v6220 = vmax.f32 %v6209, 0.0
        %v6221 = vmax.f32 %v6212, 0.0
        %v6222 = vld [vmem:[%s6] sm:$0xff]
        %v6223 = vld [vmem:[%s6 + $0x8] sm:$0xff]
        %v6224 = vld [vmem:[%s6 + $0x10] sm:$0xff]
        %v6225 = vld [vmem:[%s6 + $0x18] sm:$0xff]
        %v6226 = vld [vmem:[%s6 + $0x20] sm:$0xff]
        %v6227 = vld [vmem:[%s6 + $0x28] sm:$0xff]
        %v6228 = vld [vmem:[%s6 + $0x30] sm:$0xff]
        %v6229 = vld [vmem:[%s6 + $0x38] sm:$0xff]
        %v6230 = vld [vmem:[#allocation10 + $0x4] sm:$0x1]
        %v6231 = vperm.slane %v6230, 0
        %v6233 = vsel %vm3213, %v6214, 0
        %v6236 = vsel %vm3213, %v6215, 0
        %v6239 = vsel %vm3213, %v6216, 0
        %v6242 = vsel %vm3213, %v6217, 0
        %v6245 = vsel %vm3213, %v6218, 0
        %v6248 = vsel %vm3213, %v6219, 0
        %v6251 = vsel %vm3213, %v6220, 0
        %v6254 = vsel %vm3213, %v6221, 0
        %6256 = vmatpush.msra.mxu0 0.0
        %6257 = vmatpush.msra.mxu0 0.0
        %6258 = vmatpush.msra.mxu0 0.0
        %6259 = vmatpush.msra.mxu0 0.0
        %6260 = vmatpush.msra.mxu0 0.0
        %6261 = vmatpush.msra.mxu0 0.0
        %6262 = vmatpush.msra.mxu0 0.0
        %6263 = vmatpush.msra.mxu0 0.0
        %6264 = vmatpush.msra.mxu0 %v6229
        %6265 = vmatpush.msra.mxu0 %v6228
        %6266 = vmatpush.msra.mxu0 %v6227
        %6267 = vmatpush.msra.mxu0 %v6226
        %6268 = vmatpush.msra.mxu0 %v6225
        %6269 = vmatpush.msra.mxu0 %v6224
        %6270 = vmatpush.msra.mxu0 %v6223
        %6271 = vmatpush.msra.mxu0 %v6222
        %6272 = vmatmul.f32.gmra.mxu0 %v6233
        %v6273 = vpop.f32.mrf.mxu0
        %v6274 = vadd.f32 %v6231, %v6273
        %6275 = vmatmul.f32.gmra.mxu0 %v6236
        %v6276 = vpop.f32.mrf.mxu0
        %v6277 = vadd.f32 %v6231, %v6276
        %6278 = vmatmul.f32.gmra.mxu0 %v6239
        %v6279 = vpop.f32.mrf.mxu0
        %v6280 = vadd.f32 %v6231, %v6279
        %6281 = vmatmul.f32.gmra.mxu0 %v6242
        %v6282 = vpop.f32.mrf.mxu0
        %v6283 = vadd.f32 %v6231, %v6282
        %6284 = vmatmul.f32.gmra.mxu0 %v6245
        %v6285 = vpop.f32.mrf.mxu0
        %v6286 = vadd.f32 %v6231, %v6285
        %6287 = vmatmul.f32.gmra.mxu0 %v6248
        %v6288 = vpop.f32.mrf.mxu0
        %v6289 = vadd.f32 %v6231, %v6288
        %6290 = vmatmul.f32.gmra.mxu0 %v6251
        %v6291 = vpop.f32.mrf.mxu0
        %v6292 = vadd.f32 %v6231, %v6291
        %6293 = vmatmul.f32.gmra.mxu0 %v6254
        %v6294 = vpop.f32.mrf.mxu0
        %v6295 = vadd.f32 %v6231, %v6294
        %6296 = vdwg.mxu0
        %6297 = vst.msk [vmem:[%s415] sm:$0xff] %vm455, %v6274
        %6298 = vst.msk [vmem:[%s415 + $0x8] sm:$0xff] %vm455, %v6277
        %6299 = vst.msk [vmem:[%s415 + $0x10] sm:$0xff] %vm455, %v6280
        %6300 = vst.msk [vmem:[%s415 + $0x18] sm:$0xff] %vm455, %v6283
        %6301 = vst.msk [vmem:[%s415 + $0x20] sm:$0xff] %vm455, %v6286
        %6302 = vst.msk [vmem:[%s415 + $0x28] sm:$0xff] %vm455, %v6289
        %6303 = vst.msk [vmem:[%s415 + $0x30] sm:$0xff] %vm455, %v6292
        %6304 = vst.msk [vmem:[%s415 + $0x38] sm:$0xff] %vm455, %v6295
        %s6305 = sand.u32 %s215, 1
        %s6306 = scalar_lea.sflag [#allocation4], %s6305
        %s6307 = sand.u32 %s215, 1
        %s6308 = smul.addr %s6307, 64
        %s6309 = scalar_lea.vmem [#allocation11], %s6308
        // Predicated region
        $region73: #{tpu_custom_call.1} parent=51 // pred_check
          %p6310 = pneg %p225
        $region74: #{tpu_custom_call.1} parent=51 // pred_check_branch
          %6312 = sbr.rel (%p6310) target = $region76
        $region75: #{tpu_custom_call.1} parent=51 // pred_region
          %s6313 = smul.u32 8, %s29
          %6315 = vsyncadd %s6306, 0
          %s6316 = smul.addr %s6313, 8
          %s6317 = scalar_lea.hbm %s8, %s6316
          %s6318 = sshll.u32 %s6309, 4
          %s6319 = int_to_ptr.vmem [resolvable:$true] %s6318
          %s6320 = sshll.u32 %s6317, 4
          %s6321 = int_to_ptr.hbm [resolvable:$true] %s6320
          %6326 = dma.vmem_to_hbm [thread:$0]  %s6319, 1024, %s6321, %s6306, 128, 128, 8
        $region76: #{tpu_custom_call.1} parent=51 // pred_fallthru
          _
      $region52: #{tpu_custom_call.1} parent=5 // pred_fallthru
        _
      %p6327 = scmp.le.s32.totalorder 2, %s24
      // Predicated region
      $region77: #{tpu_custom_call.1} parent=5 // pred_check
        %p6328 = pneg %p6327
      $region78: #{tpu_custom_call.1} parent=5 // pred_check_branch
        %6330 = sbr.rel (%p6328) target = $region80
      $region79: #{tpu_custom_call.1} parent=5 // pred_region
        %s6331 = ssub.s32 %s24, 2
        // Predicated region
        $region81: #{tpu_custom_call.1} parent=79 // pred_check
          %p6332 = pneg %p231
        $region82: #{tpu_custom_call.1} parent=79 // pred_check_branch
          %6334 = sbr.rel (%p6332) target = $region84
        $region83: #{tpu_custom_call.1} parent=79 // pred_region
          %s6335 = sand.u32 %s216, 1
          %s6336 = scalar_lea.sflag [#allocation4], %s6335
          %s6337 = sand.u32 %s216, 1
          %s6338 = smul.addr %s6337, 64
          %s6339 = scalar_lea.vmem [#allocation11], %s6338
          %6341 = dma.done %s6336, 1024
        $region84: #{tpu_custom_call.1} parent=79 // pred_fallthru
          _
      $region80: #{tpu_custom_call.1} parent=5 // pred_fallthru
        _
    $region6: #{tpu_custom_call.1} parent=1 // loop_footer
      %s28 = sadd.s32 1, %s24
    $region7: #{tpu_custom_call.1} parent=1 // loop_footer_branch
      %23 = sbr.rel target = $region3
    $region8: #{tpu_custom_call.1} parent=1 // loop_exit
      _
    %6342 = vsyncpa [#allocation3], 1
    %s6343 = scalar_lea.sflag [#allocation3], 1
    %6344 = vsyncpa %s6343, 1
    %6345 = vsyncpa [#allocation6], 1
    %s6346 = scalar_lea.sflag [#allocation6], 1
    %6347 = vsyncpa %s6346, 1
    %6348 = vsyncpa [#allocation9], 1
    %6349 = vsyncpa [#allocation4], 1
    %s6350 = scalar_lea.sflag [#allocation4], 1
    %6351 = vsyncpa %s6350, 1

</llo_original>
